<compile_context>
chip_gen: v7x
topology: tpu7x:2x2x1
jax: 0.10.0
libtpu: 0.0.40
codegen_flags: <defaults>
</compile_context>

<pallas_src>
import jax
import jax.numpy as jnp
from jax import lax
from jax.experimental import pallas as pl
from jax.experimental.pallas import tpu as pltpu


# ---------------------------------------------------------------------------
# Kernel
# ---------------------------------------------------------------------------
def _make_double_conv_kernel(D, H, W, Cin, Cmid, Cout):
    """Fused (conv3x3x3 + folded-BN affine + ReLU) x 2 for one batch element."""

    def stage(src_ref, w_ref, shift_ref, acc_ref, c_in):
        # src_ref  : (D+2, H+2, W*c_in)    zero D/H halo, bf16
        # w_ref    : (9, W*c_in, W*c_out)  banded weights (kw taps + W-pad + BN scale folded in)
        # shift_ref: (1, W*c_out)          f32 folded BN shift (tiled over W)
        # acc_ref  : (D*H, W*c_out)        f32 MXU accumulator (VMEM scratch)
        acc_ref[...] = jnp.zeros_like(acc_ref)
        for kd in range(3):
            for kh in range(3):
                lhs = src_ref[kd:kd + D, kh:kh + H, :].reshape(D * H, W * c_in)
                acc_ref[...] += jnp.dot(lhs, w_ref[kd * 3 + kh],
                                        preferred_element_type=jnp.float32)
        return jnp.maximum(acc_ref[...] + shift_ref[0], 0.0)      # f32 epilogue

    def kernel(x_ref, w1_ref, s1_ref, w2_ref, s2_ref, o_ref,
               xpad_ref, mid_ref, acc_ref):
        # In-kernel zero halo along D/H ('same' padding); W padding is already
        # folded into the banded weights, so the input arrives unpadded from HBM.
        xpad_ref[...] = jnp.zeros_like(xpad_ref)
        xpad_ref[1:D + 1, 1:H + 1, :] = x_ref[0]

        # Stage 1 — intermediate stays in VMEM (bf16), never written to HBM.
        y1 = stage(xpad_ref, w1_ref, s1_ref, acc_ref, Cin)        # (D*H, W*Cmid) f32
        mid_ref[...] = jnp.zeros_like(mid_ref)
        mid_ref[1:D + 1, 1:H + 1, :] = (
            y1.reshape(D, H, W * Cmid).astype(mid_ref.dtype))

        # Stage 2 — lane-dense (D*H, W*Cout) output slab.
        y2 = stage(mid_ref, w2_ref, s2_ref, acc_ref, Cmid)        # (D*H, W*Cout) f32
        o_ref[0] = y2.astype(o_ref.dtype)

    return kernel


# ---------------------------------------------------------------------------
# Wrapper-side weight / BN folding
# ---------------------------------------------------------------------------
def _fold_bn(conv_bias, gamma, beta, mean, var, eps=1e-5):
    scale = gamma / jnp.sqrt(var + eps)
    shift = beta + (conv_bias - mean) * scale
    return scale, shift


def _band_weights(w_dhwio, scale, w_len):
    """Fold the kw taps, 'same' W-padding and the BN scale into a banded matmul weight.

    w_dhwio: (3, 3, 3, Cin, Cout), scale: (Cout,)
    returns: (9, w_len*Cin, w_len*Cout) f32, where
      band[kd*3+kh, i*Cin+ci, j*Cout+co] = w[kd,kh,i-j+1,ci,co]*scale[co]  if 0 <= i-j+1 < 3
    (i = input W position, j = output W position; out-of-range taps are zero == zero padding).
    """
    _, _, _, cin, cout = w_dhwio.shape
    ws = (w_dhwio * scale).reshape(9, 3, cin, cout)               # BN scale folded into columns
    i = jnp.arange(w_len)[:, None]                                # input  W position
    j = jnp.arange(w_len)[None, :]                                # output W position
    kw = i - j + 1                                                # tap index
    valid = (kw >= 0) & (kw < 3)
    band = ws[:, jnp.clip(kw, 0, 2)]                              # (9, W, W, Cin, Cout)
    band = jnp.where(valid[None, :, :, None, None], band, 0.0)
    band = band.transpose(0, 1, 3, 2, 4).reshape(9, w_len * cin, w_len * cout)
    return band


def double_conv3d(x_ncdhw, params, *, compute_dtype=jnp.bfloat16):
    """Pallas implementation. Input/output: PyTorch NCDHW layout."""
    N, Cin, D, H, W = x_ncdhw.shape
    Cmid = params["w1"].shape[0]
    Cout = params["w2"].shape[0]
    assert params["w2"].shape[1] == Cmid and Cmid == Cout, "DoubleConv3D has conv2: out->out"

    # NCDHW -> (N, D, H, W*C): channels-last with (W, C) packed on the lane axis. No padding.
    x = jnp.transpose(x_ncdhw, (0, 2, 3, 4, 1)).reshape(N, D, H, W * Cin)
    x = x.astype(compute_dtype)

    w1 = jnp.transpose(params["w1"], (2, 3, 4, 1, 0))             # OIDHW -> DHWIO
    w2 = jnp.transpose(params["w2"], (2, 3, 4, 1, 0))
    s1, t1 = _fold_bn(params["b1"], params["gamma1"], params["beta1"],
                      params["mean1"], params["var1"])
    s2, t2 = _fold_bn(params["b2"], params["gamma2"], params["beta2"],
                      params["mean2"], params["var2"])

    wb1 = _band_weights(w1, s1, W).astype(compute_dtype)          # (9, W*Cin,  W*Cmid) bf16
    wb2 = _band_weights(w2, s2, W).astype(compute_dtype)          # (9, W*Cmid, W*Cout) bf16
    sh1 = jnp.tile(t1, W).reshape(1, W * Cmid).astype(jnp.float32)
    sh2 = jnp.tile(t2, W).reshape(1, W * Cout).astype(jnp.float32)

    kernel = _make_double_conv_kernel(D, H, W, Cin, Cmid, Cout)

    out = pl.pallas_call(
        kernel,
        out_shape=jax.ShapeDtypeStruct((N, D * H, W * Cout), jnp.float32),
        grid_spec=pltpu.PrefetchScalarGridSpec(
            num_scalar_prefetch=0,
            grid=(N,),
            in_specs=[
                pl.BlockSpec((1, D, H, W * Cin), lambda n: (n, 0, 0, 0)),
                pl.BlockSpec((9, W * Cin, W * Cmid), lambda n: (0, 0, 0)),   # resident weights
                pl.BlockSpec((1, W * Cmid), lambda n: (0, 0)),
                pl.BlockSpec((9, W * Cmid, W * Cout), lambda n: (0, 0, 0)),
                pl.BlockSpec((1, W * Cout), lambda n: (0, 0)),
            ],
            out_specs=pl.BlockSpec((1, D * H, W * Cout), lambda n: (n, 0, 0)),
            scratch_shapes=[
                pltpu.VMEM((D + 2, H + 2, W * Cin), compute_dtype),   # zero-haloed input
                pltpu.VMEM((D + 2, H + 2, W * Cmid), compute_dtype),  # fused intermediate
                pltpu.VMEM((D * H, W * Cout), jnp.float32),           # MXU accumulator
            ],
        ),
        compiler_params=pltpu.CompilerParams(
            dimension_semantics=("parallel",),
            vmem_limit_bytes=48 * 1024 * 1024,
        ),
    )(x, wb1, sh1, wb2, sh2)

    out = out.reshape(N, D, H, W, Cout)
    return jnp.transpose(out, (0, 4, 1, 2, 3))                    # -> NCDHW


# ---------------------------------------------------------------------------
# Params + pure-JAX reference (same eval-mode BN semantics as the nn.Module)
# ---------------------------------------------------------------------------
def init_double_conv3d_params(key, in_channels, out_channels):
    ks = jax.random.split(key, 12)

    def conv_init(kw, kb, cin, cout):
        fan_in = cin * 27
        bound = 1.0 / jnp.sqrt(fan_in)
        w = jax.random.uniform(kw, (cout, cin, 3, 3, 3), jnp.float32, -bound, bound)
        b = jax.random.uniform(kb, (cout,), jnp.float32, -bound, bound)
        return w, b

    w1, b1 = conv_init(ks[0], ks[1], in_channels, out_channels)
    w2, b2 = conv_init(ks[2], ks[3], out_channels, out_channels)
    return {
        "w1": w1, "b1": b1,
        "gamma1": 1.0 + 0.1 * jax.random.normal(ks[4], (out_channels,)),
        "beta1": 0.1 * jax.random.normal(ks[5], (out_channels,)),
        "mean1": 0.05 * jax.random.normal(ks[6], (out_channels,)),
        "var1": 1.0 + 0.1 * jax.random.uniform(ks[7], (out_channels,)),
        "w2": w2, "b2": b2,
        "gamma2": 1.0 + 0.1 * jax.random.normal(ks[8], (out_channels,)),
        "beta2": 0.1 * jax.random.normal(ks[9], (out_channels,)),
        "mean2": 0.05 * jax.random.normal(ks[10], (out_channels,)),
        "var2": 1.0 + 0.1 * jax.random.uniform(ks[11], (out_channels,)),
    }


def double_conv3d_reference(x_ncdhw, params, eps=1e-5):
    def conv(x, w, b):
        y = lax.conv_general_dilated(
            x, w, window_strides=(1, 1, 1), padding=[(1, 1)] * 3,
            dimension_numbers=("NCDHW", "OIDHW", "NCDHW"))
        return y + b[None, :, None, None, None]

    def bn(x, g, bta, m, v):
        c = lambda a: a[None, :, None, None, None]
        return (x - c(m)) / jnp.sqrt(c(v) + eps) * c(g) + c(bta)

    y = conv(x_ncdhw, params["w1"], params["b1"])
    y = jnp.maximum(bn(y, params["gamma1"], params["beta1"],
                       params["mean1"], params["var1"]), 0.0)
    y = conv(y, params["w2"], params["b2"])
    y = jnp.maximum(bn(y, params["gamma2"], params["beta2"],
                       params["mean2"], params["var2"]), 0.0)
    return y


if __name__ == "__main__":
    key = jax.random.PRNGKey(0)
    k_x, k_p = jax.random.split(key)

    N, C_in, C_out, D, H, W = 2, 4, 8, 8, 8, 8
    x = jax.random.normal(k_x, (N, C_in, D, H, W), jnp.float32)
    params = init_double_conv3d_params(k_p, C_in, C_out)

    out = jax.block_until_ready(jax.jit(double_conv3d)(x, params))
    ref = jax.block_until_ready(double_conv3d_reference(x, params))

    assert out.shape == (N, C_out, D, H, W), out.shape
    max_err = float(jnp.max(jnp.abs(out - ref)))
    # bf16 MXU inputs with f32 accumulation + f32 epilogue: slightly looser tolerance than pure f32.
    assert jnp.allclose(out, ref, rtol=2e-2, atol=2e-2), f"max abs err = {max_err}"

    print("KERNEL_OK")
</pallas_src>

<mosaic_0001>
module attributes {stable_mosaic.version = 11 : i64} {
  func.func @kernel(%arg0: i32, %arg1: memref<1x8x8x32xbf16, #tpu.memory_space<vmem>>, %arg2: memref<9x32x64xbf16, #tpu.memory_space<vmem>>, %arg3: memref<1x64xf32, #tpu.memory_space<vmem>>, %arg4: memref<9x64x64xbf16, #tpu.memory_space<vmem>>, %arg5: memref<1x64xf32, #tpu.memory_space<vmem>>, %arg6: memref<1x64x64xf32, #tpu.memory_space<vmem>>, %arg7: memref<10x10x32xbf16, #tpu.memory_space<vmem>>, %arg8: memref<10x10x64xbf16, #tpu.memory_space<vmem>>, %arg9: memref<64x64xf32, #tpu.memory_space<vmem>>) attributes {dimension_semantics = [#tpu.dimension_semantics<parallel>], iteration_bounds = array<i64: 2>, scalar_prefetch = 0 : i64, scratch_operands = 3 : i64, tpu.core_type = #tpu.core_type<tc>, window_params = [{transform_indices = @transform_0, window_bounds = array<i64: 1, 8, 8, 32>}, {pipeline_mode = #tpu.pipeline_mode<synchronous>, transform_indices = @transform_1, window_bounds = array<i64: 9, 32, 64>}, {pipeline_mode = #tpu.pipeline_mode<synchronous>, transform_indices = @transform_2, window_bounds = array<i64: 1, 64>}, {pipeline_mode = #tpu.pipeline_mode<synchronous>, transform_indices = @transform_3, window_bounds = array<i64: 9, 64, 64>}, {pipeline_mode = #tpu.pipeline_mode<synchronous>, transform_indices = @transform_4, window_bounds = array<i64: 1, 64>}, {transform_indices = @transform_5, window_bounds = array<i64: 1, 64, 64>}]} {
    %cst = arith.constant 0.000000e+00 : bf16
    %0 = vector.broadcast %cst : bf16 to vector<10x10x32xbf16>
    %c0 = arith.constant 0 : index
    %c0_0 = arith.constant 0 : index
    %c0_1 = arith.constant 0 : index
    %1 = vector.load %arg7[%c0, %c0_0, %c0_1] : memref<10x10x32xbf16, #tpu.memory_space<vmem>>, vector<10x10x32xbf16>
    tpu.vector_store %arg7[%c0, %c0_0, %c0_1], %0 {strides = array<i32>} : memref<10x10x32xbf16, #tpu.memory_space<vmem>>, vector<10x10x32xbf16>,
    %c0_2 = arith.constant 0 : index
    %c0_3 = arith.constant 0 : index
    %c0_4 = arith.constant 0 : index
    %c0_5 = arith.constant 0 : index
    %2 = vector.load %arg1[%c0_2, %c0_3, %c0_4, %c0_5] : memref<1x8x8x32xbf16, #tpu.memory_space<vmem>>, vector<1x8x8x32xbf16>
    %3 = vector.shape_cast %2 : vector<1x8x8x32xbf16> to vector<8x8x32xbf16>
    %c1 = arith.constant 1 : index
    %c1_6 = arith.constant 1 : index
    %c0_7 = arith.constant 0 : index
    %4 = vector.load %arg7[%c1, %c1_6, %c0_7] : memref<10x10x32xbf16, #tpu.memory_space<vmem>>, vector<8x8x32xbf16>
    tpu.vector_store %arg7[%c1, %c1_6, %c0_7], %3 {strides = array<i32>} : memref<10x10x32xbf16, #tpu.memory_space<vmem>>, vector<8x8x32xbf16>,
    %cst_8 = arith.constant 0.000000e+00 : f32
    %5 = vector.broadcast %cst_8 : f32 to vector<64x64xf32>
    %c0_9 = arith.constant 0 : index
    %c0_10 = arith.constant 0 : index
    %6 = vector.load %arg9[%c0_9, %c0_10] : memref<64x64xf32, #tpu.memory_space<vmem>>, vector<64x64xf32>
    tpu.vector_store %arg9[%c0_9, %c0_10], %5 {strides = array<i32>} : memref<64x64xf32, #tpu.memory_space<vmem>>, vector<64x64xf32>,
    %c0_11 = arith.constant 0 : index
    %c0_12 = arith.constant 0 : index
    %c0_13 = arith.constant 0 : index
    %7 = vector.load %arg7[%c0_11, %c0_12, %c0_13] : memref<10x10x32xbf16, #tpu.memory_space<vmem>>, vector<8x8x32xbf16>
    %8 = vector.shape_cast %7 : vector<8x8x32xbf16> to vector<64x32xbf16>
    %c0_14 = arith.constant 0 : index
    %c0_15 = arith.constant 0 : index
    %9 = vector.load %arg9[%c0_14, %c0_15] : memref<64x64xf32, #tpu.memory_space<vmem>>, vector<64x64xf32>
    %c0_16 = arith.constant 0 : index
    %c0_17 = arith.constant 0 : index
    %c0_18 = arith.constant 0 : index
    %10 = vector.load %arg2[%c0_16, %c0_17, %c0_18] : memref<9x32x64xbf16, #tpu.memory_space<vmem>>, vector<1x32x64xbf16>
    %11 = vector.shape_cast %10 : vector<1x32x64xbf16> to vector<32x64xbf16>
    %cst_19 = arith.constant dense<0.000000e+00> : vector<64x64xf32>
    %12 = tpu.matmul %8, %11, %cst_19 {dimension_numbers = #tpu.dot_dimension_numbers<[1], [0], [0], [1], [0, 0, 1, 1], [], []>} : vector<64x32xbf16>, vector<32x64xbf16>, vector<64x64xf32> -> vector<64x64xf32>
    %13 = arith.addf %9, %12 : vector<64x64xf32>
    %c0_20 = arith.constant 0 : index
    %c0_21 = arith.constant 0 : index
    %14 = vector.load %arg9[%c0_20, %c0_21] : memref<64x64xf32, #tpu.memory_space<vmem>>, vector<64x64xf32>
    tpu.vector_store %arg9[%c0_20, %c0_21], %13 {strides = array<i32>} : memref<64x64xf32, #tpu.memory_space<vmem>>, vector<64x64xf32>,
    %c0_22 = arith.constant 0 : index
    %c1_23 = arith.constant 1 : index
    %c0_24 = arith.constant 0 : index
    %15 = vector.load %arg7[%c0_22, %c1_23, %c0_24] : memref<10x10x32xbf16, #tpu.memory_space<vmem>>, vector<8x8x32xbf16>
    %16 = vector.shape_cast %15 : vector<8x8x32xbf16> to vector<64x32xbf16>
    %c0_25 = arith.constant 0 : index
    %c0_26 = arith.constant 0 : index
    %17 = vector.load %arg9[%c0_25, %c0_26] : memref<64x64xf32, #tpu.memory_space<vmem>>, vector<64x64xf32>
    %c1_27 = arith.constant 1 : index
    %c0_28 = arith.constant 0 : index
    %c0_29 = arith.constant 0 : index
    %18 = vector.load %arg2[%c1_27, %c0_28, %c0_29] : memref<9x32x64xbf16, #tpu.memory_space<vmem>>, vector<1x32x64xbf16>
    %19 = vector.shape_cast %18 : vector<1x32x64xbf16> to vector<32x64xbf16>
    %cst_30 = arith.constant dense<0.000000e+00> : vector<64x64xf32>
    %20 = tpu.matmul %16, %19, %cst_30 {dimension_numbers = #tpu.dot_dimension_numbers<[1], [0], [0], [1], [0, 0, 1, 1], [], []>} : vector<64x32xbf16>, vector<32x64xbf16>, vector<64x64xf32> -> vector<64x64xf32>
    %21 = arith.addf %17, %20 : vector<64x64xf32>
    %c0_31 = arith.constant 0 : index
    %c0_32 = arith.constant 0 : index
    %22 = vector.load %arg9[%c0_31, %c0_32] : memref<64x64xf32, #tpu.memory_space<vmem>>, vector<64x64xf32>
    tpu.vector_store %arg9[%c0_31, %c0_32], %21 {strides = array<i32>} : memref<64x64xf32, #tpu.memory_space<vmem>>, vector<64x64xf32>,
    %c0_33 = arith.constant 0 : index
    %c2 = arith.constant 2 : index
    %c0_34 = arith.constant 0 : index
    %23 = vector.load %arg7[%c0_33, %c2, %c0_34] : memref<10x10x32xbf16, #tpu.memory_space<vmem>>, vector<8x8x32xbf16>
    %24 = vector.shape_cast %23 : vector<8x8x32xbf16> to vector<64x32xbf16>
    %c0_35 = arith.constant 0 : index
    %c0_36 = arith.constant 0 : index
    %25 = vector.load %arg9[%c0_35, %c0_36] : memref<64x64xf32, #tpu.memory_space<vmem>>, vector<64x64xf32>
    %c2_37 = arith.constant 2 : index
    %c0_38 = arith.constant 0 : index
    %c0_39 = arith.constant 0 : index
    %26 = vector.load %arg2[%c2_37, %c0_38, %c0_39] : memref<9x32x64xbf16, #tpu.memory_space<vmem>>, vector<1x32x64xbf16>
    %27 = vector.shape_cast %26 : vector<1x32x64xbf16> to vector<32x64xbf16>
    %cst_40 = arith.constant dense<0.000000e+00> : vector<64x64xf32>
    %28 = tpu.matmul %24, %27, %cst_40 {dimension_numbers = #tpu.dot_dimension_numbers<[1], [0], [0], [1], [0, 0, 1, 1], [], []>} : vector<64x32xbf16>, vector<32x64xbf16>, vector<64x64xf32> -> vector<64x64xf32>
    %29 = arith.addf %25, %28 : vector<64x64xf32>
    %c0_41 = arith.constant 0 : index
    %c0_42 = arith.constant 0 : index
    %30 = vector.load %arg9[%c0_41, %c0_42] : memref<64x64xf32, #tpu.memory_space<vmem>>, vector<64x64xf32>
    tpu.vector_store %arg9[%c0_41, %c0_42], %29 {strides = array<i32>} : memref<64x64xf32, #tpu.memory_space<vmem>>, vector<64x64xf32>,
    %c1_43 = arith.constant 1 : index
    %c0_44 = arith.constant 0 : index
    %c0_45 = arith.constant 0 : index
    %31 = vector.load %arg7[%c1_43, %c0_44, %c0_45] : memref<10x10x32xbf16, #tpu.memory_space<vmem>>, vector<8x8x32xbf16>
    %32 = vector.shape_cast %31 : vector<8x8x32xbf16> to vector<64x32xbf16>
    %c0_46 = arith.constant 0 : index
    %c0_47 = arith.constant 0 : index
    %33 = vector.load %arg9[%c0_46, %c0_47] : memref<64x64xf32, #tpu.memory_space<vmem>>, vector<64x64xf32>
    %c3 = arith.constant 3 : index
    %c0_48 = arith.constant 0 : index
    %c0_49 = arith.constant 0 : index
    %34 = vector.load %arg2[%c3, %c0_48, %c0_49] : memref<9x32x64xbf16, #tpu.memory_space<vmem>>, vector<1x32x64xbf16>
    %35 = vector.shape_cast %34 : vector<1x32x64xbf16> to vector<32x64xbf16>
    %cst_50 = arith.constant dense<0.000000e+00> : vector<64x64xf32>
    %36 = tpu.matmul %32, %35, %cst_50 {dimension_numbers = #tpu.dot_dimension_numbers<[1], [0], [0], [1], [0, 0, 1, 1], [], []>} : vector<64x32xbf16>, vector<32x64xbf16>, vector<64x64xf32> -> vector<64x64xf32>
    %37 = arith.addf %33, %36 : vector<64x64xf32>
    %c0_51 = arith.constant 0 : index
    %c0_52 = arith.constant 0 : index
    %38 = vector.load %arg9[%c0_51, %c0_52] : memref<64x64xf32, #tpu.memory_space<vmem>>, vector<64x64xf32>
    tpu.vector_store %arg9[%c0_51, %c0_52], %37 {strides = array<i32>} : memref<64x64xf32, #tpu.memory_space<vmem>>, vector<64x64xf32>,
    %c1_53 = arith.constant 1 : index
    %c1_54 = arith.constant 1 : index
    %c0_55 = arith.constant 0 : index
    %39 = vector.load %arg7[%c1_53, %c1_54, %c0_55] : memref<10x10x32xbf16, #tpu.memory_space<vmem>>, vector<8x8x32xbf16>
    %40 = vector.shape_cast %39 : vector<8x8x32xbf16> to vector<64x32xbf16>
    %c0_56 = arith.constant 0 : index
    %c0_57 = arith.constant 0 : index
    %41 = vector.load %arg9[%c0_56, %c0_57] : memref<64x64xf32, #tpu.memory_space<vmem>>, vector<64x64xf32>
    %c4 = arith.constant 4 : index
    %c0_58 = arith.constant 0 : index
    %c0_59 = arith.constant 0 : index
    %42 = vector.load %arg2[%c4, %c0_58, %c0_59] : memref<9x32x64xbf16, #tpu.memory_space<vmem>>, vector<1x32x64xbf16>
    %43 = vector.shape_cast %42 : vector<1x32x64xbf16> to vector<32x64xbf16>
    %cst_60 = arith.constant dense<0.000000e+00> : vector<64x64xf32>
    %44 = tpu.matmul %40, %43, %cst_60 {dimension_numbers = #tpu.dot_dimension_numbers<[1], [0], [0], [1], [0, 0, 1, 1], [], []>} : vector<64x32xbf16>, vector<32x64xbf16>, vector<64x64xf32> -> vector<64x64xf32>
    %45 = arith.addf %41, %44 : vector<64x64xf32>
    %c0_61 = arith.constant 0 : index
    %c0_62 = arith.constant 0 : index
    %46 = vector.load %arg9[%c0_61, %c0_62] : memref<64x64xf32, #tpu.memory_space<vmem>>, vector<64x64xf32>
    tpu.vector_store %arg9[%c0_61, %c0_62], %45 {strides = array<i32>} : memref<64x64xf32, #tpu.memory_space<vmem>>, vector<64x64xf32>,
    %c1_63 = arith.constant 1 : index
    %c2_64 = arith.constant 2 : index
    %c0_65 = arith.constant 0 : index
    %47 = vector.load %arg7[%c1_63, %c2_64, %c0_65] : memref<10x10x32xbf16, #tpu.memory_space<vmem>>, vector<8x8x32xbf16>
    %48 = vector.shape_cast %47 : vector<8x8x32xbf16> to vector<64x32xbf16>
    %c0_66 = arith.constant 0 : index
    %c0_67 = arith.constant 0 : index
    %49 = vector.load %arg9[%c0_66, %c0_67] : memref<64x64xf32, #tpu.memory_space<vmem>>, vector<64x64xf32>
    %c5 = arith.constant 5 : index
    %c0_68 = arith.constant 0 : index
    %c0_69 = arith.constant 0 : index
    %50 = vector.load %arg2[%c5, %c0_68, %c0_69] : memref<9x32x64xbf16, #tpu.memory_space<vmem>>, vector<1x32x64xbf16>
    %51 = vector.shape_cast %50 : vector<1x32x64xbf16> to vector<32x64xbf16>
    %cst_70 = arith.constant dense<0.000000e+00> : vector<64x64xf32>
    %52 = tpu.matmul %48, %51, %cst_70 {dimension_numbers = #tpu.dot_dimension_numbers<[1], [0], [0], [1], [0, 0, 1, 1], [], []>} : vector<64x32xbf16>, vector<32x64xbf16>, vector<64x64xf32> -> vector<64x64xf32>
    %53 = arith.addf %49, %52 : vector<64x64xf32>
    %c0_71 = arith.constant 0 : index
    %c0_72 = arith.constant 0 : index
    %54 = vector.load %arg9[%c0_71, %c0_72] : memref<64x64xf32, #tpu.memory_space<vmem>>, vector<64x64xf32>
    tpu.vector_store %arg9[%c0_71, %c0_72], %53 {strides = array<i32>} : memref<64x64xf32, #tpu.memory_space<vmem>>, vector<64x64xf32>,
    %c2_73 = arith.constant 2 : index
    %c0_74 = arith.constant 0 : index
    %c0_75 = arith.constant 0 : index
    %55 = vector.load %arg7[%c2_73, %c0_74, %c0_75] : memref<10x10x32xbf16, #tpu.memory_space<vmem>>, vector<8x8x32xbf16>
    %56 = vector.shape_cast %55 : vector<8x8x32xbf16> to vector<64x32xbf16>
    %c0_76 = arith.constant 0 : index
    %c0_77 = arith.constant 0 : index
    %57 = vector.load %arg9[%c0_76, %c0_77] : memref<64x64xf32, #tpu.memory_space<vmem>>, vector<64x64xf32>
    %c6 = arith.constant 6 : index
    %c0_78 = arith.constant 0 : index
    %c0_79 = arith.constant 0 : index
    %58 = vector.load %arg2[%c6, %c0_78, %c0_79] : memref<9x32x64xbf16, #tpu.memory_space<vmem>>, vector<1x32x64xbf16>
    %59 = vector.shape_cast %58 : vector<1x32x64xbf16> to vector<32x64xbf16>
    %cst_80 = arith.constant dense<0.000000e+00> : vector<64x64xf32>
    %60 = tpu.matmul %56, %59, %cst_80 {dimension_numbers = #tpu.dot_dimension_numbers<[1], [0], [0], [1], [0, 0, 1, 1], [], []>} : vector<64x32xbf16>, vector<32x64xbf16>, vector<64x64xf32> -> vector<64x64xf32>
    %61 = arith.addf %57, %60 : vector<64x64xf32>
    %c0_81 = arith.constant 0 : index
    %c0_82 = arith.constant 0 : index
    %62 = vector.load %arg9[%c0_81, %c0_82] : memref<64x64xf32, #tpu.memory_space<vmem>>, vector<64x64xf32>
    tpu.vector_store %arg9[%c0_81, %c0_82], %61 {strides = array<i32>} : memref<64x64xf32, #tpu.memory_space<vmem>>, vector<64x64xf32>,
    %c2_83 = arith.constant 2 : index
    %c1_84 = arith.constant 1 : index
    %c0_85 = arith.constant 0 : index
    %63 = vector.load %arg7[%c2_83, %c1_84, %c0_85] : memref<10x10x32xbf16, #tpu.memory_space<vmem>>, vector<8x8x32xbf16>
    %64 = vector.shape_cast %63 : vector<8x8x32xbf16> to vector<64x32xbf16>
    %c0_86 = arith.constant 0 : index
    %c0_87 = arith.constant 0 : index
    %65 = vector.load %arg9[%c0_86, %c0_87] : memref<64x64xf32, #tpu.memory_space<vmem>>, vector<64x64xf32>
    %c7 = arith.constant 7 : index
    %c0_88 = arith.constant 0 : index
    %c0_89 = arith.constant 0 : index
    %66 = vector.load %arg2[%c7, %c0_88, %c0_89] : memref<9x32x64xbf16, #tpu.memory_space<vmem>>, vector<1x32x64xbf16>
    %67 = vector.shape_cast %66 : vector<1x32x64xbf16> to vector<32x64xbf16>
    %cst_90 = arith.constant dense<0.000000e+00> : vector<64x64xf32>
    %68 = tpu.matmul %64, %67, %cst_90 {dimension_numbers = #tpu.dot_dimension_numbers<[1], [0], [0], [1], [0, 0, 1, 1], [], []>} : vector<64x32xbf16>, vector<32x64xbf16>, vector<64x64xf32> -> vector<64x64xf32>
    %69 = arith.addf %65, %68 : vector<64x64xf32>
    %c0_91 = arith.constant 0 : index
    %c0_92 = arith.constant 0 : index
    %70 = vector.load %arg9[%c0_91, %c0_92] : memref<64x64xf32, #tpu.memory_space<vmem>>, vector<64x64xf32>
    tpu.vector_store %arg9[%c0_91, %c0_92], %69 {strides = array<i32>} : memref<64x64xf32, #tpu.memory_space<vmem>>, vector<64x64xf32>,
    %c2_93 = arith.constant 2 : index
    %c2_94 = arith.constant 2 : index
    %c0_95 = arith.constant 0 : index
    %71 = vector.load %arg7[%c2_93, %c2_94, %c0_95] : memref<10x10x32xbf16, #tpu.memory_space<vmem>>, vector<8x8x32xbf16>
    %72 = vector.shape_cast %71 : vector<8x8x32xbf16> to vector<64x32xbf16>
    %c0_96 = arith.constant 0 : index
    %c0_97 = arith.constant 0 : index
    %73 = vector.load %arg9[%c0_96, %c0_97] : memref<64x64xf32, #tpu.memory_space<vmem>>, vector<64x64xf32>
    %c8 = arith.constant 8 : index
    %c0_98 = arith.constant 0 : index
    %c0_99 = arith.constant 0 : index
    %74 = vector.load %arg2[%c8, %c0_98, %c0_99] : memref<9x32x64xbf16, #tpu.memory_space<vmem>>, vector<1x32x64xbf16>
    %75 = vector.shape_cast %74 : vector<1x32x64xbf16> to vector<32x64xbf16>
    %cst_100 = arith.constant dense<0.000000e+00> : vector<64x64xf32>
    %76 = tpu.matmul %72, %75, %cst_100 {dimension_numbers = #tpu.dot_dimension_numbers<[1], [0], [0], [1], [0, 0, 1, 1], [], []>} : vector<64x32xbf16>, vector<32x64xbf16>, vector<64x64xf32> -> vector<64x64xf32>
    %77 = arith.addf %73, %76 : vector<64x64xf32>
    %c0_101 = arith.constant 0 : index
    %c0_102 = arith.constant 0 : index
    %78 = vector.load %arg9[%c0_101, %c0_102] : memref<64x64xf32, #tpu.memory_space<vmem>>, vector<64x64xf32>
    tpu.vector_store %arg9[%c0_101, %c0_102], %77 {strides = array<i32>} : memref<64x64xf32, #tpu.memory_space<vmem>>, vector<64x64xf32>,
    %c0_103 = arith.constant 0 : index
    %c0_104 = arith.constant 0 : index
    %79 = vector.load %arg9[%c0_103, %c0_104] : memref<64x64xf32, #tpu.memory_space<vmem>>, vector<64x64xf32>
    %c0_105 = arith.constant 0 : index
    %c0_106 = arith.constant 0 : index
    %80 = vector.load %arg3[%c0_105, %c0_106] : memref<1x64xf32, #tpu.memory_space<vmem>>, vector<1x64xf32>
    %81 = vector.shape_cast %80 : vector<1x64xf32> to vector<64xf32>
    %82 = vector.shape_cast %81 : vector<64xf32> to vector<1x64xf32>
    %83 = vector.broadcast %82 : vector<1x64xf32> to vector<64x64xf32>
    %84 = arith.addf %79, %83 : vector<64x64xf32>
    %cst_107 = arith.constant 0.000000e+00 : f32
    %85 = vector.broadcast %cst_107 : f32 to vector<64x64xf32>
    %86 = arith.maximumf %84, %85 : vector<64x64xf32>
    %cst_108 = arith.constant 0.000000e+00 : bf16
    %87 = vector.broadcast %cst_108 : bf16 to vector<10x10x64xbf16>
    %c0_109 = arith.constant 0 : index
    %c0_110 = arith.constant 0 : index
    %c0_111 = arith.constant 0 : index
    %88 = vector.load %arg8[%c0_109, %c0_110, %c0_111] : memref<10x10x64xbf16, #tpu.memory_space<vmem>>, vector<10x10x64xbf16>
    tpu.vector_store %arg8[%c0_109, %c0_110, %c0_111], %87 {strides = array<i32>} : memref<10x10x64xbf16, #tpu.memory_space<vmem>>, vector<10x10x64xbf16>,
    %89 = vector.shape_cast %86 : vector<64x64xf32> to vector<8x8x64xf32>
    %90 = arith.truncf %89 : vector<8x8x64xf32> to vector<8x8x64xbf16>
    %c1_112 = arith.constant 1 : index
    %c1_113 = arith.constant 1 : index
    %c0_114 = arith.constant 0 : index
    %91 = vector.load %arg8[%c1_112, %c1_113, %c0_114] : memref<10x10x64xbf16, #tpu.memory_space<vmem>>, vector<8x8x64xbf16>
    tpu.vector_store %arg8[%c1_112, %c1_113, %c0_114], %90 {strides = array<i32>} : memref<10x10x64xbf16, #tpu.memory_space<vmem>>, vector<8x8x64xbf16>,
    %cst_115 = arith.constant 0.000000e+00 : f32
    %92 = vector.broadcast %cst_115 : f32 to vector<64x64xf32>
    %c0_116 = arith.constant 0 : index
    %c0_117 = arith.constant 0 : index
    %93 = vector.load %arg9[%c0_116, %c0_117] : memref<64x64xf32, #tpu.memory_space<vmem>>, vector<64x64xf32>
    tpu.vector_store %arg9[%c0_116, %c0_117], %92 {strides = array<i32>} : memref<64x64xf32, #tpu.memory_space<vmem>>, vector<64x64xf32>,
    %c0_118 = arith.constant 0 : index
    %c0_119 = arith.constant 0 : index
    %c0_120 = arith.constant 0 : index
    %94 = vector.load %arg8[%c0_118, %c0_119, %c0_120] : memref<10x10x64xbf16, #tpu.memory_space<vmem>>, vector<8x8x64xbf16>
    %95 = vector.shape_cast %94 : vector<8x8x64xbf16> to vector<64x64xbf16>
    %c0_121 = arith.constant 0 : index
    %c0_122 = arith.constant 0 : index
    %96 = vector.load %arg9[%c0_121, %c0_122] : memref<64x64xf32, #tpu.memory_space<vmem>>, vector<64x64xf32>
    %c0_123 = arith.constant 0 : index
    %c0_124 = arith.constant 0 : index
    %c0_125 = arith.constant 0 : index
    %97 = vector.load %arg4[%c0_123, %c0_124, %c0_125] : memref<9x64x64xbf16, #tpu.memory_space<vmem>>, vector<1x64x64xbf16>
    %98 = vector.shape_cast %97 : vector<1x64x64xbf16> to vector<64x64xbf16>
    %cst_126 = arith.constant dense<0.000000e+00> : vector<64x64xf32>
    %99 = tpu.matmul %95, %98, %cst_126 {dimension_numbers = #tpu.dot_dimension_numbers<[1], [0], [0], [1], [0, 0, 1, 1], [], []>} : vector<64x64xbf16>, vector<64x64xbf16>, vector<64x64xf32> -> vector<64x64xf32>
    %100 = arith.addf %96, %99 : vector<64x64xf32>
    %c0_127 = arith.constant 0 : index
    %c0_128 = arith.constant 0 : index
    %101 = vector.load %arg9[%c0_127, %c0_128] : memref<64x64xf32, #tpu.memory_space<vmem>>, vector<64x64xf32>
    tpu.vector_store %arg9[%c0_127, %c0_128], %100 {strides = array<i32>} : memref<64x64xf32, #tpu.memory_space<vmem>>, vector<64x64xf32>,
    %c0_129 = arith.constant 0 : index
    %c1_130 = arith.constant 1 : index
    %c0_131 = arith.constant 0 : index
    %102 = vector.load %arg8[%c0_129, %c1_130, %c0_131] : memref<10x10x64xbf16, #tpu.memory_space<vmem>>, vector<8x8x64xbf16>
    %103 = vector.shape_cast %102 : vector<8x8x64xbf16> to vector<64x64xbf16>
    %c0_132 = arith.constant 0 : index
    %c0_133 = arith.constant 0 : index
    %104 = vector.load %arg9[%c0_132, %c0_133] : memref<64x64xf32, #tpu.memory_space<vmem>>, vector<64x64xf32>
    %c1_134 = arith.constant 1 : index
    %c0_135 = arith.constant 0 : index
    %c0_136 = arith.constant 0 : index
    %105 = vector.load %arg4[%c1_134, %c0_135, %c0_136] : memref<9x64x64xbf16, #tpu.memory_space<vmem>>, vector<1x64x64xbf16>
    %106 = vector.shape_cast %105 : vector<1x64x64xbf16> to vector<64x64xbf16>
    %cst_137 = arith.constant dense<0.000000e+00> : vector<64x64xf32>
    %107 = tpu.matmul %103, %106, %cst_137 {dimension_numbers = #tpu.dot_dimension_numbers<[1], [0], [0], [1], [0, 0, 1, 1], [], []>} : vector<64x64xbf16>, vector<64x64xbf16>, vector<64x64xf32> -> vector<64x64xf32>
    %108 = arith.addf %104, %107 : vector<64x64xf32>
    %c0_138 = arith.constant 0 : index
    %c0_139 = arith.constant 0 : index
    %109 = vector.load %arg9[%c0_138, %c0_139] : memref<64x64xf32, #tpu.memory_space<vmem>>, vector<64x64xf32>
    tpu.vector_store %arg9[%c0_138, %c0_139], %108 {strides = array<i32>} : memref<64x64xf32, #tpu.memory_space<vmem>>, vector<64x64xf32>,
    %c0_140 = arith.constant 0 : index
    %c2_141 = arith.constant 2 : index
    %c0_142 = arith.constant 0 : index
    %110 = vector.load %arg8[%c0_140, %c2_141, %c0_142] : memref<10x10x64xbf16, #tpu.memory_space<vmem>>, vector<8x8x64xbf16>
    %111 = vector.shape_cast %110 : vector<8x8x64xbf16> to vector<64x64xbf16>
    %c0_143 = arith.constant 0 : index
    %c0_144 = arith.constant 0 : index
    %112 = vector.load %arg9[%c0_143, %c0_144] : memref<64x64xf32, #tpu.memory_space<vmem>>, vector<64x64xf32>
    %c2_145 = arith.constant 2 : index
    %c0_146 = arith.constant 0 : index
    %c0_147 = arith.constant 0 : index
    %113 = vector.load %arg4[%c2_145, %c0_146, %c0_147] : memref<9x64x64xbf16, #tpu.memory_space<vmem>>, vector<1x64x64xbf16>
    %114 = vector.shape_cast %113 : vector<1x64x64xbf16> to vector<64x64xbf16>
    %cst_148 = arith.constant dense<0.000000e+00> : vector<64x64xf32>
    %115 = tpu.matmul %111, %114, %cst_148 {dimension_numbers = #tpu.dot_dimension_numbers<[1], [0], [0], [1], [0, 0, 1, 1], [], []>} : vector<64x64xbf16>, vector<64x64xbf16>, vector<64x64xf32> -> vector<64x64xf32>
    %116 = arith.addf %112, %115 : vector<64x64xf32>
    %c0_149 = arith.constant 0 : index
    %c0_150 = arith.constant 0 : index
    %117 = vector.load %arg9[%c0_149, %c0_150] : memref<64x64xf32, #tpu.memory_space<vmem>>, vector<64x64xf32>
    tpu.vector_store %arg9[%c0_149, %c0_150], %116 {strides = array<i32>} : memref<64x64xf32, #tpu.memory_space<vmem>>, vector<64x64xf32>,
    %c1_151 = arith.constant 1 : index
    %c0_152 = arith.constant 0 : index
    %c0_153 = arith.constant 0 : index
    %118 = vector.load %arg8[%c1_151, %c0_152, %c0_153] : memref<10x10x64xbf16, #tpu.memory_space<vmem>>, vector<8x8x64xbf16>
    %119 = vector.shape_cast %118 : vector<8x8x64xbf16> to vector<64x64xbf16>
    %c0_154 = arith.constant 0 : index
    %c0_155 = arith.constant 0 : index
    %120 = vector.load %arg9[%c0_154, %c0_155] : memref<64x64xf32, #tpu.memory_space<vmem>>, vector<64x64xf32>
    %c3_156 = arith.constant 3 : index
    %c0_157 = arith.constant 0 : index
    %c0_158 = arith.constant 0 : index
    %121 = vector.load %arg4[%c3_156, %c0_157, %c0_158] : memref<9x64x64xbf16, #tpu.memory_space<vmem>>, vector<1x64x64xbf16>
    %122 = vector.shape_cast %121 : vector<1x64x64xbf16> to vector<64x64xbf16>
    %cst_159 = arith.constant dense<0.000000e+00> : vector<64x64xf32>
    %123 = tpu.matmul %119, %122, %cst_159 {dimension_numbers = #tpu.dot_dimension_numbers<[1], [0], [0], [1], [0, 0, 1, 1], [], []>} : vector<64x64xbf16>, vector<64x64xbf16>, vector<64x64xf32> -> vector<64x64xf32>
    %124 = arith.addf %120, %123 : vector<64x64xf32>
    %c0_160 = arith.constant 0 : index
    %c0_161 = arith.constant 0 : index
    %125 = vector.load %arg9[%c0_160, %c0_161] : memref<64x64xf32, #tpu.memory_space<vmem>>, vector<64x64xf32>
    tpu.vector_store %arg9[%c0_160, %c0_161], %124 {strides = array<i32>} : memref<64x64xf32, #tpu.memory_space<vmem>>, vector<64x64xf32>,
    %c1_162 = arith.constant 1 : index
    %c1_163 = arith.constant 1 : index
    %c0_164 = arith.constant 0 : index
    %126 = vector.load %arg8[%c1_162, %c1_163, %c0_164] : memref<10x10x64xbf16, #tpu.memory_space<vmem>>, vector<8x8x64xbf16>
    %127 = vector.shape_cast %126 : vector<8x8x64xbf16> to vector<64x64xbf16>
    %c0_165 = arith.constant 0 : index
    %c0_166 = arith.constant 0 : index
    %128 = vector.load %arg9[%c0_165, %c0_166] : memref<64x64xf32, #tpu.memory_space<vmem>>, vector<64x64xf32>
    %c4_167 = arith.constant 4 : index
    %c0_168 = arith.constant 0 : index
    %c0_169 = arith.constant 0 : index
    %129 = vector.load %arg4[%c4_167, %c0_168, %c0_169] : memref<9x64x64xbf16, #tpu.memory_space<vmem>>, vector<1x64x64xbf16>
    %130 = vector.shape_cast %129 : vector<1x64x64xbf16> to vector<64x64xbf16>
    %cst_170 = arith.constant dense<0.000000e+00> : vector<64x64xf32>
    %131 = tpu.matmul %127, %130, %cst_170 {dimension_numbers = #tpu.dot_dimension_numbers<[1], [0], [0], [1], [0, 0, 1, 1], [], []>} : vector<64x64xbf16>, vector<64x64xbf16>, vector<64x64xf32> -> vector<64x64xf32>
    %132 = arith.addf %128, %131 : vector<64x64xf32>
    %c0_171 = arith.constant 0 : index
    %c0_172 = arith.constant 0 : index
    %133 = vector.load %arg9[%c0_171, %c0_172] : memref<64x64xf32, #tpu.memory_space<vmem>>, vector<64x64xf32>
    tpu.vector_store %arg9[%c0_171, %c0_172], %132 {strides = array<i32>} : memref<64x64xf32, #tpu.memory_space<vmem>>, vector<64x64xf32>,
    %c1_173 = arith.constant 1 : index
    %c2_174 = arith.constant 2 : index
    %c0_175 = arith.constant 0 : index
    %134 = vector.load %arg8[%c1_173, %c2_174, %c0_175] : memref<10x10x64xbf16, #tpu.memory_space<vmem>>, vector<8x8x64xbf16>
    %135 = vector.shape_cast %134 : vector<8x8x64xbf16> to vector<64x64xbf16>
    %c0_176 = arith.constant 0 : index
    %c0_177 = arith.constant 0 : index
    %136 = vector.load %arg9[%c0_176, %c0_177] : memref<64x64xf32, #tpu.memory_space<vmem>>, vector<64x64xf32>
    %c5_178 = arith.constant 5 : index
    %c0_179 = arith.constant 0 : index
    %c0_180 = arith.constant 0 : index
    %137 = vector.load %arg4[%c5_178, %c0_179, %c0_180] : memref<9x64x64xbf16, #tpu.memory_space<vmem>>, vector<1x64x64xbf16>
    %138 = vector.shape_cast %137 : vector<1x64x64xbf16> to vector<64x64xbf16>
    %cst_181 = arith.constant dense<0.000000e+00> : vector<64x64xf32>
    %139 = tpu.matmul %135, %138, %cst_181 {dimension_numbers = #tpu.dot_dimension_numbers<[1], [0], [0], [1], [0, 0, 1, 1], [], []>} : vector<64x64xbf16>, vector<64x64xbf16>, vector<64x64xf32> -> vector<64x64xf32>
    %140 = arith.addf %136, %139 : vector<64x64xf32>
    %c0_182 = arith.constant 0 : index
    %c0_183 = arith.constant 0 : index
    %141 = vector.load %arg9[%c0_182, %c0_183] : memref<64x64xf32, #tpu.memory_space<vmem>>, vector<64x64xf32>
    tpu.vector_store %arg9[%c0_182, %c0_183], %140 {strides = array<i32>} : memref<64x64xf32, #tpu.memory_space<vmem>>, vector<64x64xf32>,
    %c2_184 = arith.constant 2 : index
    %c0_185 = arith.constant 0 : index
    %c0_186 = arith.constant 0 : index
    %142 = vector.load %arg8[%c2_184, %c0_185, %c0_186] : memref<10x10x64xbf16, #tpu.memory_space<vmem>>, vector<8x8x64xbf16>
    %143 = vector.shape_cast %142 : vector<8x8x64xbf16> to vector<64x64xbf16>
    %c0_187 = arith.constant 0 : index
    %c0_188 = arith.constant 0 : index
    %144 = vector.load %arg9[%c0_187, %c0_188] : memref<64x64xf32, #tpu.memory_space<vmem>>, vector<64x64xf32>
    %c6_189 = arith.constant 6 : index
    %c0_190 = arith.constant 0 : index
    %c0_191 = arith.constant 0 : index
    %145 = vector.load %arg4[%c6_189, %c0_190, %c0_191] : memref<9x64x64xbf16, #tpu.memory_space<vmem>>, vector<1x64x64xbf16>
    %146 = vector.shape_cast %145 : vector<1x64x64xbf16> to vector<64x64xbf16>
    %cst_192 = arith.constant dense<0.000000e+00> : vector<64x64xf32>
    %147 = tpu.matmul %143, %146, %cst_192 {dimension_numbers = #tpu.dot_dimension_numbers<[1], [0], [0], [1], [0, 0, 1, 1], [], []>} : vector<64x64xbf16>, vector<64x64xbf16>, vector<64x64xf32> -> vector<64x64xf32>
    %148 = arith.addf %144, %147 : vector<64x64xf32>
    %c0_193 = arith.constant 0 : index
    %c0_194 = arith.constant 0 : index
    %149 = vector.load %arg9[%c0_193, %c0_194] : memref<64x64xf32, #tpu.memory_space<vmem>>, vector<64x64xf32>
    tpu.vector_store %arg9[%c0_193, %c0_194], %148 {strides = array<i32>} : memref<64x64xf32, #tpu.memory_space<vmem>>, vector<64x64xf32>,
    %c2_195 = arith.constant 2 : index
    %c1_196 = arith.constant 1 : index
    %c0_197 = arith.constant 0 : index
    %150 = vector.load %arg8[%c2_195, %c1_196, %c0_197] : memref<10x10x64xbf16, #tpu.memory_space<vmem>>, vector<8x8x64xbf16>
    %151 = vector.shape_cast %150 : vector<8x8x64xbf16> to vector<64x64xbf16>
    %c0_198 = arith.constant 0 : index
    %c0_199 = arith.constant 0 : index
    %152 = vector.load %arg9[%c0_198, %c0_199] : memref<64x64xf32, #tpu.memory_space<vmem>>, vector<64x64xf32>
    %c7_200 = arith.constant 7 : index
    %c0_201 = arith.constant 0 : index
    %c0_202 = arith.constant 0 : index
    %153 = vector.load %arg4[%c7_200, %c0_201, %c0_202] : memref<9x64x64xbf16, #tpu.memory_space<vmem>>, vector<1x64x64xbf16>
    %154 = vector.shape_cast %153 : vector<1x64x64xbf16> to vector<64x64xbf16>
    %cst_203 = arith.constant dense<0.000000e+00> : vector<64x64xf32>
    %155 = tpu.matmul %151, %154, %cst_203 {dimension_numbers = #tpu.dot_dimension_numbers<[1], [0], [0], [1], [0, 0, 1, 1], [], []>} : vector<64x64xbf16>, vector<64x64xbf16>, vector<64x64xf32> -> vector<64x64xf32>
    %156 = arith.addf %152, %155 : vector<64x64xf32>
    %c0_204 = arith.constant 0 : index
    %c0_205 = arith.constant 0 : index
    %157 = vector.load %arg9[%c0_204, %c0_205] : memref<64x64xf32, #tpu.memory_space<vmem>>, vector<64x64xf32>
    tpu.vector_store %arg9[%c0_204, %c0_205], %156 {strides = array<i32>} : memref<64x64xf32, #tpu.memory_space<vmem>>, vector<64x64xf32>,
    %c2_206 = arith.constant 2 : index
    %c2_207 = arith.constant 2 : index
    %c0_208 = arith.constant 0 : index
    %158 = vector.load %arg8[%c2_206, %c2_207, %c0_208] : memref<10x10x64xbf16, #tpu.memory_space<vmem>>, vector<8x8x64xbf16>
    %159 = vector.shape_cast %158 : vector<8x8x64xbf16> to vector<64x64xbf16>
    %c0_209 = arith.constant 0 : index
    %c0_210 = arith.constant 0 : index
    %160 = vector.load %arg9[%c0_209, %c0_210] : memref<64x64xf32, #tpu.memory_space<vmem>>, vector<64x64xf32>
    %c8_211 = arith.constant 8 : index
    %c0_212 = arith.constant 0 : index
    %c0_213 = arith.constant 0 : index
    %161 = vector.load %arg4[%c8_211, %c0_212, %c0_213] : memref<9x64x64xbf16, #tpu.memory_space<vmem>>, vector<1x64x64xbf16>
    %162 = vector.shape_cast %161 : vector<1x64x64xbf16> to vector<64x64xbf16>
    %cst_214 = arith.constant dense<0.000000e+00> : vector<64x64xf32>
    %163 = tpu.matmul %159, %162, %cst_214 {dimension_numbers = #tpu.dot_dimension_numbers<[1], [0], [0], [1], [0, 0, 1, 1], [], []>} : vector<64x64xbf16>, vector<64x64xbf16>, vector<64x64xf32> -> vector<64x64xf32>
    %164 = arith.addf %160, %163 : vector<64x64xf32>
    %c0_215 = arith.constant 0 : index
    %c0_216 = arith.constant 0 : index
    %165 = vector.load %arg9[%c0_215, %c0_216] : memref<64x64xf32, #tpu.memory_space<vmem>>, vector<64x64xf32>
    tpu.vector_store %arg9[%c0_215, %c0_216], %164 {strides = array<i32>} : memref<64x64xf32, #tpu.memory_space<vmem>>, vector<64x64xf32>,
    %c0_217 = arith.constant 0 : index
    %c0_218 = arith.constant 0 : index
    %166 = vector.load %arg9[%c0_217, %c0_218] : memref<64x64xf32, #tpu.memory_space<vmem>>, vector<64x64xf32>
    %c0_219 = arith.constant 0 : index
    %c0_220 = arith.constant 0 : index
    %167 = vector.load %arg5[%c0_219, %c0_220] : memref<1x64xf32, #tpu.memory_space<vmem>>, vector<1x64xf32>
    %168 = vector.shape_cast %167 : vector<1x64xf32> to vector<64xf32>
    %169 = vector.shape_cast %168 : vector<64xf32> to vector<1x64xf32>
    %170 = vector.broadcast %169 : vector<1x64xf32> to vector<64x64xf32>
    %171 = arith.addf %166, %170 : vector<64x64xf32>
    %cst_221 = arith.constant 0.000000e+00 : f32
    %172 = vector.broadcast %cst_221 : f32 to vector<64x64xf32>
    %173 = arith.maximumf %171, %172 : vector<64x64xf32>
    %c0_222 = arith.constant 0 : index
    %c0_223 = arith.constant 0 : index
    %c0_224 = arith.constant 0 : index
    %174 = vector.load %arg6[%c0_222, %c0_223, %c0_224] : memref<1x64x64xf32, #tpu.memory_space<vmem>>, vector<1x64x64xf32>
    %175 = vector.shape_cast %174 : vector<1x64x64xf32> to vector<64x64xf32>
    %176 = vector.shape_cast %173 : vector<64x64xf32> to vector<1x64x64xf32>
    tpu.vector_store %arg6[%c0_222, %c0_223, %c0_224], %176 {strides = array<i32>} : memref<1x64x64xf32, #tpu.memory_space<vmem>>, vector<1x64x64xf32>,
    return
  }
  func.func @transform_0(%arg0: i32) -> (i32, i32, i32, i32) {
    %c0_i32 = arith.constant 0 : i32
    %c0_i32_0 = arith.constant 0 : i32
    %c0_i32_1 = arith.constant 0 : i32
    %c0_i32_2 = arith.constant 0 : i32
    return %arg0, %c0_i32, %c0_i32_0, %c0_i32_1 : i32, i32, i32, i32
  }
  func.func @transform_1(%arg0: i32) -> (i32, i32, i32) {
    %c0_i32 = arith.constant 0 : i32
    %c0_i32_0 = arith.constant 0 : i32
    %c0_i32_1 = arith.constant 0 : i32
    %c0_i32_2 = arith.constant 0 : i32
    return %c0_i32, %c0_i32_0, %c0_i32_1 : i32, i32, i32
  }
  func.func @transform_2(%arg0: i32) -> (i32, i32) {
    %c0_i32 = arith.constant 0 : i32
    %c0_i32_0 = arith.constant 0 : i32
    %c0_i32_1 = arith.constant 0 : i32
    return %c0_i32, %c0_i32_0 : i32, i32
  }
  func.func @transform_3(%arg0: i32) -> (i32, i32, i32) {
    %c0_i32 = arith.constant 0 : i32
    %c0_i32_0 = arith.constant 0 : i32
    %c0_i32_1 = arith.constant 0 : i32
    %c0_i32_2 = arith.constant 0 : i32
    return %c0_i32, %c0_i32_0, %c0_i32_1 : i32, i32, i32
  }
  func.func @transform_4(%arg0: i32) -> (i32, i32) {
    %c0_i32 = arith.constant 0 : i32
    %c0_i32_0 = arith.constant 0 : i32
    %c0_i32_1 = arith.constant 0 : i32
    return %c0_i32, %c0_i32_0 : i32, i32
  }
  func.func @transform_5(%arg0: i32) -> (i32, i32, i32) {
    %c0_i32 = arith.constant 0 : i32
    %c0_i32_0 = arith.constant 0 : i32
    %c0_i32_1 = arith.constant 0 : i32
    return %arg0, %c0_i32, %c0_i32_0 : i32, i32, i32
  }
}

</mosaic_0001>

<llo_original>
// kernel: tile.13
$region0: #{tile.13}
  #allocation0 [shape = 's32[1]{0}', space=sflag, size = 0x4, scoped, tag = 'scoped memory for tile.13']
  %s0 = inlined_call_operand.vmem [shape: f32[8], index: 0, kind: input, shape index: {}]
  %s1 = inlined_call_operand.vmem [shape: f32[8,8], index: 1, kind: output, shape index: {}]
  // Predicated region
  $region2: #{tile.13} parent=0 // pred_check
    _
  $region3: #{tile.13} parent=0 // pred_check_branch
    %3 = sbr.rel (0) target = $region5
  $region4: #{tile.13} parent=0 // pred_region
    _
  $region5: #{tile.13} parent=0 // pred_fallthru
    _
  %v4 = vld [vmem:[%s0] ss:$0 sm:$0xff]
  %5 = vst [vmem:[%s1] sm:$0xff] %v4

// kernel: tile.14
$region0: #{tile.14}
  %s0 = inlined_call_operand.vmem [shape: f32[8,8], index: 0, kind: input, shape index: {}]
  %s1 = inlined_call_operand.vmem [shape: f32[1,64], index: 1, kind: output, shape index: {}]
  $region1: #{tile.14} parent=0
    #allocation0 [shape = 'u8[4096]{0}', space=vmem, size = 0x1000, scoped, tag = 'scoped mem for output reshape']
    %v2 = vld [vmem:[%s0] sm:$0x1]
    %vm3 = vcmask 64512
    %4 = vst.msk [vmem:[#allocation0] sm:$0x1] %vm3, %v2
    %s5 = scalar_lea.vmem %s0, 7
    %v6 = vld [vmem:[%s5] sm:$0x1]
    %7 = vrot.lane.b32.xlu0 %v6, 56
    %v8 = vpop.permute.xlu0 %7
    %vm9 = vcmask 523712
    %10 = vst.msk [vmem:[#allocation0] sm:$0x1] %vm9, %v8
    %s11 = scalar_lea.vmem %s0, 6
    %v12 = vld [vmem:[%s11] sm:$0x1]
    %13 = vrot.lane.b32.xlu0 %v12, 48
    %v14 = vpop.permute.xlu0 %13
    %vm15 = vcmask 458112
    %16 = vst.msk [vmem:[#allocation0] sm:$0x1] %vm15, %v14
    %s17 = scalar_lea.vmem %s0, 5
    %v18 = vld [vmem:[%s17] sm:$0x1]
    %19 = vrot.lane.b32.xlu0 %v18, 40
    %v20 = vpop.permute.xlu0 %19
    %vm21 = vcmask 392512
    %22 = vst.msk [vmem:[#allocation0] sm:$0x1] %vm21, %v20
    %s23 = scalar_lea.vmem %s0, 4
    %v24 = vld [vmem:[%s23] sm:$0x1]
    %25 = vrot.lane.b32.xlu0 %v24, 32
    %v26 = vpop.permute.xlu0 %25
    %vm27 = vcmask 326912
    %28 = vst.msk [vmem:[#allocation0] sm:$0x1] %vm27, %v26
    %s29 = scalar_lea.vmem %s0, 3
    %v30 = vld [vmem:[%s29] sm:$0x1]
    %31 = vrot.lane.b32.xlu0 %v30, 24
    %v32 = vpop.permute.xlu0 %31
    %vm33 = vcmask 261312
    %34 = vst.msk [vmem:[#allocation0] sm:$0x1] %vm33, %v32
    %s35 = scalar_lea.vmem %s0, 2
    %v36 = vld [vmem:[%s35] sm:$0x1]
    %37 = vrot.lane.b32.xlu0 %v36, 16
    %v38 = vpop.permute.xlu0 %37
    %vm39 = vcmask 195712
    %40 = vst.msk [vmem:[#allocation0] sm:$0x1] %vm39, %v38
    %s41 = scalar_lea.vmem %s0, 1
    %v42 = vld [vmem:[%s41] sm:$0x1]
    %43 = vrot.lane.b32.xlu0 %v42, 8
    %v44 = vpop.permute.xlu0 %43
    %vm45 = vcmask 130112
    %46 = vst.msk [vmem:[#allocation0] sm:$0x1] %vm45, %v44
    %s48 = sshllo.u32 0, 1
    %v50 = vld [vmem:[#allocation0] sm:%s48]
    %s51 = sshllo.u32 0, 1
    %52 = vst [vmem:[%s1] sm:%s51] %v50

// kernel: double_conv3d.1
$region0: #{double_conv3d.1}
  #allocation0 [shape = 'u32[]', space=smem, size = 0x4, offset = 0x4, fixed_abs, tag = 'smem constant byte address 0x4 - core index']
  #allocation1 [shape = 'u32[144,128]{1,0:T(1,128)}', space=vmem, size = 0x12000, scoped, tag = 'internal scratch']
  #allocation2 [shape = 'bf16[10,10,32]{2,1,0:T(8,128)(2,1)}', space=vmem, size = 0xa000, scoped, tag = 'scratch operand']
  #allocation3 [shape = 'bf16[10,10,64]{2,1,0:T(8,128)(2,1)}', space=vmem, size = 0xa000, scoped, tag = 'scratch operand']
  #allocation4 [shape = 'f32[64,64]{1,0:T(8,128)}', space=vmem, size = 0x8000, scoped, tag = 'scratch operand']
  %s0 = inlined_call_operand.vmem [shape: bf16[2,8,8,32], index: 0, kind: input, shape index: {}]
  %s1 = inlined_call_operand.vmem [shape: bf16[9,32,64], index: 1, kind: input, shape index: {}]
  %s2 = inlined_call_operand.vmem [shape: f32[1,64], index: 2, kind: input, shape index: {}]
  %s3 = inlined_call_operand.vmem [shape: bf16[9,64,64], index: 3, kind: input, shape index: {}]
  %s4 = inlined_call_operand.vmem [shape: f32[1,64], index: 4, kind: input, shape index: {}]
  %s5 = inlined_call_operand.vmem [shape: f32[2,64,64], index: 5, kind: output, shape index: {}]
  %s6 = sld [smem:[#allocation0]]
  $region53: #{double_conv3d.1} parent=0
    _
  %s8 = ssub.s32 1, %s6
  %s9 = scalar_select 0, %s8, %s6
  loop: start=0, step=1, limit=4
  $region2: #{double_conv3d.1} parent=0 // loop_pre_header
    _
  $region3: #{double_conv3d.1} parent=0 // loop_header
    %s11 = sphi 0, %s15
    %p12 = scmp.ge.s32.totalorder %s11, 4
    %s21 = sphi 0, %s23
    %s24 = sphi 0, %s21
    %s25 = sphi 0, %s24
    %s41 = sphi 0, %s25
    %s45 = sphi 0, %s45
    %s47 = sphi 0, %s45
    %s48 = sphi 0, %s47
    %s62 = sphi 0, %s48
    %s66 = sphi 0, %s66
    %s68 = sphi 0, %s66
    %s69 = sphi 0, %s68
    %s83 = sphi 0, %s69
    %s87 = sphi 0, %s87
    %s89 = sphi 0, %s87
    %s90 = sphi 0, %s89
    %s104 = sphi 0, %s90
    %s108 = sphi 0, %s108
    %s110 = sphi 0, %s108
    %s111 = sphi 0, %s110
    %s125 = sphi 0, %s111
    %s131 = sphi 0, %s133
    %s134 = sphi 0, %s131
    %s135 = sphi 0, %s134
    %s151 = sphi 0, %s135
  $region4: #{double_conv3d.1} parent=0 // loop_header_branch
    %14 = sbr.rel (%p12) target = $region8
  $region5: #{double_conv3d.1} parent=0 // loop_body
    %s16 = ssub.s32 %s11, 1
    %s17 = ssub.s32 %s11, 2
    %s18 = sadd.s32 %s11, 1
    %s19 = ssub.s32 %s11, %s18
    %p20 = scmp.eq.s32.totalorder %s19, 0
    %s22 = sadd.s32 %s21, 1
    %s23 = scalar_select %p20, %s21, %s22
    %p26 = pneg %p20
    %p27 = scmp.eq.s32.totalorder %s11, 1
    %p28 = por %p26, %p27
    %p29 = scmp.ne.s32.totalorder %s21, %s24
    %p30 = scmp.eq.s32.totalorder %s11, 0
    %p31 = por %p29, %p30
    %p32 = scmp.ne.s32.totalorder %s21, %s24
    %p33 = scmp.eq.s32.totalorder %s16, 1
    %p34 = por %p32, %p33
    %p35 = scmp.ne.s32.totalorder %s24, %s25
    %p36 = scmp.eq.s32.totalorder %s16, 0
    %p37 = por %p35, %p36
    %p38 = scmp.ne.s32.totalorder %s24, %s25
    %p39 = scmp.eq.s32.totalorder %s17, 1
    %p40 = por %p38, %p39
    %p42 = scmp.ne.s32.totalorder %s25, %s41
    %p43 = scmp.eq.s32.totalorder %s17, 0
    %p44 = por %p42, %p43
    %s46 = sadd.s32 %s45, 1
    %p49 = scmp.eq.s32.totalorder %s11, 1
    %p50 = scmp.ne.s32.totalorder %s45, %s47
    %p51 = scmp.eq.s32.totalorder %s11, 0
    %p52 = por %p50, %p51
    %p53 = scmp.ne.s32.totalorder %s45, %s47
    %p54 = scmp.eq.s32.totalorder %s16, 1
    %p55 = por %p53, %p54
    %p56 = scmp.ne.s32.totalorder %s47, %s48
    %p57 = scmp.eq.s32.totalorder %s16, 0
    %p58 = por %p56, %p57
    %p59 = scmp.ne.s32.totalorder %s47, %s48
    %p60 = scmp.eq.s32.totalorder %s17, 1
    %p61 = por %p59, %p60
    %p63 = scmp.ne.s32.totalorder %s48, %s62
    %p64 = scmp.eq.s32.totalorder %s17, 0
    %p65 = por %p63, %p64
    %s67 = sadd.s32 %s66, 1
    %p70 = scmp.eq.s32.totalorder %s11, 1
    %p71 = scmp.ne.s32.totalorder %s66, %s68
    %p72 = scmp.eq.s32.totalorder %s11, 0
    %p73 = por %p71, %p72
    %p74 = scmp.ne.s32.totalorder %s66, %s68
    %p75 = scmp.eq.s32.totalorder %s16, 1
    %p76 = por %p74, %p75
    %p77 = scmp.ne.s32.totalorder %s68, %s69
    %p78 = scmp.eq.s32.totalorder %s16, 0
    %p79 = por %p77, %p78
    %p80 = scmp.ne.s32.totalorder %s68, %s69
    %p81 = scmp.eq.s32.totalorder %s17, 1
    %p82 = por %p80, %p81
    %p84 = scmp.ne.s32.totalorder %s69, %s83
    %p85 = scmp.eq.s32.totalorder %s17, 0
    %p86 = por %p84, %p85
    %s88 = sadd.s32 %s87, 1
    %p91 = scmp.eq.s32.totalorder %s11, 1
    %p92 = scmp.ne.s32.totalorder %s87, %s89
    %p93 = scmp.eq.s32.totalorder %s11, 0
    %p94 = por %p92, %p93
    %p95 = scmp.ne.s32.totalorder %s87, %s89
    %p96 = scmp.eq.s32.totalorder %s16, 1
    %p97 = por %p95, %p96
    %p98 = scmp.ne.s32.totalorder %s89, %s90
    %p99 = scmp.eq.s32.totalorder %s16, 0
    %p100 = por %p98, %p99
    %p101 = scmp.ne.s32.totalorder %s89, %s90
    %p102 = scmp.eq.s32.totalorder %s17, 1
    %p103 = por %p101, %p102
    %p105 = scmp.ne.s32.totalorder %s90, %s104
    %p106 = scmp.eq.s32.totalorder %s17, 0
    %p107 = por %p105, %p106
    %s109 = sadd.s32 %s108, 1
    %p112 = scmp.eq.s32.totalorder %s11, 1
    %p113 = scmp.ne.s32.totalorder %s108, %s110
    %p114 = scmp.eq.s32.totalorder %s11, 0
    %p115 = por %p113, %p114
    %p116 = scmp.ne.s32.totalorder %s108, %s110
    %p117 = scmp.eq.s32.totalorder %s16, 1
    %p118 = por %p116, %p117
    %p119 = scmp.ne.s32.totalorder %s110, %s111
    %p120 = scmp.eq.s32.totalorder %s16, 0
    %p121 = por %p119, %p120
    %p122 = scmp.ne.s32.totalorder %s110, %s111
    %p123 = scmp.eq.s32.totalorder %s17, 1
    %p124 = por %p122, %p123
    %p126 = scmp.ne.s32.totalorder %s111, %s125
    %p127 = scmp.eq.s32.totalorder %s17, 0
    %p128 = por %p126, %p127
    %s129 = ssub.s32 %s11, %s18
    %p130 = scmp.eq.s32.totalorder %s129, 0
    %s132 = sadd.s32 %s131, 1
    %s133 = scalar_select %p130, %s131, %s132
    %p136 = pneg %p130
    %p137 = scmp.eq.s32.totalorder %s11, 1
    %p138 = por %p136, %p137
    %p139 = scmp.ne.s32.totalorder %s131, %s134
    %p140 = scmp.eq.s32.totalorder %s11, 0
    %p141 = por %p139, %p140
    %p142 = scmp.ne.s32.totalorder %s131, %s134
    %p143 = scmp.eq.s32.totalorder %s16, 1
    %p144 = por %p142, %p143
    %p145 = scmp.ne.s32.totalorder %s134, %s135
    %p146 = scmp.eq.s32.totalorder %s16, 0
    %p147 = por %p145, %p146
    %p148 = scmp.ne.s32.totalorder %s134, %s135
    %p149 = scmp.eq.s32.totalorder %s17, 1
    %p150 = por %p148, %p149
    %p152 = scmp.ne.s32.totalorder %s135, %s151
    %p153 = scmp.eq.s32.totalorder %s17, 0
    %p154 = por %p152, %p153
    %p155 = scmp.le.s32.totalorder 1, %s11
    %p156 = scmp.lt.s32.totalorder %s11, 3
    %p157 = pnand %p155, %p156
    %p158 = pneg %p157
    // Predicated region
    $region9: #{double_conv3d.1} parent=5 // pred_check
      _
    $region10: #{double_conv3d.1} parent=5 // pred_check_branch
      %160 = sbr.rel (%p157) target = $region12
    $region11: #{double_conv3d.1} parent=5 // pred_region
      %s161 = ssub.s32 %s11, 1
      // Predicated region
      $region13: #{double_conv3d.1} parent=11 // pred_check
        %p162 = pneg %p58
      $region14: #{double_conv3d.1} parent=11 // pred_check_branch
        %164 = sbr.rel (%p162) target = $region16
      $region15: #{double_conv3d.1} parent=11 // pred_region
        _
      $region16: #{double_conv3d.1} parent=11 // pred_fallthru
        _
      // Predicated region
      $region17: #{double_conv3d.1} parent=11 // pred_check
        %p165 = pneg %p79
      $region18: #{double_conv3d.1} parent=11 // pred_check_branch
        %167 = sbr.rel (%p165) target = $region20
      $region19: #{double_conv3d.1} parent=11 // pred_region
        _
      $region20: #{double_conv3d.1} parent=11 // pred_fallthru
        _
      // Predicated region
      $region21: #{double_conv3d.1} parent=11 // pred_check
        %p168 = pneg %p100
      $region22: #{double_conv3d.1} parent=11 // pred_check_branch
        %170 = sbr.rel (%p168) target = $region24
      $region23: #{double_conv3d.1} parent=11 // pred_region
        _
      $region24: #{double_conv3d.1} parent=11 // pred_fallthru
        _
      // Predicated region
      $region25: #{double_conv3d.1} parent=11 // pred_check
        %p171 = pneg %p121
      $region26: #{double_conv3d.1} parent=11 // pred_check_branch
        %173 = sbr.rel (%p171) target = $region28
      $region27: #{double_conv3d.1} parent=11 // pred_region
        _
      $region28: #{double_conv3d.1} parent=11 // pred_fallthru
        _
    $region12: #{double_conv3d.1} parent=5 // pred_fallthru
      _
    %p174 = scmp.lt.s32.totalorder %s11, 2
    // Predicated region
    $region29: #{double_conv3d.1} parent=5 // pred_check
      %p175 = pneg %p174
    $region30: #{double_conv3d.1} parent=5 // pred_check_branch
      %177 = sbr.rel (%p175) target = $region32
    $region31: #{double_conv3d.1} parent=5 // pred_region
      // Predicated region
      $region33: #{double_conv3d.1} parent=31 // pred_check
        %p178 = pneg %p31
      $region34: #{double_conv3d.1} parent=31 // pred_check_branch
        %180 = sbr.rel (%p178) target = $region36
      $region35: #{double_conv3d.1} parent=31 // pred_region
        %p181 = scmp.lt.s32.totalorder %s11, 1
        %s182 = scalar_select %p181, %s11, 1
        %s183 = smul.addr %s182, 8
        %s184 = smul.addr %s183, 4
        %s185 = scalar_lea.vmem %s0, %s184
      $region36: #{double_conv3d.1} parent=31 // pred_fallthru
        _
    $region32: #{double_conv3d.1} parent=5 // pred_fallthru
      _
    %p186 = scmp.le.s32.totalorder 1, %s11
    %p187 = scmp.lt.s32.totalorder %s11, 3
    %p188 = pnand %p186, %p187
    %p189 = pneg %p188
    // Predicated region
    $region37: #{double_conv3d.1} parent=5 // pred_check
      _
    $region38: #{double_conv3d.1} parent=5 // pred_check_branch
      %191 = sbr.rel (%p188) target = $region40
    $region39: #{double_conv3d.1} parent=5 // pred_region
      %s192 = ssub.s32 %s11, 1
      %p193 = scmp.lt.s32.totalorder %s16, 1
      %s194 = scalar_select %p193, %s16, 1
      %s195 = smul.addr %s194, 8
      %s196 = smul.addr %s195, 4
      %s197 = scalar_lea.vmem %s0, %s196
      %p198 = pneg %p37
      %p199 = pneg %p34
      %p200 = pneg %p58
      %p201 = pneg %p55
      %p202 = pneg %p79
      %p203 = pneg %p76
      %p204 = pneg %p100
      %p205 = pneg %p97
      %p206 = pneg %p121
      %p207 = pneg %p118
      %p208 = pneg %p147
      %p209 = pneg %p144
      %p210 = scmp.lt.s32.totalorder %s16, 1
      %s211 = scalar_select %p210, %s16, 1
      %s212 = smul.addr %s211, 8
      %s213 = smul.addr %s212, 8
      %s214 = scalar_lea.vmem %s5, %s213
      %p215 = scmp.lt.s32.totalorder %s16, 1
      %s216 = scalar_select %p215, %s16, 1
      %s217 = smul.addr %s216, 8
      %s218 = smul.addr %s217, 4
      %s219 = scalar_lea.vmem %s0, %s218
      %p220 = scmp.lt.s32.totalorder %s16, 1
      %s221 = scalar_select %p220, %s16, 1
      %s222 = smul.addr %s221, 8
      %s223 = smul.addr %s222, 8
      %s224 = scalar_lea.vmem %s5, %s223
      %vm226 = vcmask 257024
      %227 = vst.msk [vmem:[#allocation2] sm:$0xf] %vm226, 0
      %vm228 = vcmask 253952
      %229 = vst.msk [vmem:[#allocation2 + $0x4] sm:$0x1] %vm228, 0
      %230 = vst.msk [vmem:[#allocation2 + $0x8] sm:$0xf] %vm226, 0
      %231 = vst.msk [vmem:[#allocation2 + $0xc] sm:$0x1] %vm228, 0
      %232 = vst.msk [vmem:[#allocation2 + $0x10] sm:$0xf] %vm226, 0
      %233 = vst.msk [vmem:[#allocation2 + $0x14] sm:$0x1] %vm228, 0
      %234 = vst.msk [vmem:[#allocation2 + $0x18] sm:$0xf] %vm226, 0
      %235 = vst.msk [vmem:[#allocation2 + $0x1c] sm:$0x1] %vm228, 0
      %236 = vst.msk [vmem:[#allocation2 + $0x20] sm:$0xf] %vm226, 0
      %237 = vst.msk [vmem:[#allocation2 + $0x24] sm:$0x1] %vm228, 0
      %238 = vst.msk [vmem:[#allocation2 + $0x28] sm:$0xf] %vm226, 0
      %239 = vst.msk [vmem:[#allocation2 + $0x2c] sm:$0x1] %vm228, 0
      %240 = vst.msk [vmem:[#allocation2 + $0x30] sm:$0xf] %vm226, 0
      %241 = vst.msk [vmem:[#allocation2 + $0x34] sm:$0x1] %vm228, 0
      %242 = vst.msk [vmem:[#allocation2 + $0x38] sm:$0xf] %vm226, 0
      %243 = vst.msk [vmem:[#allocation2 + $0x3c] sm:$0x1] %vm228, 0
      %244 = vst.msk [vmem:[#allocation2 + $0x40] sm:$0xf] %vm226, 0
      %245 = vst.msk [vmem:[#allocation2 + $0x44] sm:$0x1] %vm228, 0
      %246 = vst.msk [vmem:[#allocation2 + $0x48] sm:$0xf] %vm226, 0
      %247 = vst.msk [vmem:[#allocation2 + $0x4c] sm:$0x1] %vm228, 0
      %v248 = vld [vmem:[%s219] sm:$0xf]
      %v249 = vld [vmem:[%s219 + $0x4] sm:$0xf]
      %v250 = vld [vmem:[%s219 + $0x8] sm:$0xf]
      %v251 = vld [vmem:[%s219 + $0xc] sm:$0xf]
      %v252 = vld [vmem:[%s219 + $0x10] sm:$0xf]
      %v253 = vld [vmem:[%s219 + $0x14] sm:$0xf]
      %v254 = vld [vmem:[%s219 + $0x18] sm:$0xf]
      %v255 = vld [vmem:[%s219 + $0x1c] sm:$0xf]
      %v257 = vshrl.u32 %v248, 16
      %v259 = vrot.slane %v257, 7
      %v260 = vshll.u32 %v248, 16
      %v262 = vor.u32 %v259, %v260
      %v263 = vrot.slane %v259, 4
      %v265 = vshrl.u32 %v249, 16
      %v267 = vrot.slane %v265, 7
      %v268 = vshll.u32 %v249, 16
      %v270 = vor.u32 %v267, %v268
      %v271 = vrot.slane %v267, 4
      %v273 = vshrl.u32 %v250, 16
      %v275 = vrot.slane %v273, 7
      %v276 = vshll.u32 %v250, 16
      %v278 = vor.u32 %v275, %v276
      %v279 = vrot.slane %v275, 4
      %v281 = vshrl.u32 %v251, 16
      %v283 = vrot.slane %v281, 7
      %v284 = vshll.u32 %v251, 16
      %v286 = vor.u32 %v283, %v284
      %v287 = vrot.slane %v283, 4
      %v289 = vshrl.u32 %v252, 16
      %v291 = vrot.slane %v289, 7
      %v292 = vshll.u32 %v252, 16
      %v294 = vor.u32 %v291, %v292
      %v295 = vrot.slane %v291, 4
      %v297 = vshrl.u32 %v253, 16
      %v299 = vrot.slane %v297, 7
      %v300 = vshll.u32 %v253, 16
      %v302 = vor.u32 %v299, %v300
      %v303 = vrot.slane %v299, 4
      %v305 = vshrl.u32 %v254, 16
      %v307 = vrot.slane %v305, 7
      %v308 = vshll.u32 %v254, 16
      %v310 = vor.u32 %v307, %v308
      %v311 = vrot.slane %v307, 4
      %v313 = vshrl.u32 %v255, 16
      %v315 = vrot.slane %v313, 7
      %v316 = vshll.u32 %v255, 16
      %v318 = vor.u32 %v315, %v316
      %v319 = vrot.slane %v315, 4
      %s336 = scalar_lea.vmem [#allocation2], 8
      %vm337 = vcmask 257024
      %vm338 = vsmask.f32 7938
      %vm339 = vmand %vm337, %vm338
      %v340 = vld [vmem:[%s336] sm:$0xf]
      %v341 = vsel %vm339, %v262, %v340
      %342 = vst [vmem:[%s336] sm:$0xf] %v341
      %vm343 = vcmask 253952
      %vm344 = vsmask.f32 256
      %vm345 = vmand %vm343, %vm344
      %v346 = vld [vmem:[%s336 + $0x4] sm:$0x1]
      %v347 = vsel %vm345, %v263, %v346
      %348 = vst [vmem:[%s336 + $0x4] sm:$0x1] %v347
      %v349 = vld [vmem:[%s336 + $0x8] sm:$0xf]
      %v350 = vsel %vm339, %v270, %v349
      %351 = vst [vmem:[%s336 + $0x8] sm:$0xf] %v350
      %v352 = vld [vmem:[%s336 + $0xc] sm:$0x1]
      %v353 = vsel %vm345, %v271, %v352
      %354 = vst [vmem:[%s336 + $0xc] sm:$0x1] %v353
      %v355 = vld [vmem:[%s336 + $0x10] sm:$0xf]
      %v356 = vsel %vm339, %v278, %v355
      %357 = vst [vmem:[%s336 + $0x10] sm:$0xf] %v356
      %v358 = vld [vmem:[%s336 + $0x14] sm:$0x1]
      %v359 = vsel %vm345, %v279, %v358
      %360 = vst [vmem:[%s336 + $0x14] sm:$0x1] %v359
      %v361 = vld [vmem:[%s336 + $0x18] sm:$0xf]
      %v362 = vsel %vm339, %v286, %v361
      %363 = vst [vmem:[%s336 + $0x18] sm:$0xf] %v362
      %v364 = vld [vmem:[%s336 + $0x1c] sm:$0x1]
      %v365 = vsel %vm345, %v287, %v364
      %366 = vst [vmem:[%s336 + $0x1c] sm:$0x1] %v365
      %v367 = vld [vmem:[%s336 + $0x20] sm:$0xf]
      %v368 = vsel %vm339, %v294, %v367
      %369 = vst [vmem:[%s336 + $0x20] sm:$0xf] %v368
      %v370 = vld [vmem:[%s336 + $0x24] sm:$0x1]
      %v371 = vsel %vm345, %v295, %v370
      %372 = vst [vmem:[%s336 + $0x24] sm:$0x1] %v371
      %v373 = vld [vmem:[%s336 + $0x28] sm:$0xf]
      %v374 = vsel %vm339, %v302, %v373
      %375 = vst [vmem:[%s336 + $0x28] sm:$0xf] %v374
      %v376 = vld [vmem:[%s336 + $0x2c] sm:$0x1]
      %v377 = vsel %vm345, %v303, %v376
      %378 = vst [vmem:[%s336 + $0x2c] sm:$0x1] %v377
      %v379 = vld [vmem:[%s336 + $0x30] sm:$0xf]
      %v380 = vsel %vm339, %v310, %v379
      %381 = vst [vmem:[%s336 + $0x30] sm:$0xf] %v380
      %v382 = vld [vmem:[%s336 + $0x34] sm:$0x1]
      %v383 = vsel %vm345, %v311, %v382
      %384 = vst [vmem:[%s336 + $0x34] sm:$0x1] %v383
      %v385 = vld [vmem:[%s336 + $0x38] sm:$0xf]
      %v386 = vsel %vm339, %v318, %v385
      %387 = vst [vmem:[%s336 + $0x38] sm:$0xf] %v386
      %v388 = vld [vmem:[%s336 + $0x3c] sm:$0x1]
      %v389 = vsel %vm345, %v319, %v388
      %390 = vst [vmem:[%s336 + $0x3c] sm:$0x1] %v389
      %vm391 = vcmask 523264
      %392 = vst.msk [vmem:[#allocation4] sm:$0xff] %vm391, 0.0
      %393 = vst.msk [vmem:[#allocation4 + $0x8] sm:$0xff] %vm391, 0.0
      %394 = vst.msk [vmem:[#allocation4 + $0x10] sm:$0xff] %vm391, 0.0
      %395 = vst.msk [vmem:[#allocation4 + $0x18] sm:$0xff] %vm391, 0.0
      %396 = vst.msk [vmem:[#allocation4 + $0x20] sm:$0xff] %vm391, 0.0
      %397 = vst.msk [vmem:[#allocation4 + $0x28] sm:$0xff] %vm391, 0.0
      %398 = vst.msk [vmem:[#allocation4 + $0x30] sm:$0xff] %vm391, 0.0
      %399 = vst.msk [vmem:[#allocation4 + $0x38] sm:$0xff] %vm391, 0.0
      %v400 = vld [vmem:[#allocation2] sm:$0xf]
      %v401 = vld [vmem:[#allocation2 + $0x8] sm:$0xf]
      %v402 = vld [vmem:[#allocation2 + $0x10] sm:$0xf]
      %v403 = vld [vmem:[#allocation2 + $0x18] sm:$0xf]
      %v404 = vld [vmem:[#allocation2 + $0x20] sm:$0xf]
      %v405 = vld [vmem:[#allocation2 + $0x28] sm:$0xf]
      %v406 = vld [vmem:[#allocation2 + $0x30] sm:$0xf]
      %v407 = vld [vmem:[#allocation2 + $0x38] sm:$0xf]
      %v408 = vld [vmem:[#allocation4] sm:$0xff]
      %v409 = vld [vmem:[#allocation4 + $0x8] sm:$0xff]
      %v410 = vld [vmem:[#allocation4 + $0x10] sm:$0xff]
      %v411 = vld [vmem:[#allocation4 + $0x18] sm:$0xff]
      %v412 = vld [vmem:[#allocation4 + $0x20] sm:$0xff]
      %v413 = vld [vmem:[#allocation4 + $0x28] sm:$0xff]
      %v414 = vld [vmem:[#allocation4 + $0x30] sm:$0xff]
      %v415 = vld [vmem:[#allocation4 + $0x38] sm:$0xff]
      %v416 = vld [vmem:[%s1] sm:$0xf]
      %v417 = vld [vmem:[%s1 + $0x4] sm:$0xf]
      %v418 = vld [vmem:[%s1 + $0x8] sm:$0xf]
      %v419 = vld [vmem:[%s1 + $0xc] sm:$0xf]
      %v428 = vunpack.c.l.b16 %v400
      %v429 = vunpack.c.l.b16 %v401
      %v430 = vunpack.c.l.b16 %v402
      %v431 = vunpack.c.l.b16 %v403
      %v432 = vunpack.c.l.b16 %v404
      %v433 = vunpack.c.l.b16 %v405
      %v434 = vunpack.c.l.b16 %v406
      %v435 = vunpack.c.l.b16 %v407
      %v436 = vpack.c.b16 %v429, %v428
      %v437 = vpack.c.b16 %v431, %v430
      %v438 = vpack.c.b16 %v433, %v432
      %v439 = vpack.c.b16 %v435, %v434
      %v444 = vunpack.c.l.b16 %v416
      %v445 = vunpack.c.l.b16 %v417
      %v446 = vunpack.c.l.b16 %v418
      %v447 = vunpack.c.l.b16 %v419
      %v448 = vpack.c.b16 %v445, %v444
      %v449 = vpack.c.b16 %v447, %v446
      %vm452 = vcmask 261120
      %v454 = vsel %vm452, %v436, 0
      %v457 = vsel %vm452, %v437, 0
      %v460 = vsel %vm452, %v438, 0
      %v463 = vsel %vm452, %v439, 0
      %465 = vmatprep.subr.bf16.mxu0 0
      %466 = vmatpush1.bf16.msra.mxu0 %v448
      %467 = vmatprep.subr.bf16.mxu0 0
      %468 = vmatpush1.bf16.msra.mxu0 %v449
      %469 = vmatprep.subr.bf16.mxu0 0
      %470 = vmatpush1.bf16.msra.mxu0 0
      %471 = vmatprep.subr.bf16.mxu0 0
      %472 = vmatpush1.bf16.msra.mxu0 0
      %473 = vmatprep.subr.bf16.mxu0 0
      %474 = vmatpush1.bf16.msra.mxu0 0
      %475 = vmatprep.subr.bf16.mxu0 0
      %476 = vmatpush1.bf16.msra.mxu0 0
      %477 = vmatprep.subr.bf16.mxu0 0
      %478 = vmatpush1.bf16.msra.mxu0 0
      %479 = vmatprep.subr.bf16.mxu0 0
      %480 = vmatpush1.bf16.msra.mxu0 0
      %481 = vmatprep.subr.bf16.mxu0 0
      %482 = vmatpush1.bf16.msra.mxu0 0
      %483 = vmatprep.subr.bf16.mxu0 0
      %484 = vmatpush1.bf16.msra.mxu0 0
      %485 = vmatprep.subr.bf16.mxu0 0
      %486 = vmatpush1.bf16.msra.mxu0 0
      %487 = vmatprep.subr.bf16.mxu0 0
      %488 = vmatpush1.bf16.msra.mxu0 0
      %489 = vmatprep.subr.bf16.mxu0 0
      %490 = vmatpush1.bf16.msra.mxu0 0
      %491 = vmatprep.subr.bf16.mxu0 0
      %492 = vmatpush1.bf16.msra.mxu0 0
      %493 = vmatprep.subr.bf16.mxu0 0
      %494 = vmatpush1.bf16.msra.mxu0 0
      %495 = vmatprep.subr.bf16.mxu0 0
      %496 = vmatpush1.bf16.msra.mxu0 0
      %497 = vmatprep.mubr.bf16.mxu0 0
      %498 = vmatmul.mubr.bf16.gmra.mrb[0].mxu0 %v454
      %v499 = vpop.f32.mrb[0].mxu0
      %v500 = vadd.f32 0.0, %v499
      %v501 = vpop.f32.mrb[0].mxu0
      %v502 = vpop.f32.mrb[0].mxu0
      %v503 = vadd.f32 0.0, %v502
      %v504 = vpop.f32.mrb[0].mxu0
      %505 = vmatprep.mubr.bf16.mxu0 0
      %506 = vmatmul.mubr.bf16.gmra.mrb[0].mxu0 %v457
      %v507 = vpop.f32.mrb[0].mxu0
      %v508 = vadd.f32 0.0, %v507
      %v509 = vpop.f32.mrb[0].mxu0
      %v510 = vpop.f32.mrb[0].mxu0
      %v511 = vadd.f32 0.0, %v510
      %v512 = vpop.f32.mrb[0].mxu0
      %513 = vmatprep.mubr.bf16.mxu0 0
      %514 = vmatmul.mubr.bf16.gmra.mrb[0].mxu0 %v460
      %v515 = vpop.f32.mrb[0].mxu0
      %v516 = vadd.f32 0.0, %v515
      %v517 = vpop.f32.mrb[0].mxu0
      %v518 = vpop.f32.mrb[0].mxu0
      %v519 = vadd.f32 0.0, %v518
      %v520 = vpop.f32.mrb[0].mxu0
      %521 = vmatprep.mubr.bf16.mxu0 0
      %522 = vmatmul.mubr.bf16.gmra.mrb[0].mxu0 %v463
      %v523 = vpop.f32.mrb[0].mxu0
      %v524 = vadd.f32 0.0, %v523
      %v525 = vpop.f32.mrb[0].mxu0
      %v526 = vpop.f32.mrb[0].mxu0
      %v527 = vadd.f32 0.0, %v526
      %v528 = vpop.f32.mrb[0].mxu0
      %529 = vdwg.mxu0
      %v530 = vadd.f32 %v408, %v500
      %v531 = vadd.f32 %v409, %v503
      %v532 = vadd.f32 %v410, %v508
      %v533 = vadd.f32 %v411, %v511
      %v534 = vadd.f32 %v412, %v516
      %v535 = vadd.f32 %v413, %v519
      %v536 = vadd.f32 %v414, %v524
      %v537 = vadd.f32 %v415, %v527
      %538 = vst.msk [vmem:[#allocation4] sm:$0xff] %vm391, %v530
      %539 = vst.msk [vmem:[#allocation4 + $0x8] sm:$0xff] %vm391, %v531
      %540 = vst.msk [vmem:[#allocation4 + $0x10] sm:$0xff] %vm391, %v532
      %541 = vst.msk [vmem:[#allocation4 + $0x18] sm:$0xff] %vm391, %v533
      %542 = vst.msk [vmem:[#allocation4 + $0x20] sm:$0xff] %vm391, %v534
      %543 = vst.msk [vmem:[#allocation4 + $0x28] sm:$0xff] %vm391, %v535
      %544 = vst.msk [vmem:[#allocation4 + $0x30] sm:$0xff] %vm391, %v536
      %545 = vst.msk [vmem:[#allocation4 + $0x38] sm:$0xff] %vm391, %v537
      %v546 = vld [vmem:[#allocation2] sm:$0xf]
      %v547 = vld [vmem:[#allocation2 + $0x4] sm:$0x1]
      %v548 = vld [vmem:[#allocation2 + $0x8] sm:$0xf]
      %v549 = vld [vmem:[#allocation2 + $0xc] sm:$0x1]
      %v550 = vld [vmem:[#allocation2 + $0x10] sm:$0xf]
      %v551 = vld [vmem:[#allocation2 + $0x14] sm:$0x1]
      %v552 = vld [vmem:[#allocation2 + $0x18] sm:$0xf]
      %v553 = vld [vmem:[#allocation2 + $0x1c] sm:$0x1]
      %v554 = vld [vmem:[#allocation2 + $0x20] sm:$0xf]
      %v555 = vld [vmem:[#allocation2 + $0x24] sm:$0x1]
      %v556 = vld [vmem:[#allocation2 + $0x28] sm:$0xf]
      %v557 = vld [vmem:[#allocation2 + $0x2c] sm:$0x1]
      %v558 = vld [vmem:[#allocation2 + $0x30] sm:$0xf]
      %v559 = vld [vmem:[#allocation2 + $0x34] sm:$0x1]
      %v560 = vld [vmem:[#allocation2 + $0x38] sm:$0xf]
      %v561 = vld [vmem:[#allocation2 + $0x3c] sm:$0x1]
      %vm562 = vsmask.f32 3328
      %vm563 = vsmask.f32 7440
      %vm564 = vmor %vm562, %vm563
      %v566 = vshrl.u32 %v546, 16
      %v568 = vrot.slane %v566, 4
      %v569 = vshll.u32 %v546, 16
      %v571 = vrot.slane %v569, 5
      %v572 = vor.u32 %v568, %v571
      %v573 = vrot.slane %v572, 4
      %v575 = vshll.u32 %v547, 16
      %v577 = vrot.slane %v575, 5
      %v578 = vsel %vm564, %v573, %v577
      %v580 = vshrl.u32 %v548, 16
      %v582 = vrot.slane %v580, 4
      %v583 = vshll.u32 %v548, 16
      %v585 = vrot.slane %v583, 5
      %v586 = vor.u32 %v582, %v585
      %v587 = vrot.slane %v586, 4
      %v589 = vshll.u32 %v549, 16
      %v591 = vrot.slane %v589, 5
      %v592 = vsel %vm564, %v587, %v591
      %v594 = vshrl.u32 %v550, 16
      %v596 = vrot.slane %v594, 4
      %v597 = vshll.u32 %v550, 16
      %v599 = vrot.slane %v597, 5
      %v600 = vor.u32 %v596, %v599
      %v601 = vrot.slane %v600, 4
      %v603 = vshll.u32 %v551, 16
      %v605 = vrot.slane %v603, 5
      %v606 = vsel %vm564, %v601, %v605
      %v608 = vshrl.u32 %v552, 16
      %v610 = vrot.slane %v608, 4
      %v611 = vshll.u32 %v552, 16
      %v613 = vrot.slane %v611, 5
      %v614 = vor.u32 %v610, %v613
      %v615 = vrot.slane %v614, 4
      %v617 = vshll.u32 %v553, 16
      %v619 = vrot.slane %v617, 5
      %v620 = vsel %vm564, %v615, %v619
      %v622 = vshrl.u32 %v554, 16
      %v624 = vrot.slane %v622, 4
      %v625 = vshll.u32 %v554, 16
      %v627 = vrot.slane %v625, 5
      %v628 = vor.u32 %v624, %v627
      %v629 = vrot.slane %v628, 4
      %v631 = vshll.u32 %v555, 16
      %v633 = vrot.slane %v631, 5
      %v634 = vsel %vm564, %v629, %v633
      %v636 = vshrl.u32 %v556, 16
      %v638 = vrot.slane %v636, 4
      %v639 = vshll.u32 %v556, 16
      %v641 = vrot.slane %v639, 5
      %v642 = vor.u32 %v638, %v641
      %v643 = vrot.slane %v642, 4
      %v645 = vshll.u32 %v557, 16
      %v647 = vrot.slane %v645, 5
      %v648 = vsel %vm564, %v643, %v647
      %v650 = vshrl.u32 %v558, 16
      %v652 = vrot.slane %v650, 4
      %v653 = vshll.u32 %v558, 16
      %v655 = vrot.slane %v653, 5
      %v656 = vor.u32 %v652, %v655
      %v657 = vrot.slane %v656, 4
      %v659 = vshll.u32 %v559, 16
      %v661 = vrot.slane %v659, 5
      %v662 = vsel %vm564, %v657, %v661
      %v664 = vshrl.u32 %v560, 16
      %v666 = vrot.slane %v664, 4
      %v667 = vshll.u32 %v560, 16
      %v669 = vrot.slane %v667, 5
      %v670 = vor.u32 %v666, %v669
      %v671 = vrot.slane %v670, 4
      %v673 = vshll.u32 %v561, 16
      %v675 = vrot.slane %v673, 5
      %v676 = vsel %vm564, %v671, %v675
      %v677 = vld [vmem:[#allocation4] sm:$0xff]
      %v678 = vld [vmem:[#allocation4 + $0x8] sm:$0xff]
      %v679 = vld [vmem:[#allocation4 + $0x10] sm:$0xff]
      %v680 = vld [vmem:[#allocation4 + $0x18] sm:$0xff]
      %v681 = vld [vmem:[#allocation4 + $0x20] sm:$0xff]
      %v682 = vld [vmem:[#allocation4 + $0x28] sm:$0xff]
      %v683 = vld [vmem:[#allocation4 + $0x30] sm:$0xff]
      %v684 = vld [vmem:[#allocation4 + $0x38] sm:$0xff]
      %s685 = scalar_lea.vmem %s1, 16
      %v686 = vld [vmem:[%s685] sm:$0xf]
      %v687 = vld [vmem:[%s685 + $0x4] sm:$0xf]
      %v688 = vld [vmem:[%s685 + $0x8] sm:$0xf]
      %v689 = vld [vmem:[%s685 + $0xc] sm:$0xf]
      %v690 = vunpack.c.l.b16 %v578
      %v691 = vunpack.c.l.b16 %v592
      %v692 = vunpack.c.l.b16 %v606
      %v693 = vunpack.c.l.b16 %v620
      %v694 = vunpack.c.l.b16 %v634
      %v695 = vunpack.c.l.b16 %v648
      %v696 = vunpack.c.l.b16 %v662
      %v697 = vunpack.c.l.b16 %v676
      %v698 = vpack.c.b16 %v691, %v690
      %v699 = vpack.c.b16 %v693, %v692
      %v700 = vpack.c.b16 %v695, %v694
      %v701 = vpack.c.b16 %v697, %v696
      %v706 = vunpack.c.l.b16 %v686
      %v707 = vunpack.c.l.b16 %v687
      %v708 = vunpack.c.l.b16 %v688
      %v709 = vunpack.c.l.b16 %v689
      %v710 = vpack.c.b16 %v707, %v706
      %v711 = vpack.c.b16 %v709, %v708
      %v715 = vsel %vm452, %v698, 0
      %v718 = vsel %vm452, %v699, 0
      %v721 = vsel %vm452, %v700, 0
      %v724 = vsel %vm452, %v701, 0
      %726 = vmatprep.subr.bf16.mxu0 0
      %727 = vmatpush1.bf16.msra.mxu0 %v710
      %728 = vmatprep.subr.bf16.mxu0 0
      %729 = vmatpush1.bf16.msra.mxu0 %v711
      %730 = vmatprep.subr.bf16.mxu0 0
      %731 = vmatpush1.bf16.msra.mxu0 0
      %732 = vmatprep.subr.bf16.mxu0 0
      %733 = vmatpush1.bf16.msra.mxu0 0
      %734 = vmatprep.subr.bf16.mxu0 0
      %735 = vmatpush1.bf16.msra.mxu0 0
      %736 = vmatprep.subr.bf16.mxu0 0
      %737 = vmatpush1.bf16.msra.mxu0 0
      %738 = vmatprep.subr.bf16.mxu0 0
      %739 = vmatpush1.bf16.msra.mxu0 0
      %740 = vmatprep.subr.bf16.mxu0 0
      %741 = vmatpush1.bf16.msra.mxu0 0
      %742 = vmatprep.subr.bf16.mxu0 0
      %743 = vmatpush1.bf16.msra.mxu0 0
      %744 = vmatprep.subr.bf16.mxu0 0
      %745 = vmatpush1.bf16.msra.mxu0 0
      %746 = vmatprep.subr.bf16.mxu0 0
      %747 = vmatpush1.bf16.msra.mxu0 0
      %748 = vmatprep.subr.bf16.mxu0 0
      %749 = vmatpush1.bf16.msra.mxu0 0
      %750 = vmatprep.subr.bf16.mxu0 0
      %751 = vmatpush1.bf16.msra.mxu0 0
      %752 = vmatprep.subr.bf16.mxu0 0
      %753 = vmatpush1.bf16.msra.mxu0 0
      %754 = vmatprep.subr.bf16.mxu0 0
      %755 = vmatpush1.bf16.msra.mxu0 0
      %756 = vmatprep.subr.bf16.mxu0 0
      %757 = vmatpush1.bf16.msra.mxu0 0
      %758 = vmatprep.mubr.bf16.mxu0 0
      %759 = vmatmul.mubr.bf16.gmra.mrb[0].mxu0 %v715
      %v760 = vpop.f32.mrb[0].mxu0
      %v761 = vadd.f32 0.0, %v760
      %v762 = vpop.f32.mrb[0].mxu0
      %v763 = vpop.f32.mrb[0].mxu0
      %v764 = vadd.f32 0.0, %v763
      %v765 = vpop.f32.mrb[0].mxu0
      %766 = vmatprep.mubr.bf16.mxu0 0
      %767 = vmatmul.mubr.bf16.gmra.mrb[0].mxu0 %v718
      %v768 = vpop.f32.mrb[0].mxu0
      %v769 = vadd.f32 0.0, %v768
      %v770 = vpop.f32.mrb[0].mxu0
      %v771 = vpop.f32.mrb[0].mxu0
      %v772 = vadd.f32 0.0, %v771
      %v773 = vpop.f32.mrb[0].mxu0
      %774 = vmatprep.mubr.bf16.mxu0 0
      %775 = vmatmul.mubr.bf16.gmra.mrb[0].mxu0 %v721
      %v776 = vpop.f32.mrb[0].mxu0
      %v777 = vadd.f32 0.0, %v776
      %v778 = vpop.f32.mrb[0].mxu0
      %v779 = vpop.f32.mrb[0].mxu0
      %v780 = vadd.f32 0.0, %v779
      %v781 = vpop.f32.mrb[0].mxu0
      %782 = vmatprep.mubr.bf16.mxu0 0
      %783 = vmatmul.mubr.bf16.gmra.mrb[0].mxu0 %v724
      %v784 = vpop.f32.mrb[0].mxu0
      %v785 = vadd.f32 0.0, %v784
      %v786 = vpop.f32.mrb[0].mxu0
      %v787 = vpop.f32.mrb[0].mxu0
      %v788 = vadd.f32 0.0, %v787
      %v789 = vpop.f32.mrb[0].mxu0
      %790 = vdwg.mxu0
      %v791 = vadd.f32 %v677, %v761
      %v792 = vadd.f32 %v678, %v764
      %v793 = vadd.f32 %v679, %v769
      %v794 = vadd.f32 %v680, %v772
      %v795 = vadd.f32 %v681, %v777
      %v796 = vadd.f32 %v682, %v780
      %v797 = vadd.f32 %v683, %v785
      %v798 = vadd.f32 %v684, %v788
      %799 = vst.msk [vmem:[#allocation4] sm:$0xff] %vm391, %v791
      %800 = vst.msk [vmem:[#allocation4 + $0x8] sm:$0xff] %vm391, %v792
      %801 = vst.msk [vmem:[#allocation4 + $0x10] sm:$0xff] %vm391, %v793
      %802 = vst.msk [vmem:[#allocation4 + $0x18] sm:$0xff] %vm391, %v794
      %803 = vst.msk [vmem:[#allocation4 + $0x20] sm:$0xff] %vm391, %v795
      %804 = vst.msk [vmem:[#allocation4 + $0x28] sm:$0xff] %vm391, %v796
      %805 = vst.msk [vmem:[#allocation4 + $0x30] sm:$0xff] %vm391, %v797
      %806 = vst.msk [vmem:[#allocation4 + $0x38] sm:$0xff] %vm391, %v798
      %v807 = vld [vmem:[#allocation2] sm:$0xe]
      %v808 = vld [vmem:[#allocation2 + $0x4] sm:$0x1]
      %v809 = vld [vmem:[#allocation2 + $0x8] sm:$0xe]
      %v810 = vld [vmem:[#allocation2 + $0xc] sm:$0x1]
      %v811 = vld [vmem:[#allocation2 + $0x10] sm:$0xe]
      %v812 = vld [vmem:[#allocation2 + $0x14] sm:$0x1]
      %v813 = vld [vmem:[#allocation2 + $0x18] sm:$0xe]
      %v814 = vld [vmem:[#allocation2 + $0x1c] sm:$0x1]
      %v815 = vld [vmem:[#allocation2 + $0x20] sm:$0xe]
      %v816 = vld [vmem:[#allocation2 + $0x24] sm:$0x1]
      %v817 = vld [vmem:[#allocation2 + $0x28] sm:$0xe]
      %v818 = vld [vmem:[#allocation2 + $0x2c] sm:$0x1]
      %v819 = vld [vmem:[#allocation2 + $0x30] sm:$0xe]
      %v820 = vld [vmem:[#allocation2 + $0x34] sm:$0x1]
      %v821 = vld [vmem:[#allocation2 + $0x38] sm:$0xe]
      %v822 = vld [vmem:[#allocation2 + $0x3c] sm:$0x1]
      %vm839 = vcmask 1042432
      %vm840 = vcmask 1046532
      %vm841 = vmor %vm839, %vm840
      %v842 = vrot.slane %v807, 5
      %v843 = vrot.slane %v842, 4
      %v844 = vrot.slane %v808, 5
      %v845 = vsel %vm841, %v843, %v844
      %v846 = vrot.slane %v809, 5
      %v847 = vrot.slane %v846, 4
      %v848 = vrot.slane %v810, 5
      %v849 = vsel %vm841, %v847, %v848
      %v850 = vrot.slane %v811, 5
      %v851 = vrot.slane %v850, 4
      %v852 = vrot.slane %v812, 5
      %v853 = vsel %vm841, %v851, %v852
      %v854 = vrot.slane %v813, 5
      %v855 = vrot.slane %v854, 4
      %v856 = vrot.slane %v814, 5
      %v857 = vsel %vm841, %v855, %v856
      %v858 = vrot.slane %v815, 5
      %v859 = vrot.slane %v858, 4
      %v860 = vrot.slane %v816, 5
      %v861 = vsel %vm841, %v859, %v860
      %v862 = vrot.slane %v817, 5
      %v863 = vrot.slane %v862, 4
      %v864 = vrot.slane %v818, 5
      %v865 = vsel %vm841, %v863, %v864
      %v866 = vrot.slane %v819, 5
      %v867 = vrot.slane %v866, 4
      %v868 = vrot.slane %v820, 5
      %v869 = vsel %vm841, %v867, %v868
      %v870 = vrot.slane %v821, 5
      %v871 = vrot.slane %v870, 4
      %v872 = vrot.slane %v822, 5
      %v873 = vsel %vm841, %v871, %v872
      %v874 = vld [vmem:[#allocation4] sm:$0xff]
      %v875 = vld [vmem:[#allocation4 + $0x8] sm:$0xff]
      %v876 = vld [vmem:[#allocation4 + $0x10] sm:$0xff]
      %v877 = vld [vmem:[#allocation4 + $0x18] sm:$0xff]
      %v878 = vld [vmem:[#allocation4 + $0x20] sm:$0xff]
      %v879 = vld [vmem:[#allocation4 + $0x28] sm:$0xff]
      %v880 = vld [vmem:[#allocation4 + $0x30] sm:$0xff]
      %v881 = vld [vmem:[#allocation4 + $0x38] sm:$0xff]
      %s882 = scalar_lea.vmem %s1, 32
      %v883 = vld [vmem:[%s882] sm:$0xf]
      %v884 = vld [vmem:[%s882 + $0x4] sm:$0xf]
      %v885 = vld [vmem:[%s882 + $0x8] sm:$0xf]
      %v886 = vld [vmem:[%s882 + $0xc] sm:$0xf]
      %v887 = vunpack.c.l.b16 %v845
      %v888 = vunpack.c.l.b16 %v849
      %v889 = vunpack.c.l.b16 %v853
      %v890 = vunpack.c.l.b16 %v857
      %v891 = vunpack.c.l.b16 %v861
      %v892 = vunpack.c.l.b16 %v865
      %v893 = vunpack.c.l.b16 %v869
      %v894 = vunpack.c.l.b16 %v873
      %v895 = vpack.c.b16 %v888, %v887
      %v896 = vpack.c.b16 %v890, %v889
      %v897 = vpack.c.b16 %v892, %v891
      %v898 = vpack.c.b16 %v894, %v893
      %v903 = vunpack.c.l.b16 %v883
      %v904 = vunpack.c.l.b16 %v884
      %v905 = vunpack.c.l.b16 %v885
      %v906 = vunpack.c.l.b16 %v886
      %v907 = vpack.c.b16 %v904, %v903
      %v908 = vpack.c.b16 %v906, %v905
      %v912 = vsel %vm452, %v895, 0
      %v915 = vsel %vm452, %v896, 0
      %v918 = vsel %vm452, %v897, 0
      %v921 = vsel %vm452, %v898, 0
      %923 = vmatprep.subr.bf16.mxu0 0
      %924 = vmatpush1.bf16.msra.mxu0 %v907
      %925 = vmatprep.subr.bf16.mxu0 0
      %926 = vmatpush1.bf16.msra.mxu0 %v908
      %927 = vmatprep.subr.bf16.mxu0 0
      %928 = vmatpush1.bf16.msra.mxu0 0
      %929 = vmatprep.subr.bf16.mxu0 0
      %930 = vmatpush1.bf16.msra.mxu0 0
      %931 = vmatprep.subr.bf16.mxu0 0
      %932 = vmatpush1.bf16.msra.mxu0 0
      %933 = vmatprep.subr.bf16.mxu0 0
      %934 = vmatpush1.bf16.msra.mxu0 0
      %935 = vmatprep.subr.bf16.mxu0 0
      %936 = vmatpush1.bf16.msra.mxu0 0
      %937 = vmatprep.subr.bf16.mxu0 0
      %938 = vmatpush1.bf16.msra.mxu0 0
      %939 = vmatprep.subr.bf16.mxu0 0
      %940 = vmatpush1.bf16.msra.mxu0 0
      %941 = vmatprep.subr.bf16.mxu0 0
      %942 = vmatpush1.bf16.msra.mxu0 0
      %943 = vmatprep.subr.bf16.mxu0 0
      %944 = vmatpush1.bf16.msra.mxu0 0
      %945 = vmatprep.subr.bf16.mxu0 0
      %946 = vmatpush1.bf16.msra.mxu0 0
      %947 = vmatprep.subr.bf16.mxu0 0
      %948 = vmatpush1.bf16.msra.mxu0 0
      %949 = vmatprep.subr.bf16.mxu0 0
      %950 = vmatpush1.bf16.msra.mxu0 0
      %951 = vmatprep.subr.bf16.mxu0 0
      %952 = vmatpush1.bf16.msra.mxu0 0
      %953 = vmatprep.subr.bf16.mxu0 0
      %954 = vmatpush1.bf16.msra.mxu0 0
      %955 = vmatprep.mubr.bf16.mxu0 0
      %956 = vmatmul.mubr.bf16.gmra.mrb[0].mxu0 %v912
      %v957 = vpop.f32.mrb[0].mxu0
      %v958 = vadd.f32 0.0, %v957
      %v959 = vpop.f32.mrb[0].mxu0
      %v960 = vpop.f32.mrb[0].mxu0
      %v961 = vadd.f32 0.0, %v960
      %v962 = vpop.f32.mrb[0].mxu0
      %963 = vmatprep.mubr.bf16.mxu0 0
      %964 = vmatmul.mubr.bf16.gmra.mrb[0].mxu0 %v915
      %v965 = vpop.f32.mrb[0].mxu0
      %v966 = vadd.f32 0.0, %v965
      %v967 = vpop.f32.mrb[0].mxu0
      %v968 = vpop.f32.mrb[0].mxu0
      %v969 = vadd.f32 0.0, %v968
      %v970 = vpop.f32.mrb[0].mxu0
      %971 = vmatprep.mubr.bf16.mxu0 0
      %972 = vmatmul.mubr.bf16.gmra.mrb[0].mxu0 %v918
      %v973 = vpop.f32.mrb[0].mxu0
      %v974 = vadd.f32 0.0, %v973
      %v975 = vpop.f32.mrb[0].mxu0
      %v976 = vpop.f32.mrb[0].mxu0
      %v977 = vadd.f32 0.0, %v976
      %v978 = vpop.f32.mrb[0].mxu0
      %979 = vmatprep.mubr.bf16.mxu0 0
      %980 = vmatmul.mubr.bf16.gmra.mrb[0].mxu0 %v921
      %v981 = vpop.f32.mrb[0].mxu0
      %v982 = vadd.f32 0.0, %v981
      %v983 = vpop.f32.mrb[0].mxu0
      %v984 = vpop.f32.mrb[0].mxu0
      %v985 = vadd.f32 0.0, %v984
      %v986 = vpop.f32.mrb[0].mxu0
      %987 = vdwg.mxu0
      %v988 = vadd.f32 %v874, %v958
      %v989 = vadd.f32 %v875, %v961
      %v990 = vadd.f32 %v876, %v966
      %v991 = vadd.f32 %v877, %v969
      %v992 = vadd.f32 %v878, %v974
      %v993 = vadd.f32 %v879, %v977
      %v994 = vadd.f32 %v880, %v982
      %v995 = vadd.f32 %v881, %v985
      %996 = vst.msk [vmem:[#allocation4] sm:$0xff] %vm391, %v988
      %997 = vst.msk [vmem:[#allocation4 + $0x8] sm:$0xff] %vm391, %v989
      %998 = vst.msk [vmem:[#allocation4 + $0x10] sm:$0xff] %vm391, %v990
      %999 = vst.msk [vmem:[#allocation4 + $0x18] sm:$0xff] %vm391, %v991
      %1000 = vst.msk [vmem:[#allocation4 + $0x20] sm:$0xff] %vm391, %v992
      %1001 = vst.msk [vmem:[#allocation4 + $0x28] sm:$0xff] %vm391, %v993
      %1002 = vst.msk [vmem:[#allocation4 + $0x30] sm:$0xff] %vm391, %v994
      %1003 = vst.msk [vmem:[#allocation4 + $0x38] sm:$0xff] %vm391, %v995
      %v1004 = vld [vmem:[%s336] sm:$0xf]
      %v1005 = vld [vmem:[%s336 + $0x8] sm:$0xf]
      %v1006 = vld [vmem:[%s336 + $0x10] sm:$0xf]
      %v1007 = vld [vmem:[%s336 + $0x18] sm:$0xf]
      %v1008 = vld [vmem:[%s336 + $0x20] sm:$0xf]
      %v1009 = vld [vmem:[%s336 + $0x28] sm:$0xf]
      %v1010 = vld [vmem:[%s336 + $0x30] sm:$0xf]
      %v1011 = vld [vmem:[%s336 + $0x38] sm:$0xf]
      %v1012 = vld [vmem:[#allocation4] sm:$0xff]
      %v1013 = vld [vmem:[#allocation4 + $0x8] sm:$0xff]
      %v1014 = vld [vmem:[#allocation4 + $0x10] sm:$0xff]
      %v1015 = vld [vmem:[#allocation4 + $0x18] sm:$0xff]
      %v1016 = vld [vmem:[#allocation4 + $0x20] sm:$0xff]
      %v1017 = vld [vmem:[#allocation4 + $0x28] sm:$0xff]
      %v1018 = vld [vmem:[#allocation4 + $0x30] sm:$0xff]
      %v1019 = vld [vmem:[#allocation4 + $0x38] sm:$0xff]
      %s1020 = scalar_lea.vmem %s1, 48
      %v1021 = vld [vmem:[%s1020] sm:$0xf]
      %v1022 = vld [vmem:[%s1020 + $0x4] sm:$0xf]
      %v1023 = vld [vmem:[%s1020 + $0x8] sm:$0xf]
      %v1024 = vld [vmem:[%s1020 + $0xc] sm:$0xf]
      %v1033 = vunpack.c.l.b16 %v1004
      %v1034 = vunpack.c.l.b16 %v1005
      %v1035 = vunpack.c.l.b16 %v1006
      %v1036 = vunpack.c.l.b16 %v1007
      %v1037 = vunpack.c.l.b16 %v1008
      %v1038 = vunpack.c.l.b16 %v1009
      %v1039 = vunpack.c.l.b16 %v1010
      %v1040 = vunpack.c.l.b16 %v1011
      %v1041 = vpack.c.b16 %v1034, %v1033
      %v1042 = vpack.c.b16 %v1036, %v1035
      %v1043 = vpack.c.b16 %v1038, %v1037
      %v1044 = vpack.c.b16 %v1040, %v1039
      %v1049 = vunpack.c.l.b16 %v1021
      %v1050 = vunpack.c.l.b16 %v1022
      %v1051 = vunpack.c.l.b16 %v1023
      %v1052 = vunpack.c.l.b16 %v1024
      %v1053 = vpack.c.b16 %v1050, %v1049
      %v1054 = vpack.c.b16 %v1052, %v1051
      %v1058 = vsel %vm452, %v1041, 0
      %v1061 = vsel %vm452, %v1042, 0
      %v1064 = vsel %vm452, %v1043, 0
      %v1067 = vsel %vm452, %v1044, 0
      %1069 = vmatprep.subr.bf16.mxu0 0
      %1070 = vmatpush1.bf16.msra.mxu0 %v1053
      %1071 = vmatprep.subr.bf16.mxu0 0
      %1072 = vmatpush1.bf16.msra.mxu0 %v1054
      %1073 = vmatprep.subr.bf16.mxu0 0
      %1074 = vmatpush1.bf16.msra.mxu0 0
      %1075 = vmatprep.subr.bf16.mxu0 0
      %1076 = vmatpush1.bf16.msra.mxu0 0
      %1077 = vmatprep.subr.bf16.mxu0 0
      %1078 = vmatpush1.bf16.msra.mxu0 0
      %1079 = vmatprep.subr.bf16.mxu0 0
      %1080 = vmatpush1.bf16.msra.mxu0 0
      %1081 = vmatprep.subr.bf16.mxu0 0
      %1082 = vmatpush1.bf16.msra.mxu0 0
      %1083 = vmatprep.subr.bf16.mxu0 0
      %1084 = vmatpush1.bf16.msra.mxu0 0
      %1085 = vmatprep.subr.bf16.mxu0 0
      %1086 = vmatpush1.bf16.msra.mxu0 0
      %1087 = vmatprep.subr.bf16.mxu0 0
      %1088 = vmatpush1.bf16.msra.mxu0 0
      %1089 = vmatprep.subr.bf16.mxu0 0
      %1090 = vmatpush1.bf16.msra.mxu0 0
      %1091 = vmatprep.subr.bf16.mxu0 0
      %1092 = vmatpush1.bf16.msra.mxu0 0
      %1093 = vmatprep.subr.bf16.mxu0 0
      %1094 = vmatpush1.bf16.msra.mxu0 0
      %1095 = vmatprep.subr.bf16.mxu0 0
      %1096 = vmatpush1.bf16.msra.mxu0 0
      %1097 = vmatprep.subr.bf16.mxu0 0
      %1098 = vmatpush1.bf16.msra.mxu0 0
      %1099 = vmatprep.subr.bf16.mxu0 0
      %1100 = vmatpush1.bf16.msra.mxu0 0
      %1101 = vmatprep.mubr.bf16.mxu0 0
      %1102 = vmatmul.mubr.bf16.gmra.mrb[0].mxu0 %v1058
      %v1103 = vpop.f32.mrb[0].mxu0
      %v1104 = vadd.f32 0.0, %v1103
      %v1105 = vpop.f32.mrb[0].mxu0
      %v1106 = vpop.f32.mrb[0].mxu0
      %v1107 = vadd.f32 0.0, %v1106
      %v1108 = vpop.f32.mrb[0].mxu0
      %1109 = vmatprep.mubr.bf16.mxu0 0
      %1110 = vmatmul.mubr.bf16.gmra.mrb[0].mxu0 %v1061
      %v1111 = vpop.f32.mrb[0].mxu0
      %v1112 = vadd.f32 0.0, %v1111
      %v1113 = vpop.f32.mrb[0].mxu0
      %v1114 = vpop.f32.mrb[0].mxu0
      %v1115 = vadd.f32 0.0, %v1114
      %v1116 = vpop.f32.mrb[0].mxu0
      %1117 = vmatprep.mubr.bf16.mxu0 0
      %1118 = vmatmul.mubr.bf16.gmra.mrb[0].mxu0 %v1064
      %v1119 = vpop.f32.mrb[0].mxu0
      %v1120 = vadd.f32 0.0, %v1119
      %v1121 = vpop.f32.mrb[0].mxu0
      %v1122 = vpop.f32.mrb[0].mxu0
      %v1123 = vadd.f32 0.0, %v1122
      %v1124 = vpop.f32.mrb[0].mxu0
      %1125 = vmatprep.mubr.bf16.mxu0 0
      %1126 = vmatmul.mubr.bf16.gmra.mrb[0].mxu0 %v1067
      %v1127 = vpop.f32.mrb[0].mxu0
      %v1128 = vadd.f32 0.0, %v1127
      %v1129 = vpop.f32.mrb[0].mxu0
      %v1130 = vpop.f32.mrb[0].mxu0
      %v1131 = vadd.f32 0.0, %v1130
      %v1132 = vpop.f32.mrb[0].mxu0
      %1133 = vdwg.mxu0
      %v1134 = vadd.f32 %v1012, %v1104
      %v1135 = vadd.f32 %v1013, %v1107
      %v1136 = vadd.f32 %v1014, %v1112
      %v1137 = vadd.f32 %v1015, %v1115
      %v1138 = vadd.f32 %v1016, %v1120
      %v1139 = vadd.f32 %v1017, %v1123
      %v1140 = vadd.f32 %v1018, %v1128
      %v1141 = vadd.f32 %v1019, %v1131
      %1142 = vst.msk [vmem:[#allocation4] sm:$0xff] %vm391, %v1134
      %1143 = vst.msk [vmem:[#allocation4 + $0x8] sm:$0xff] %vm391, %v1135
      %1144 = vst.msk [vmem:[#allocation4 + $0x10] sm:$0xff] %vm391, %v1136
      %1145 = vst.msk [vmem:[#allocation4 + $0x18] sm:$0xff] %vm391, %v1137
      %1146 = vst.msk [vmem:[#allocation4 + $0x20] sm:$0xff] %vm391, %v1138
      %1147 = vst.msk [vmem:[#allocation4 + $0x28] sm:$0xff] %vm391, %v1139
      %1148 = vst.msk [vmem:[#allocation4 + $0x30] sm:$0xff] %vm391, %v1140
      %1149 = vst.msk [vmem:[#allocation4 + $0x38] sm:$0xff] %vm391, %v1141
      %v1150 = vld [vmem:[%s336] sm:$0xf]
      %v1151 = vld [vmem:[%s336 + $0x4] sm:$0x1]
      %v1152 = vld [vmem:[%s336 + $0x8] sm:$0xf]
      %v1153 = vld [vmem:[%s336 + $0xc] sm:$0x1]
      %v1154 = vld [vmem:[%s336 + $0x10] sm:$0xf]
      %v1155 = vld [vmem:[%s336 + $0x14] sm:$0x1]
      %v1156 = vld [vmem:[%s336 + $0x18] sm:$0xf]
      %v1157 = vld [vmem:[%s336 + $0x1c] sm:$0x1]
      %v1158 = vld [vmem:[%s336 + $0x20] sm:$0xf]
      %v1159 = vld [vmem:[%s336 + $0x24] sm:$0x1]
      %v1160 = vld [vmem:[%s336 + $0x28] sm:$0xf]
      %v1161 = vld [vmem:[%s336 + $0x2c] sm:$0x1]
      %v1162 = vld [vmem:[%s336 + $0x30] sm:$0xf]
      %v1163 = vld [vmem:[%s336 + $0x34] sm:$0x1]
      %v1164 = vld [vmem:[%s336 + $0x38] sm:$0xf]
      %v1165 = vld [vmem:[%s336 + $0x3c] sm:$0x1]
      %v1167 = vshrl.u32 %v1150, 16
      %v1169 = vrot.slane %v1167, 4
      %v1170 = vshll.u32 %v1150, 16
      %v1172 = vrot.slane %v1170, 5
      %v1173 = vor.u32 %v1169, %v1172
      %v1174 = vrot.slane %v1173, 4
      %v1176 = vshll.u32 %v1151, 16
      %v1178 = vrot.slane %v1176, 5
      %v1179 = vsel %vm564, %v1174, %v1178
      %v1181 = vshrl.u32 %v1152, 16
      %v1183 = vrot.slane %v1181, 4
      %v1184 = vshll.u32 %v1152, 16
      %v1186 = vrot.slane %v1184, 5
      %v1187 = vor.u32 %v1183, %v1186
      %v1188 = vrot.slane %v1187, 4
      %v1190 = vshll.u32 %v1153, 16
      %v1192 = vrot.slane %v1190, 5
      %v1193 = vsel %vm564, %v1188, %v1192
      %v1195 = vshrl.u32 %v1154, 16
      %v1197 = vrot.slane %v1195, 4
      %v1198 = vshll.u32 %v1154, 16
      %v1200 = vrot.slane %v1198, 5
      %v1201 = vor.u32 %v1197, %v1200
      %v1202 = vrot.slane %v1201, 4
      %v1204 = vshll.u32 %v1155, 16
      %v1206 = vrot.slane %v1204, 5
      %v1207 = vsel %vm564, %v1202, %v1206
      %v1209 = vshrl.u32 %v1156, 16
      %v1211 = vrot.slane %v1209, 4
      %v1212 = vshll.u32 %v1156, 16
      %v1214 = vrot.slane %v1212, 5
      %v1215 = vor.u32 %v1211, %v1214
      %v1216 = vrot.slane %v1215, 4
      %v1218 = vshll.u32 %v1157, 16
      %v1220 = vrot.slane %v1218, 5
      %v1221 = vsel %vm564, %v1216, %v1220
      %v1223 = vshrl.u32 %v1158, 16
      %v1225 = vrot.slane %v1223, 4
      %v1226 = vshll.u32 %v1158, 16
      %v1228 = vrot.slane %v1226, 5
      %v1229 = vor.u32 %v1225, %v1228
      %v1230 = vrot.slane %v1229, 4
      %v1232 = vshll.u32 %v1159, 16
      %v1234 = vrot.slane %v1232, 5
      %v1235 = vsel %vm564, %v1230, %v1234
      %v1237 = vshrl.u32 %v1160, 16
      %v1239 = vrot.slane %v1237, 4
      %v1240 = vshll.u32 %v1160, 16
      %v1242 = vrot.slane %v1240, 5
      %v1243 = vor.u32 %v1239, %v1242
      %v1244 = vrot.slane %v1243, 4
      %v1246 = vshll.u32 %v1161, 16
      %v1248 = vrot.slane %v1246, 5
      %v1249 = vsel %vm564, %v1244, %v1248
      %v1251 = vshrl.u32 %v1162, 16
      %v1253 = vrot.slane %v1251, 4
      %v1254 = vshll.u32 %v1162, 16
      %v1256 = vrot.slane %v1254, 5
      %v1257 = vor.u32 %v1253, %v1256
      %v1258 = vrot.slane %v1257, 4
      %v1260 = vshll.u32 %v1163, 16
      %v1262 = vrot.slane %v1260, 5
      %v1263 = vsel %vm564, %v1258, %v1262
      %v1265 = vshrl.u32 %v1164, 16
      %v1267 = vrot.slane %v1265, 4
      %v1268 = vshll.u32 %v1164, 16
      %v1270 = vrot.slane %v1268, 5
      %v1271 = vor.u32 %v1267, %v1270
      %v1272 = vrot.slane %v1271, 4
      %v1274 = vshll.u32 %v1165, 16
      %v1276 = vrot.slane %v1274, 5
      %v1277 = vsel %vm564, %v1272, %v1276
      %v1278 = vld [vmem:[#allocation4] sm:$0xff]
      %v1279 = vld [vmem:[#allocation4 + $0x8] sm:$0xff]
      %v1280 = vld [vmem:[#allocation4 + $0x10] sm:$0xff]
      %v1281 = vld [vmem:[#allocation4 + $0x18] sm:$0xff]
      %v1282 = vld [vmem:[#allocation4 + $0x20] sm:$0xff]
      %v1283 = vld [vmem:[#allocation4 + $0x28] sm:$0xff]
      %v1284 = vld [vmem:[#allocation4 + $0x30] sm:$0xff]
      %v1285 = vld [vmem:[#allocation4 + $0x38] sm:$0xff]
      %s1286 = scalar_lea.vmem %s1, 64
      %v1287 = vld [vmem:[%s1286] sm:$0xf]
      %v1288 = vld [vmem:[%s1286 + $0x4] sm:$0xf]
      %v1289 = vld [vmem:[%s1286 + $0x8] sm:$0xf]
      %v1290 = vld [vmem:[%s1286 + $0xc] sm:$0xf]
      %v1291 = vunpack.c.l.b16 %v1179
      %v1292 = vunpack.c.l.b16 %v1193
      %v1293 = vunpack.c.l.b16 %v1207
      %v1294 = vunpack.c.l.b16 %v1221
      %v1295 = vunpack.c.l.b16 %v1235
      %v1296 = vunpack.c.l.b16 %v1249
      %v1297 = vunpack.c.l.b16 %v1263
      %v1298 = vunpack.c.l.b16 %v1277
      %v1299 = vpack.c.b16 %v1292, %v1291
      %v1300 = vpack.c.b16 %v1294, %v1293
      %v1301 = vpack.c.b16 %v1296, %v1295
      %v1302 = vpack.c.b16 %v1298, %v1297
      %v1307 = vunpack.c.l.b16 %v1287
      %v1308 = vunpack.c.l.b16 %v1288
      %v1309 = vunpack.c.l.b16 %v1289
      %v1310 = vunpack.c.l.b16 %v1290
      %v1311 = vpack.c.b16 %v1308, %v1307
      %v1312 = vpack.c.b16 %v1310, %v1309
      %v1316 = vsel %vm452, %v1299, 0
      %v1319 = vsel %vm452, %v1300, 0
      %v1322 = vsel %vm452, %v1301, 0
      %v1325 = vsel %vm452, %v1302, 0
      %1327 = vmatprep.subr.bf16.mxu0 0
      %1328 = vmatpush1.bf16.msra.mxu0 %v1311
      %1329 = vmatprep.subr.bf16.mxu0 0
      %1330 = vmatpush1.bf16.msra.mxu0 %v1312
      %1331 = vmatprep.subr.bf16.mxu0 0
      %1332 = vmatpush1.bf16.msra.mxu0 0
      %1333 = vmatprep.subr.bf16.mxu0 0
      %1334 = vmatpush1.bf16.msra.mxu0 0
      %1335 = vmatprep.subr.bf16.mxu0 0
      %1336 = vmatpush1.bf16.msra.mxu0 0
      %1337 = vmatprep.subr.bf16.mxu0 0
      %1338 = vmatpush1.bf16.msra.mxu0 0
      %1339 = vmatprep.subr.bf16.mxu0 0
      %1340 = vmatpush1.bf16.msra.mxu0 0
      %1341 = vmatprep.subr.bf16.mxu0 0
      %1342 = vmatpush1.bf16.msra.mxu0 0
      %1343 = vmatprep.subr.bf16.mxu0 0
      %1344 = vmatpush1.bf16.msra.mxu0 0
      %1345 = vmatprep.subr.bf16.mxu0 0
      %1346 = vmatpush1.bf16.msra.mxu0 0
      %1347 = vmatprep.subr.bf16.mxu0 0
      %1348 = vmatpush1.bf16.msra.mxu0 0
      %1349 = vmatprep.subr.bf16.mxu0 0
      %1350 = vmatpush1.bf16.msra.mxu0 0
      %1351 = vmatprep.subr.bf16.mxu0 0
      %1352 = vmatpush1.bf16.msra.mxu0 0
      %1353 = vmatprep.subr.bf16.mxu0 0
      %1354 = vmatpush1.bf16.msra.mxu0 0
      %1355 = vmatprep.subr.bf16.mxu0 0
      %1356 = vmatpush1.bf16.msra.mxu0 0
      %1357 = vmatprep.subr.bf16.mxu0 0
      %1358 = vmatpush1.bf16.msra.mxu0 0
      %1359 = vmatprep.mubr.bf16.mxu0 0
      %1360 = vmatmul.mubr.bf16.gmra.mrb[0].mxu0 %v1316
      %v1361 = vpop.f32.mrb[0].mxu0
      %v1362 = vadd.f32 0.0, %v1361
      %v1363 = vpop.f32.mrb[0].mxu0
      %v1364 = vpop.f32.mrb[0].mxu0
      %v1365 = vadd.f32 0.0, %v1364
      %v1366 = vpop.f32.mrb[0].mxu0
      %1367 = vmatprep.mubr.bf16.mxu0 0
      %1368 = vmatmul.mubr.bf16.gmra.mrb[0].mxu0 %v1319
      %v1369 = vpop.f32.mrb[0].mxu0
      %v1370 = vadd.f32 0.0, %v1369
      %v1371 = vpop.f32.mrb[0].mxu0
      %v1372 = vpop.f32.mrb[0].mxu0
      %v1373 = vadd.f32 0.0, %v1372
      %v1374 = vpop.f32.mrb[0].mxu0
      %1375 = vmatprep.mubr.bf16.mxu0 0
      %1376 = vmatmul.mubr.bf16.gmra.mrb[0].mxu0 %v1322
      %v1377 = vpop.f32.mrb[0].mxu0
      %v1378 = vadd.f32 0.0, %v1377
      %v1379 = vpop.f32.mrb[0].mxu0
      %v1380 = vpop.f32.mrb[0].mxu0
      %v1381 = vadd.f32 0.0, %v1380
      %v1382 = vpop.f32.mrb[0].mxu0
      %1383 = vmatprep.mubr.bf16.mxu0 0
      %1384 = vmatmul.mubr.bf16.gmra.mrb[0].mxu0 %v1325
      %v1385 = vpop.f32.mrb[0].mxu0
      %v1386 = vadd.f32 0.0, %v1385
      %v1387 = vpop.f32.mrb[0].mxu0
      %v1388 = vpop.f32.mrb[0].mxu0
      %v1389 = vadd.f32 0.0, %v1388
      %v1390 = vpop.f32.mrb[0].mxu0
      %1391 = vdwg.mxu0
      %v1392 = vadd.f32 %v1278, %v1362
      %v1393 = vadd.f32 %v1279, %v1365
      %v1394 = vadd.f32 %v1280, %v1370
      %v1395 = vadd.f32 %v1281, %v1373
      %v1396 = vadd.f32 %v1282, %v1378
      %v1397 = vadd.f32 %v1283, %v1381
      %v1398 = vadd.f32 %v1284, %v1386
      %v1399 = vadd.f32 %v1285, %v1389
      %1400 = vst.msk [vmem:[#allocation4] sm:$0xff] %vm391, %v1392
      %1401 = vst.msk [vmem:[#allocation4 + $0x8] sm:$0xff] %vm391, %v1393
      %1402 = vst.msk [vmem:[#allocation4 + $0x10] sm:$0xff] %vm391, %v1394
      %1403 = vst.msk [vmem:[#allocation4 + $0x18] sm:$0xff] %vm391, %v1395
      %1404 = vst.msk [vmem:[#allocation4 + $0x20] sm:$0xff] %vm391, %v1396
      %1405 = vst.msk [vmem:[#allocation4 + $0x28] sm:$0xff] %vm391, %v1397
      %1406 = vst.msk [vmem:[#allocation4 + $0x30] sm:$0xff] %vm391, %v1398
      %1407 = vst.msk [vmem:[#allocation4 + $0x38] sm:$0xff] %vm391, %v1399
      %v1408 = vld [vmem:[%s336] sm:$0xe]
      %v1409 = vld [vmem:[%s336 + $0x4] sm:$0x1]
      %v1410 = vld [vmem:[%s336 + $0x8] sm:$0xe]
      %v1411 = vld [vmem:[%s336 + $0xc] sm:$0x1]
      %v1412 = vld [vmem:[%s336 + $0x10] sm:$0xe]
      %v1413 = vld [vmem:[%s336 + $0x14] sm:$0x1]
      %v1414 = vld [vmem:[%s336 + $0x18] sm:$0xe]
      %v1415 = vld [vmem:[%s336 + $0x1c] sm:$0x1]
      %v1416 = vld [vmem:[%s336 + $0x20] sm:$0xe]
      %v1417 = vld [vmem:[%s336 + $0x24] sm:$0x1]
      %v1418 = vld [vmem:[%s336 + $0x28] sm:$0xe]
      %v1419 = vld [vmem:[%s336 + $0x2c] sm:$0x1]
      %v1420 = vld [vmem:[%s336 + $0x30] sm:$0xe]
      %v1421 = vld [vmem:[%s336 + $0x34] sm:$0x1]
      %v1422 = vld [vmem:[%s336 + $0x38] sm:$0xe]
      %v1423 = vld [vmem:[%s336 + $0x3c] sm:$0x1]
      %v1440 = vrot.slane %v1408, 5
      %v1441 = vrot.slane %v1440, 4
      %v1442 = vrot.slane %v1409, 5
      %v1443 = vsel %vm841, %v1441, %v1442
      %v1444 = vrot.slane %v1410, 5
      %v1445 = vrot.slane %v1444, 4
      %v1446 = vrot.slane %v1411, 5
      %v1447 = vsel %vm841, %v1445, %v1446
      %v1448 = vrot.slane %v1412, 5
      %v1449 = vrot.slane %v1448, 4
      %v1450 = vrot.slane %v1413, 5
      %v1451 = vsel %vm841, %v1449, %v1450
      %v1452 = vrot.slane %v1414, 5
      %v1453 = vrot.slane %v1452, 4
      %v1454 = vrot.slane %v1415, 5
      %v1455 = vsel %vm841, %v1453, %v1454
      %v1456 = vrot.slane %v1416, 5
      %v1457 = vrot.slane %v1456, 4
      %v1458 = vrot.slane %v1417, 5
      %v1459 = vsel %vm841, %v1457, %v1458
      %v1460 = vrot.slane %v1418, 5
      %v1461 = vrot.slane %v1460, 4
      %v1462 = vrot.slane %v1419, 5
      %v1463 = vsel %vm841, %v1461, %v1462
      %v1464 = vrot.slane %v1420, 5
      %v1465 = vrot.slane %v1464, 4
      %v1466 = vrot.slane %v1421, 5
      %v1467 = vsel %vm841, %v1465, %v1466
      %v1468 = vrot.slane %v1422, 5
      %v1469 = vrot.slane %v1468, 4
      %v1470 = vrot.slane %v1423, 5
      %v1471 = vsel %vm841, %v1469, %v1470
      %v1472 = vld [vmem:[#allocation4] sm:$0xff]
      %v1473 = vld [vmem:[#allocation4 + $0x8] sm:$0xff]
      %v1474 = vld [vmem:[#allocation4 + $0x10] sm:$0xff]
      %v1475 = vld [vmem:[#allocation4 + $0x18] sm:$0xff]
      %v1476 = vld [vmem:[#allocation4 + $0x20] sm:$0xff]
      %v1477 = vld [vmem:[#allocation4 + $0x28] sm:$0xff]
      %v1478 = vld [vmem:[#allocation4 + $0x30] sm:$0xff]
      %v1479 = vld [vmem:[#allocation4 + $0x38] sm:$0xff]
      %s1480 = scalar_lea.vmem %s1, 80
      %v1481 = vld [vmem:[%s1480] sm:$0xf]
      %v1482 = vld [vmem:[%s1480 + $0x4] sm:$0xf]
      %v1483 = vld [vmem:[%s1480 + $0x8] sm:$0xf]
      %v1484 = vld [vmem:[%s1480 + $0xc] sm:$0xf]
      %v1485 = vunpack.c.l.b16 %v1443
      %v1486 = vunpack.c.l.b16 %v1447
      %v1487 = vunpack.c.l.b16 %v1451
      %v1488 = vunpack.c.l.b16 %v1455
      %v1489 = vunpack.c.l.b16 %v1459
      %v1490 = vunpack.c.l.b16 %v1463
      %v1491 = vunpack.c.l.b16 %v1467
      %v1492 = vunpack.c.l.b16 %v1471
      %v1493 = vpack.c.b16 %v1486, %v1485
      %v1494 = vpack.c.b16 %v1488, %v1487
      %v1495 = vpack.c.b16 %v1490, %v1489
      %v1496 = vpack.c.b16 %v1492, %v1491
      %v1501 = vunpack.c.l.b16 %v1481
      %v1502 = vunpack.c.l.b16 %v1482
      %v1503 = vunpack.c.l.b16 %v1483
      %v1504 = vunpack.c.l.b16 %v1484
      %v1505 = vpack.c.b16 %v1502, %v1501
      %v1506 = vpack.c.b16 %v1504, %v1503
      %v1510 = vsel %vm452, %v1493, 0
      %v1513 = vsel %vm452, %v1494, 0
      %v1516 = vsel %vm452, %v1495, 0
      %v1519 = vsel %vm452, %v1496, 0
      %1521 = vmatprep.subr.bf16.mxu0 0
      %1522 = vmatpush1.bf16.msra.mxu0 %v1505
      %1523 = vmatprep.subr.bf16.mxu0 0
      %1524 = vmatpush1.bf16.msra.mxu0 %v1506
      %1525 = vmatprep.subr.bf16.mxu0 0
      %1526 = vmatpush1.bf16.msra.mxu0 0
      %1527 = vmatprep.subr.bf16.mxu0 0
      %1528 = vmatpush1.bf16.msra.mxu0 0
      %1529 = vmatprep.subr.bf16.mxu0 0
      %1530 = vmatpush1.bf16.msra.mxu0 0
      %1531 = vmatprep.subr.bf16.mxu0 0
      %1532 = vmatpush1.bf16.msra.mxu0 0
      %1533 = vmatprep.subr.bf16.mxu0 0
      %1534 = vmatpush1.bf16.msra.mxu0 0
      %1535 = vmatprep.subr.bf16.mxu0 0
      %1536 = vmatpush1.bf16.msra.mxu0 0
      %1537 = vmatprep.subr.bf16.mxu0 0
      %1538 = vmatpush1.bf16.msra.mxu0 0
      %1539 = vmatprep.subr.bf16.mxu0 0
      %1540 = vmatpush1.bf16.msra.mxu0 0
      %1541 = vmatprep.subr.bf16.mxu0 0
      %1542 = vmatpush1.bf16.msra.mxu0 0
      %1543 = vmatprep.subr.bf16.mxu0 0
      %1544 = vmatpush1.bf16.msra.mxu0 0
      %1545 = vmatprep.subr.bf16.mxu0 0
      %1546 = vmatpush1.bf16.msra.mxu0 0
      %1547 = vmatprep.subr.bf16.mxu0 0
      %1548 = vmatpush1.bf16.msra.mxu0 0
      %1549 = vmatprep.subr.bf16.mxu0 0
      %1550 = vmatpush1.bf16.msra.mxu0 0
      %1551 = vmatprep.subr.bf16.mxu0 0
      %1552 = vmatpush1.bf16.msra.mxu0 0
      %1553 = vmatprep.mubr.bf16.mxu0 0
      %1554 = vmatmul.mubr.bf16.gmra.mrb[0].mxu0 %v1510
      %v1555 = vpop.f32.mrb[0].mxu0
      %v1556 = vadd.f32 0.0, %v1555
      %v1557 = vpop.f32.mrb[0].mxu0
      %v1558 = vpop.f32.mrb[0].mxu0
      %v1559 = vadd.f32 0.0, %v1558
      %v1560 = vpop.f32.mrb[0].mxu0
      %1561 = vmatprep.mubr.bf16.mxu0 0
      %1562 = vmatmul.mubr.bf16.gmra.mrb[0].mxu0 %v1513
      %v1563 = vpop.f32.mrb[0].mxu0
      %v1564 = vadd.f32 0.0, %v1563
      %v1565 = vpop.f32.mrb[0].mxu0
      %v1566 = vpop.f32.mrb[0].mxu0
      %v1567 = vadd.f32 0.0, %v1566
      %v1568 = vpop.f32.mrb[0].mxu0
      %1569 = vmatprep.mubr.bf16.mxu0 0
      %1570 = vmatmul.mubr.bf16.gmra.mrb[0].mxu0 %v1516
      %v1571 = vpop.f32.mrb[0].mxu0
      %v1572 = vadd.f32 0.0, %v1571
      %v1573 = vpop.f32.mrb[0].mxu0
      %v1574 = vpop.f32.mrb[0].mxu0
      %v1575 = vadd.f32 0.0, %v1574
      %v1576 = vpop.f32.mrb[0].mxu0
      %1577 = vmatprep.mubr.bf16.mxu0 0
      %1578 = vmatmul.mubr.bf16.gmra.mrb[0].mxu0 %v1519
      %v1579 = vpop.f32.mrb[0].mxu0
      %v1580 = vadd.f32 0.0, %v1579
      %v1581 = vpop.f32.mrb[0].mxu0
      %v1582 = vpop.f32.mrb[0].mxu0
      %v1583 = vadd.f32 0.0, %v1582
      %v1584 = vpop.f32.mrb[0].mxu0
      %1585 = vdwg.mxu0
      %v1586 = vadd.f32 %v1472, %v1556
      %v1587 = vadd.f32 %v1473, %v1559
      %v1588 = vadd.f32 %v1474, %v1564
      %v1589 = vadd.f32 %v1475, %v1567
      %v1590 = vadd.f32 %v1476, %v1572
      %v1591 = vadd.f32 %v1477, %v1575
      %v1592 = vadd.f32 %v1478, %v1580
      %v1593 = vadd.f32 %v1479, %v1583
      %1594 = vst.msk [vmem:[#allocation4] sm:$0xff] %vm391, %v1586
      %1595 = vst.msk [vmem:[#allocation4 + $0x8] sm:$0xff] %vm391, %v1587
      %1596 = vst.msk [vmem:[#allocation4 + $0x10] sm:$0xff] %vm391, %v1588
      %1597 = vst.msk [vmem:[#allocation4 + $0x18] sm:$0xff] %vm391, %v1589
      %1598 = vst.msk [vmem:[#allocation4 + $0x20] sm:$0xff] %vm391, %v1590
      %1599 = vst.msk [vmem:[#allocation4 + $0x28] sm:$0xff] %vm391, %v1591
      %1600 = vst.msk [vmem:[#allocation4 + $0x30] sm:$0xff] %vm391, %v1592
      %1601 = vst.msk [vmem:[#allocation4 + $0x38] sm:$0xff] %vm391, %v1593
      %s1602 = scalar_lea.vmem [#allocation2], 16
      %v1603 = vld [vmem:[%s1602] sm:$0xf]
      %v1604 = vld [vmem:[%s1602 + $0x8] sm:$0xf]
      %v1605 = vld [vmem:[%s1602 + $0x10] sm:$0xf]
      %v1606 = vld [vmem:[%s1602 + $0x18] sm:$0xf]
      %v1607 = vld [vmem:[%s1602 + $0x20] sm:$0xf]
      %v1608 = vld [vmem:[%s1602 + $0x28] sm:$0xf]
      %v1609 = vld [vmem:[%s1602 + $0x30] sm:$0xf]
      %v1610 = vld [vmem:[%s1602 + $0x38] sm:$0xf]
      %v1611 = vld [vmem:[#allocation4] sm:$0xff]
      %v1612 = vld [vmem:[#allocation4 + $0x8] sm:$0xff]
      %v1613 = vld [vmem:[#allocation4 + $0x10] sm:$0xff]
      %v1614 = vld [vmem:[#allocation4 + $0x18] sm:$0xff]
      %v1615 = vld [vmem:[#allocation4 + $0x20] sm:$0xff]
      %v1616 = vld [vmem:[#allocation4 + $0x28] sm:$0xff]
      %v1617 = vld [vmem:[#allocation4 + $0x30] sm:$0xff]
      %v1618 = vld [vmem:[#allocation4 + $0x38] sm:$0xff]
      %s1619 = scalar_lea.vmem %s1, 96
      %v1620 = vld [vmem:[%s1619] sm:$0xf]
      %v1621 = vld [vmem:[%s1619 + $0x4] sm:$0xf]
      %v1622 = vld [vmem:[%s1619 + $0x8] sm:$0xf]
      %v1623 = vld [vmem:[%s1619 + $0xc] sm:$0xf]
      %v1632 = vunpack.c.l.b16 %v1603
      %v1633 = vunpack.c.l.b16 %v1604
      %v1634 = vunpack.c.l.b16 %v1605
      %v1635 = vunpack.c.l.b16 %v1606
      %v1636 = vunpack.c.l.b16 %v1607
      %v1637 = vunpack.c.l.b16 %v1608
      %v1638 = vunpack.c.l.b16 %v1609
      %v1639 = vunpack.c.l.b16 %v1610
      %v1640 = vpack.c.b16 %v1633, %v1632
      %v1641 = vpack.c.b16 %v1635, %v1634
      %v1642 = vpack.c.b16 %v1637, %v1636
      %v1643 = vpack.c.b16 %v1639, %v1638
      %v1648 = vunpack.c.l.b16 %v1620
      %v1649 = vunpack.c.l.b16 %v1621
      %v1650 = vunpack.c.l.b16 %v1622
      %v1651 = vunpack.c.l.b16 %v1623
      %v1652 = vpack.c.b16 %v1649, %v1648
      %v1653 = vpack.c.b16 %v1651, %v1650
      %v1657 = vsel %vm452, %v1640, 0
      %v1660 = vsel %vm452, %v1641, 0
      %v1663 = vsel %vm452, %v1642, 0
      %v1666 = vsel %vm452, %v1643, 0
      %1668 = vmatprep.subr.bf16.mxu0 0
      %1669 = vmatpush1.bf16.msra.mxu0 %v1652
      %1670 = vmatprep.subr.bf16.mxu0 0
      %1671 = vmatpush1.bf16.msra.mxu0 %v1653
      %1672 = vmatprep.subr.bf16.mxu0 0
      %1673 = vmatpush1.bf16.msra.mxu0 0
      %1674 = vmatprep.subr.bf16.mxu0 0
      %1675 = vmatpush1.bf16.msra.mxu0 0
      %1676 = vmatprep.subr.bf16.mxu0 0
      %1677 = vmatpush1.bf16.msra.mxu0 0
      %1678 = vmatprep.subr.bf16.mxu0 0
      %1679 = vmatpush1.bf16.msra.mxu0 0
      %1680 = vmatprep.subr.bf16.mxu0 0
      %1681 = vmatpush1.bf16.msra.mxu0 0
      %1682 = vmatprep.subr.bf16.mxu0 0
      %1683 = vmatpush1.bf16.msra.mxu0 0
      %1684 = vmatprep.subr.bf16.mxu0 0
      %1685 = vmatpush1.bf16.msra.mxu0 0
      %1686 = vmatprep.subr.bf16.mxu0 0
      %1687 = vmatpush1.bf16.msra.mxu0 0
      %1688 = vmatprep.subr.bf16.mxu0 0
      %1689 = vmatpush1.bf16.msra.mxu0 0
      %1690 = vmatprep.subr.bf16.mxu0 0
      %1691 = vmatpush1.bf16.msra.mxu0 0
      %1692 = vmatprep.subr.bf16.mxu0 0
      %1693 = vmatpush1.bf16.msra.mxu0 0
      %1694 = vmatprep.subr.bf16.mxu0 0
      %1695 = vmatpush1.bf16.msra.mxu0 0
      %1696 = vmatprep.subr.bf16.mxu0 0
      %1697 = vmatpush1.bf16.msra.mxu0 0
      %1698 = vmatprep.subr.bf16.mxu0 0
      %1699 = vmatpush1.bf16.msra.mxu0 0
      %1700 = vmatprep.mubr.bf16.mxu0 0
      %1701 = vmatmul.mubr.bf16.gmra.mrb[0].mxu0 %v1657
      %v1702 = vpop.f32.mrb[0].mxu0
      %v1703 = vadd.f32 0.0, %v1702
      %v1704 = vpop.f32.mrb[0].mxu0
      %v1705 = vpop.f32.mrb[0].mxu0
      %v1706 = vadd.f32 0.0, %v1705
      %v1707 = vpop.f32.mrb[0].mxu0
      %1708 = vmatprep.mubr.bf16.mxu0 0
      %1709 = vmatmul.mubr.bf16.gmra.mrb[0].mxu0 %v1660
      %v1710 = vpop.f32.mrb[0].mxu0
      %v1711 = vadd.f32 0.0, %v1710
      %v1712 = vpop.f32.mrb[0].mxu0
      %v1713 = vpop.f32.mrb[0].mxu0
      %v1714 = vadd.f32 0.0, %v1713
      %v1715 = vpop.f32.mrb[0].mxu0
      %1716 = vmatprep.mubr.bf16.mxu0 0
      %1717 = vmatmul.mubr.bf16.gmra.mrb[0].mxu0 %v1663
      %v1718 = vpop.f32.mrb[0].mxu0
      %v1719 = vadd.f32 0.0, %v1718
      %v1720 = vpop.f32.mrb[0].mxu0
      %v1721 = vpop.f32.mrb[0].mxu0
      %v1722 = vadd.f32 0.0, %v1721
      %v1723 = vpop.f32.mrb[0].mxu0
      %1724 = vmatprep.mubr.bf16.mxu0 0
      %1725 = vmatmul.mubr.bf16.gmra.mrb[0].mxu0 %v1666
      %v1726 = vpop.f32.mrb[0].mxu0
      %v1727 = vadd.f32 0.0, %v1726
      %v1728 = vpop.f32.mrb[0].mxu0
      %v1729 = vpop.f32.mrb[0].mxu0
      %v1730 = vadd.f32 0.0, %v1729
      %v1731 = vpop.f32.mrb[0].mxu0
      %1732 = vdwg.mxu0
      %v1733 = vadd.f32 %v1611, %v1703
      %v1734 = vadd.f32 %v1612, %v1706
      %v1735 = vadd.f32 %v1613, %v1711
      %v1736 = vadd.f32 %v1614, %v1714
      %v1737 = vadd.f32 %v1615, %v1719
      %v1738 = vadd.f32 %v1616, %v1722
      %v1739 = vadd.f32 %v1617, %v1727
      %v1740 = vadd.f32 %v1618, %v1730
      %1741 = vst.msk [vmem:[#allocation4] sm:$0xff] %vm391, %v1733
      %1742 = vst.msk [vmem:[#allocation4 + $0x8] sm:$0xff] %vm391, %v1734
      %1743 = vst.msk [vmem:[#allocation4 + $0x10] sm:$0xff] %vm391, %v1735
      %1744 = vst.msk [vmem:[#allocation4 + $0x18] sm:$0xff] %vm391, %v1736
      %1745 = vst.msk [vmem:[#allocation4 + $0x20] sm:$0xff] %vm391, %v1737
      %1746 = vst.msk [vmem:[#allocation4 + $0x28] sm:$0xff] %vm391, %v1738
      %1747 = vst.msk [vmem:[#allocation4 + $0x30] sm:$0xff] %vm391, %v1739
      %1748 = vst.msk [vmem:[#allocation4 + $0x38] sm:$0xff] %vm391, %v1740
      %v1749 = vld [vmem:[%s1602] sm:$0xf]
      %v1750 = vld [vmem:[%s1602 + $0x4] sm:$0x1]
      %v1751 = vld [vmem:[%s1602 + $0x8] sm:$0xf]
      %v1752 = vld [vmem:[%s1602 + $0xc] sm:$0x1]
      %v1753 = vld [vmem:[%s1602 + $0x10] sm:$0xf]
      %v1754 = vld [vmem:[%s1602 + $0x14] sm:$0x1]
      %v1755 = vld [vmem:[%s1602 + $0x18] sm:$0xf]
      %v1756 = vld [vmem:[%s1602 + $0x1c] sm:$0x1]
      %v1757 = vld [vmem:[%s1602 + $0x20] sm:$0xf]
      %v1758 = vld [vmem:[%s1602 + $0x24] sm:$0x1]
      %v1759 = vld [vmem:[%s1602 + $0x28] sm:$0xf]
      %v1760 = vld [vmem:[%s1602 + $0x2c] sm:$0x1]
      %v1761 = vld [vmem:[%s1602 + $0x30] sm:$0xf]
      %v1762 = vld [vmem:[%s1602 + $0x34] sm:$0x1]
      %v1763 = vld [vmem:[%s1602 + $0x38] sm:$0xf]
      %v1764 = vld [vmem:[%s1602 + $0x3c] sm:$0x1]
      %v1766 = vshrl.u32 %v1749, 16
      %v1768 = vrot.slane %v1766, 4
      %v1769 = vshll.u32 %v1749, 16
      %v1771 = vrot.slane %v1769, 5
      %v1772 = vor.u32 %v1768, %v1771
      %v1773 = vrot.slane %v1772, 4
      %v1775 = vshll.u32 %v1750, 16
      %v1777 = vrot.slane %v1775, 5
      %v1778 = vsel %vm564, %v1773, %v1777
      %v1780 = vshrl.u32 %v1751, 16
      %v1782 = vrot.slane %v1780, 4
      %v1783 = vshll.u32 %v1751, 16
      %v1785 = vrot.slane %v1783, 5
      %v1786 = vor.u32 %v1782, %v1785
      %v1787 = vrot.slane %v1786, 4
      %v1789 = vshll.u32 %v1752, 16
      %v1791 = vrot.slane %v1789, 5
      %v1792 = vsel %vm564, %v1787, %v1791
      %v1794 = vshrl.u32 %v1753, 16
      %v1796 = vrot.slane %v1794, 4
      %v1797 = vshll.u32 %v1753, 16
      %v1799 = vrot.slane %v1797, 5
      %v1800 = vor.u32 %v1796, %v1799
      %v1801 = vrot.slane %v1800, 4
      %v1803 = vshll.u32 %v1754, 16
      %v1805 = vrot.slane %v1803, 5
      %v1806 = vsel %vm564, %v1801, %v1805
      %v1808 = vshrl.u32 %v1755, 16
      %v1810 = vrot.slane %v1808, 4
      %v1811 = vshll.u32 %v1755, 16
      %v1813 = vrot.slane %v1811, 5
      %v1814 = vor.u32 %v1810, %v1813
      %v1815 = vrot.slane %v1814, 4
      %v1817 = vshll.u32 %v1756, 16
      %v1819 = vrot.slane %v1817, 5
      %v1820 = vsel %vm564, %v1815, %v1819
      %v1822 = vshrl.u32 %v1757, 16
      %v1824 = vrot.slane %v1822, 4
      %v1825 = vshll.u32 %v1757, 16
      %v1827 = vrot.slane %v1825, 5
      %v1828 = vor.u32 %v1824, %v1827
      %v1829 = vrot.slane %v1828, 4
      %v1831 = vshll.u32 %v1758, 16
      %v1833 = vrot.slane %v1831, 5
      %v1834 = vsel %vm564, %v1829, %v1833
      %v1836 = vshrl.u32 %v1759, 16
      %v1838 = vrot.slane %v1836, 4
      %v1839 = vshll.u32 %v1759, 16
      %v1841 = vrot.slane %v1839, 5
      %v1842 = vor.u32 %v1838, %v1841
      %v1843 = vrot.slane %v1842, 4
      %v1845 = vshll.u32 %v1760, 16
      %v1847 = vrot.slane %v1845, 5
      %v1848 = vsel %vm564, %v1843, %v1847
      %v1850 = vshrl.u32 %v1761, 16
      %v1852 = vrot.slane %v1850, 4
      %v1853 = vshll.u32 %v1761, 16
      %v1855 = vrot.slane %v1853, 5
      %v1856 = vor.u32 %v1852, %v1855
      %v1857 = vrot.slane %v1856, 4
      %v1859 = vshll.u32 %v1762, 16
      %v1861 = vrot.slane %v1859, 5
      %v1862 = vsel %vm564, %v1857, %v1861
      %v1864 = vshrl.u32 %v1763, 16
      %v1866 = vrot.slane %v1864, 4
      %v1867 = vshll.u32 %v1763, 16
      %v1869 = vrot.slane %v1867, 5
      %v1870 = vor.u32 %v1866, %v1869
      %v1871 = vrot.slane %v1870, 4
      %v1873 = vshll.u32 %v1764, 16
      %v1875 = vrot.slane %v1873, 5
      %v1876 = vsel %vm564, %v1871, %v1875
      %v1877 = vld [vmem:[#allocation4] sm:$0xff]
      %v1878 = vld [vmem:[#allocation4 + $0x8] sm:$0xff]
      %v1879 = vld [vmem:[#allocation4 + $0x10] sm:$0xff]
      %v1880 = vld [vmem:[#allocation4 + $0x18] sm:$0xff]
      %v1881 = vld [vmem:[#allocation4 + $0x20] sm:$0xff]
      %v1882 = vld [vmem:[#allocation4 + $0x28] sm:$0xff]
      %v1883 = vld [vmem:[#allocation4 + $0x30] sm:$0xff]
      %v1884 = vld [vmem:[#allocation4 + $0x38] sm:$0xff]
      %s1885 = scalar_lea.vmem %s1, 112
      %v1886 = vld [vmem:[%s1885] sm:$0xf]
      %v1887 = vld [vmem:[%s1885 + $0x4] sm:$0xf]
      %v1888 = vld [vmem:[%s1885 + $0x8] sm:$0xf]
      %v1889 = vld [vmem:[%s1885 + $0xc] sm:$0xf]
      %v1890 = vunpack.c.l.b16 %v1778
      %v1891 = vunpack.c.l.b16 %v1792
      %v1892 = vunpack.c.l.b16 %v1806
      %v1893 = vunpack.c.l.b16 %v1820
      %v1894 = vunpack.c.l.b16 %v1834
      %v1895 = vunpack.c.l.b16 %v1848
      %v1896 = vunpack.c.l.b16 %v1862
      %v1897 = vunpack.c.l.b16 %v1876
      %v1898 = vpack.c.b16 %v1891, %v1890
      %v1899 = vpack.c.b16 %v1893, %v1892
      %v1900 = vpack.c.b16 %v1895, %v1894
      %v1901 = vpack.c.b16 %v1897, %v1896
      %v1906 = vunpack.c.l.b16 %v1886
      %v1907 = vunpack.c.l.b16 %v1887
      %v1908 = vunpack.c.l.b16 %v1888
      %v1909 = vunpack.c.l.b16 %v1889
      %v1910 = vpack.c.b16 %v1907, %v1906
      %v1911 = vpack.c.b16 %v1909, %v1908
      %v1915 = vsel %vm452, %v1898, 0
      %v1918 = vsel %vm452, %v1899, 0
      %v1921 = vsel %vm452, %v1900, 0
      %v1924 = vsel %vm452, %v1901, 0
      %1926 = vmatprep.subr.bf16.mxu0 0
      %1927 = vmatpush1.bf16.msra.mxu0 %v1910
      %1928 = vmatprep.subr.bf16.mxu0 0
      %1929 = vmatpush1.bf16.msra.mxu0 %v1911
      %1930 = vmatprep.subr.bf16.mxu0 0
      %1931 = vmatpush1.bf16.msra.mxu0 0
      %1932 = vmatprep.subr.bf16.mxu0 0
      %1933 = vmatpush1.bf16.msra.mxu0 0
      %1934 = vmatprep.subr.bf16.mxu0 0
      %1935 = vmatpush1.bf16.msra.mxu0 0
      %1936 = vmatprep.subr.bf16.mxu0 0
      %1937 = vmatpush1.bf16.msra.mxu0 0
      %1938 = vmatprep.subr.bf16.mxu0 0
      %1939 = vmatpush1.bf16.msra.mxu0 0
      %1940 = vmatprep.subr.bf16.mxu0 0
      %1941 = vmatpush1.bf16.msra.mxu0 0
      %1942 = vmatprep.subr.bf16.mxu0 0
      %1943 = vmatpush1.bf16.msra.mxu0 0
      %1944 = vmatprep.subr.bf16.mxu0 0
      %1945 = vmatpush1.bf16.msra.mxu0 0
      %1946 = vmatprep.subr.bf16.mxu0 0
      %1947 = vmatpush1.bf16.msra.mxu0 0
      %1948 = vmatprep.subr.bf16.mxu0 0
      %1949 = vmatpush1.bf16.msra.mxu0 0
      %1950 = vmatprep.subr.bf16.mxu0 0
      %1951 = vmatpush1.bf16.msra.mxu0 0
      %1952 = vmatprep.subr.bf16.mxu0 0
      %1953 = vmatpush1.bf16.msra.mxu0 0
      %1954 = vmatprep.subr.bf16.mxu0 0
      %1955 = vmatpush1.bf16.msra.mxu0 0
      %1956 = vmatprep.subr.bf16.mxu0 0
      %1957 = vmatpush1.bf16.msra.mxu0 0
      %1958 = vmatprep.mubr.bf16.mxu0 0
      %1959 = vmatmul.mubr.bf16.gmra.mrb[0].mxu0 %v1915
      %v1960 = vpop.f32.mrb[0].mxu0
      %v1961 = vadd.f32 0.0, %v1960
      %v1962 = vpop.f32.mrb[0].mxu0
      %v1963 = vpop.f32.mrb[0].mxu0
      %v1964 = vadd.f32 0.0, %v1963
      %v1965 = vpop.f32.mrb[0].mxu0
      %1966 = vmatprep.mubr.bf16.mxu0 0
      %1967 = vmatmul.mubr.bf16.gmra.mrb[0].mxu0 %v1918
      %v1968 = vpop.f32.mrb[0].mxu0
      %v1969 = vadd.f32 0.0, %v1968
      %v1970 = vpop.f32.mrb[0].mxu0
      %v1971 = vpop.f32.mrb[0].mxu0
      %v1972 = vadd.f32 0.0, %v1971
      %v1973 = vpop.f32.mrb[0].mxu0
      %1974 = vmatprep.mubr.bf16.mxu0 0
      %1975 = vmatmul.mubr.bf16.gmra.mrb[0].mxu0 %v1921
      %v1976 = vpop.f32.mrb[0].mxu0
      %v1977 = vadd.f32 0.0, %v1976
      %v1978 = vpop.f32.mrb[0].mxu0
      %v1979 = vpop.f32.mrb[0].mxu0
      %v1980 = vadd.f32 0.0, %v1979
      %v1981 = vpop.f32.mrb[0].mxu0
      %1982 = vmatprep.mubr.bf16.mxu0 0
      %1983 = vmatmul.mubr.bf16.gmra.mrb[0].mxu0 %v1924
      %v1984 = vpop.f32.mrb[0].mxu0
      %v1985 = vadd.f32 0.0, %v1984
      %v1986 = vpop.f32.mrb[0].mxu0
      %v1987 = vpop.f32.mrb[0].mxu0
      %v1988 = vadd.f32 0.0, %v1987
      %v1989 = vpop.f32.mrb[0].mxu0
      %1990 = vdwg.mxu0
      %v1991 = vadd.f32 %v1877, %v1961
      %v1992 = vadd.f32 %v1878, %v1964
      %v1993 = vadd.f32 %v1879, %v1969
      %v1994 = vadd.f32 %v1880, %v1972
      %v1995 = vadd.f32 %v1881, %v1977
      %v1996 = vadd.f32 %v1882, %v1980
      %v1997 = vadd.f32 %v1883, %v1985
      %v1998 = vadd.f32 %v1884, %v1988
      %1999 = vst.msk [vmem:[#allocation4] sm:$0xff] %vm391, %v1991
      %2000 = vst.msk [vmem:[#allocation4 + $0x8] sm:$0xff] %vm391, %v1992
      %2001 = vst.msk [vmem:[#allocation4 + $0x10] sm:$0xff] %vm391, %v1993
      %2002 = vst.msk [vmem:[#allocation4 + $0x18] sm:$0xff] %vm391, %v1994
      %2003 = vst.msk [vmem:[#allocation4 + $0x20] sm:$0xff] %vm391, %v1995
      %2004 = vst.msk [vmem:[#allocation4 + $0x28] sm:$0xff] %vm391, %v1996
      %2005 = vst.msk [vmem:[#allocation4 + $0x30] sm:$0xff] %vm391, %v1997
      %2006 = vst.msk [vmem:[#allocation4 + $0x38] sm:$0xff] %vm391, %v1998
      %v2007 = vld [vmem:[%s1602] sm:$0xe]
      %v2008 = vld [vmem:[%s1602 + $0x4] sm:$0x1]
      %v2009 = vld [vmem:[%s1602 + $0x8] sm:$0xe]
      %v2010 = vld [vmem:[%s1602 + $0xc] sm:$0x1]
      %v2011 = vld [vmem:[%s1602 + $0x10] sm:$0xe]
      %v2012 = vld [vmem:[%s1602 + $0x14] sm:$0x1]
      %v2013 = vld [vmem:[%s1602 + $0x18] sm:$0xe]
      %v2014 = vld [vmem:[%s1602 + $0x1c] sm:$0x1]
      %v2015 = vld [vmem:[%s1602 + $0x20] sm:$0xe]
      %v2016 = vld [vmem:[%s1602 + $0x24] sm:$0x1]
      %v2017 = vld [vmem:[%s1602 + $0x28] sm:$0xe]
      %v2018 = vld [vmem:[%s1602 + $0x2c] sm:$0x1]
      %v2019 = vld [vmem:[%s1602 + $0x30] sm:$0xe]
      %v2020 = vld [vmem:[%s1602 + $0x34] sm:$0x1]
      %v2021 = vld [vmem:[%s1602 + $0x38] sm:$0xe]
      %v2022 = vld [vmem:[%s1602 + $0x3c] sm:$0x1]
      %v2039 = vrot.slane %v2007, 5
      %v2040 = vrot.slane %v2039, 4
      %v2041 = vrot.slane %v2008, 5
      %v2042 = vsel %vm841, %v2040, %v2041
      %v2043 = vrot.slane %v2009, 5
      %v2044 = vrot.slane %v2043, 4
      %v2045 = vrot.slane %v2010, 5
      %v2046 = vsel %vm841, %v2044, %v2045
      %v2047 = vrot.slane %v2011, 5
      %v2048 = vrot.slane %v2047, 4
      %v2049 = vrot.slane %v2012, 5
      %v2050 = vsel %vm841, %v2048, %v2049
      %v2051 = vrot.slane %v2013, 5
      %v2052 = vrot.slane %v2051, 4
      %v2053 = vrot.slane %v2014, 5
      %v2054 = vsel %vm841, %v2052, %v2053
      %v2055 = vrot.slane %v2015, 5
      %v2056 = vrot.slane %v2055, 4
      %v2057 = vrot.slane %v2016, 5
      %v2058 = vsel %vm841, %v2056, %v2057
      %v2059 = vrot.slane %v2017, 5
      %v2060 = vrot.slane %v2059, 4
      %v2061 = vrot.slane %v2018, 5
      %v2062 = vsel %vm841, %v2060, %v2061
      %v2063 = vrot.slane %v2019, 5
      %v2064 = vrot.slane %v2063, 4
      %v2065 = vrot.slane %v2020, 5
      %v2066 = vsel %vm841, %v2064, %v2065
      %v2067 = vrot.slane %v2021, 5
      %v2068 = vrot.slane %v2067, 4
      %v2069 = vrot.slane %v2022, 5
      %v2070 = vsel %vm841, %v2068, %v2069
      %v2071 = vld [vmem:[#allocation4] sm:$0xff]
      %v2072 = vld [vmem:[#allocation4 + $0x8] sm:$0xff]
      %v2073 = vld [vmem:[#allocation4 + $0x10] sm:$0xff]
      %v2074 = vld [vmem:[#allocation4 + $0x18] sm:$0xff]
      %v2075 = vld [vmem:[#allocation4 + $0x20] sm:$0xff]
      %v2076 = vld [vmem:[#allocation4 + $0x28] sm:$0xff]
      %v2077 = vld [vmem:[#allocation4 + $0x30] sm:$0xff]
      %v2078 = vld [vmem:[#allocation4 + $0x38] sm:$0xff]
      %s2079 = scalar_lea.vmem %s1, 128
      %v2080 = vld [vmem:[%s2079] sm:$0xf]
      %v2081 = vld [vmem:[%s2079 + $0x4] sm:$0xf]
      %v2082 = vld [vmem:[%s2079 + $0x8] sm:$0xf]
      %v2083 = vld [vmem:[%s2079 + $0xc] sm:$0xf]
      %v2084 = vunpack.c.l.b16 %v2042
      %v2085 = vunpack.c.l.b16 %v2046
      %v2086 = vunpack.c.l.b16 %v2050
      %v2087 = vunpack.c.l.b16 %v2054
      %v2088 = vunpack.c.l.b16 %v2058
      %v2089 = vunpack.c.l.b16 %v2062
      %v2090 = vunpack.c.l.b16 %v2066
      %v2091 = vunpack.c.l.b16 %v2070
      %v2092 = vpack.c.b16 %v2085, %v2084
      %v2093 = vpack.c.b16 %v2087, %v2086
      %v2094 = vpack.c.b16 %v2089, %v2088
      %v2095 = vpack.c.b16 %v2091, %v2090
      %v2100 = vunpack.c.l.b16 %v2080
      %v2101 = vunpack.c.l.b16 %v2081
      %v2102 = vunpack.c.l.b16 %v2082
      %v2103 = vunpack.c.l.b16 %v2083
      %v2104 = vpack.c.b16 %v2101, %v2100
      %v2105 = vpack.c.b16 %v2103, %v2102
      %v2109 = vsel %vm452, %v2092, 0
      %v2112 = vsel %vm452, %v2093, 0
      %v2115 = vsel %vm452, %v2094, 0
      %v2118 = vsel %vm452, %v2095, 0
      %2120 = vmatprep.subr.bf16.mxu0 0
      %2121 = vmatpush1.bf16.msra.mxu0 %v2104
      %2122 = vmatprep.subr.bf16.mxu0 0
      %2123 = vmatpush1.bf16.msra.mxu0 %v2105
      %2124 = vmatprep.subr.bf16.mxu0 0
      %2125 = vmatpush1.bf16.msra.mxu0 0
      %2126 = vmatprep.subr.bf16.mxu0 0
      %2127 = vmatpush1.bf16.msra.mxu0 0
      %2128 = vmatprep.subr.bf16.mxu0 0
      %2129 = vmatpush1.bf16.msra.mxu0 0
      %2130 = vmatprep.subr.bf16.mxu0 0
      %2131 = vmatpush1.bf16.msra.mxu0 0
      %2132 = vmatprep.subr.bf16.mxu0 0
      %2133 = vmatpush1.bf16.msra.mxu0 0
      %2134 = vmatprep.subr.bf16.mxu0 0
      %2135 = vmatpush1.bf16.msra.mxu0 0
      %2136 = vmatprep.subr.bf16.mxu0 0
      %2137 = vmatpush1.bf16.msra.mxu0 0
      %2138 = vmatprep.subr.bf16.mxu0 0
      %2139 = vmatpush1.bf16.msra.mxu0 0
      %2140 = vmatprep.subr.bf16.mxu0 0
      %2141 = vmatpush1.bf16.msra.mxu0 0
      %2142 = vmatprep.subr.bf16.mxu0 0
      %2143 = vmatpush1.bf16.msra.mxu0 0
      %2144 = vmatprep.subr.bf16.mxu0 0
      %2145 = vmatpush1.bf16.msra.mxu0 0
      %2146 = vmatprep.subr.bf16.mxu0 0
      %2147 = vmatpush1.bf16.msra.mxu0 0
      %2148 = vmatprep.subr.bf16.mxu0 0
      %2149 = vmatpush1.bf16.msra.mxu0 0
      %2150 = vmatprep.subr.bf16.mxu0 0
      %2151 = vmatpush1.bf16.msra.mxu0 0
      %2152 = vmatprep.mubr.bf16.mxu0 0
      %2153 = vmatmul.mubr.bf16.gmra.mrb[0].mxu0 %v2109
      %v2154 = vpop.f32.mrb[0].mxu0
      %v2155 = vadd.f32 0.0, %v2154
      %v2156 = vpop.f32.mrb[0].mxu0
      %v2157 = vpop.f32.mrb[0].mxu0
      %v2158 = vadd.f32 0.0, %v2157
      %v2159 = vpop.f32.mrb[0].mxu0
      %2160 = vmatprep.mubr.bf16.mxu0 0
      %2161 = vmatmul.mubr.bf16.gmra.mrb[0].mxu0 %v2112
      %v2162 = vpop.f32.mrb[0].mxu0
      %v2163 = vadd.f32 0.0, %v2162
      %v2164 = vpop.f32.mrb[0].mxu0
      %v2165 = vpop.f32.mrb[0].mxu0
      %v2166 = vadd.f32 0.0, %v2165
      %v2167 = vpop.f32.mrb[0].mxu0
      %2168 = vmatprep.mubr.bf16.mxu0 0
      %2169 = vmatmul.mubr.bf16.gmra.mrb[0].mxu0 %v2115
      %v2170 = vpop.f32.mrb[0].mxu0
      %v2171 = vadd.f32 0.0, %v2170
      %v2172 = vpop.f32.mrb[0].mxu0
      %v2173 = vpop.f32.mrb[0].mxu0
      %v2174 = vadd.f32 0.0, %v2173
      %v2175 = vpop.f32.mrb[0].mxu0
      %2176 = vmatprep.mubr.bf16.mxu0 0
      %2177 = vmatmul.mubr.bf16.gmra.mrb[0].mxu0 %v2118
      %v2178 = vpop.f32.mrb[0].mxu0
      %v2179 = vadd.f32 0.0, %v2178
      %v2180 = vpop.f32.mrb[0].mxu0
      %v2181 = vpop.f32.mrb[0].mxu0
      %v2182 = vadd.f32 0.0, %v2181
      %v2183 = vpop.f32.mrb[0].mxu0
      %2184 = vdwg.mxu0
      %v2185 = vadd.f32 %v2071, %v2155
      %v2186 = vadd.f32 %v2072, %v2158
      %v2187 = vadd.f32 %v2073, %v2163
      %v2188 = vadd.f32 %v2074, %v2166
      %v2189 = vadd.f32 %v2075, %v2171
      %v2190 = vadd.f32 %v2076, %v2174
      %v2191 = vadd.f32 %v2077, %v2179
      %v2192 = vadd.f32 %v2078, %v2182
      %2193 = vst.msk [vmem:[#allocation4] sm:$0xff] %vm391, %v2185
      %2194 = vst.msk [vmem:[#allocation4 + $0x8] sm:$0xff] %vm391, %v2186
      %2195 = vst.msk [vmem:[#allocation4 + $0x10] sm:$0xff] %vm391, %v2187
      %2196 = vst.msk [vmem:[#allocation4 + $0x18] sm:$0xff] %vm391, %v2188
      %2197 = vst.msk [vmem:[#allocation4 + $0x20] sm:$0xff] %vm391, %v2189
      %2198 = vst.msk [vmem:[#allocation4 + $0x28] sm:$0xff] %vm391, %v2190
      %2199 = vst.msk [vmem:[#allocation4 + $0x30] sm:$0xff] %vm391, %v2191
      %2200 = vst.msk [vmem:[#allocation4 + $0x38] sm:$0xff] %vm391, %v2192
      %v2201 = vld [vmem:[#allocation4] sm:$0xff]
      %v2202 = vld [vmem:[#allocation4 + $0x8] sm:$0xff]
      %v2203 = vld [vmem:[#allocation4 + $0x10] sm:$0xff]
      %v2204 = vld [vmem:[#allocation4 + $0x18] sm:$0xff]
      %v2205 = vld [vmem:[#allocation4 + $0x20] sm:$0xff]
      %v2206 = vld [vmem:[#allocation4 + $0x28] sm:$0xff]
      %v2207 = vld [vmem:[#allocation4 + $0x30] sm:$0xff]
      %v2208 = vld [vmem:[#allocation4 + $0x38] sm:$0xff]
      %v2209 = vld [vmem:[%s2] sm:$0x1]
      %v2211 = vlaneseq
      %v2212 = vshrl.u32 %v2211, 7
      %v2213 = vsub.s32 0, %v2212
      %v2214 = vrot.slane %v2209, %v2213
      %v2216 = vadd.f32 %v2201, %v2214
      %v2217 = vadd.f32 %v2202, %v2214
      %v2218 = vadd.f32 %v2203, %v2214
      %v2219 = vadd.f32 %v2204, %v2214
      %v2220 = vadd.f32 %v2205, %v2214
      %v2221 = vadd.f32 %v2206, %v2214
      %v2222 = vadd.f32 %v2207, %v2214
      %v2223 = vadd.f32 %v2208, %v2214
      %v2224 = vmax.f32 %v2216, 0.0
      %v2225 = vmax.f32 %v2217, 0.0
      %v2226 = vmax.f32 %v2218, 0.0
      %v2227 = vmax.f32 %v2219, 0.0
      %v2228 = vmax.f32 %v2220, 0.0
      %v2229 = vmax.f32 %v2221, 0.0
      %v2230 = vmax.f32 %v2222, 0.0
      %v2231 = vmax.f32 %v2223, 0.0
      %vm2232 = vcmask 519168
      %2233 = vst.msk [vmem:[#allocation3] sm:$0xf] %vm2232, 0
      %vm2234 = vcmask 516096
      %2235 = vst.msk [vmem:[#allocation3 + $0x4] sm:$0x1] %vm2234, 0
      %2236 = vst.msk [vmem:[#allocation3 + $0x8] sm:$0xf] %vm2232, 0
      %2237 = vst.msk [vmem:[#allocation3 + $0xc] sm:$0x1] %vm2234, 0
      %2238 = vst.msk [vmem:[#allocation3 + $0x10] sm:$0xf] %vm2232, 0
      %2239 = vst.msk [vmem:[#allocation3 + $0x14] sm:$0x1] %vm2234, 0
      %2240 = vst.msk [vmem:[#allocation3 + $0x18] sm:$0xf] %vm2232, 0
      %2241 = vst.msk [vmem:[#allocation3 + $0x1c] sm:$0x1] %vm2234, 0
      %2242 = vst.msk [vmem:[#allocation3 + $0x20] sm:$0xf] %vm2232, 0
      %2243 = vst.msk [vmem:[#allocation3 + $0x24] sm:$0x1] %vm2234, 0
      %2244 = vst.msk [vmem:[#allocation3 + $0x28] sm:$0xf] %vm2232, 0
      %2245 = vst.msk [vmem:[#allocation3 + $0x2c] sm:$0x1] %vm2234, 0
      %2246 = vst.msk [vmem:[#allocation3 + $0x30] sm:$0xf] %vm2232, 0
      %2247 = vst.msk [vmem:[#allocation3 + $0x34] sm:$0x1] %vm2234, 0
      %2248 = vst.msk [vmem:[#allocation3 + $0x38] sm:$0xf] %vm2232, 0
      %2249 = vst.msk [vmem:[#allocation3 + $0x3c] sm:$0x1] %vm2234, 0
      %2250 = vst.msk [vmem:[#allocation3 + $0x40] sm:$0xf] %vm2232, 0
      %2251 = vst.msk [vmem:[#allocation3 + $0x44] sm:$0x1] %vm2234, 0
      %2252 = vst.msk [vmem:[#allocation3 + $0x48] sm:$0xf] %vm2232, 0
      %2253 = vst.msk [vmem:[#allocation3 + $0x4c] sm:$0x1] %vm2234, 0
      %v2254 = vpack.c.bf16 %v2224, %v2224
      %v2255 = vpack.c.bf16 %v2225, %v2225
      %v2256 = vpack.c.bf16 %v2226, %v2226
      %v2257 = vpack.c.bf16 %v2227, %v2227
      %v2258 = vpack.c.bf16 %v2228, %v2228
      %v2259 = vpack.c.bf16 %v2229, %v2229
      %v2260 = vpack.c.bf16 %v2230, %v2230
      %v2261 = vpack.c.bf16 %v2231, %v2231
      %v2270 = vunpack.c.l.b16 %v2254
      %v2271 = vunpack.c.l.b16 %v2255
      %v2272 = vunpack.c.l.b16 %v2256
      %v2273 = vunpack.c.l.b16 %v2257
      %v2274 = vunpack.c.l.b16 %v2258
      %v2275 = vunpack.c.l.b16 %v2259
      %v2276 = vunpack.c.l.b16 %v2260
      %v2277 = vunpack.c.l.b16 %v2261
      %v2278 = vpack.c.b16 %v2270, %v2270
      %v2279 = vpack.c.b16 %v2271, %v2271
      %v2280 = vpack.c.b16 %v2272, %v2272
      %v2281 = vpack.c.b16 %v2273, %v2273
      %v2282 = vpack.c.b16 %v2274, %v2274
      %v2283 = vpack.c.b16 %v2275, %v2275
      %v2284 = vpack.c.b16 %v2276, %v2276
      %v2285 = vpack.c.b16 %v2277, %v2277
      %v2287 = vshrl.u32 %v2278, 16
      %v2289 = vrot.slane %v2287, 7
      %v2290 = vshll.u32 %v2278, 16
      %v2292 = vor.u32 %v2289, %v2290
      %v2293 = vrot.slane %v2289, 4
      %v2295 = vshrl.u32 %v2279, 16
      %v2297 = vrot.slane %v2295, 7
      %v2298 = vshll.u32 %v2279, 16
      %v2300 = vor.u32 %v2297, %v2298
      %v2301 = vrot.slane %v2297, 4
      %v2303 = vshrl.u32 %v2280, 16
      %v2305 = vrot.slane %v2303, 7
      %v2306 = vshll.u32 %v2280, 16
      %v2308 = vor.u32 %v2305, %v2306
      %v2309 = vrot.slane %v2305, 4
      %v2311 = vshrl.u32 %v2281, 16
      %v2313 = vrot.slane %v2311, 7
      %v2314 = vshll.u32 %v2281, 16
      %v2316 = vor.u32 %v2313, %v2314
      %v2317 = vrot.slane %v2313, 4
      %v2319 = vshrl.u32 %v2282, 16
      %v2321 = vrot.slane %v2319, 7
      %v2322 = vshll.u32 %v2282, 16
      %v2324 = vor.u32 %v2321, %v2322
      %v2325 = vrot.slane %v2321, 4
      %v2327 = vshrl.u32 %v2283, 16
      %v2329 = vrot.slane %v2327, 7
      %v2330 = vshll.u32 %v2283, 16
      %v2332 = vor.u32 %v2329, %v2330
      %v2333 = vrot.slane %v2329, 4
      %v2335 = vshrl.u32 %v2284, 16
      %v2337 = vrot.slane %v2335, 7
      %v2338 = vshll.u32 %v2284, 16
      %v2340 = vor.u32 %v2337, %v2338
      %v2341 = vrot.slane %v2337, 4
      %v2343 = vshrl.u32 %v2285, 16
      %v2345 = vrot.slane %v2343, 7
      %v2346 = vshll.u32 %v2285, 16
      %v2348 = vor.u32 %v2345, %v2346
      %v2349 = vrot.slane %v2345, 4
      %s2366 = scalar_lea.vmem [#allocation3], 8
      %vm2367 = vcmask 519168
      %vm2368 = vmand %vm2367, %vm338
      %v2369 = vld [vmem:[%s2366] sm:$0xf]
      %v2370 = vsel %vm2368, %v2292, %v2369
      %2371 = vst [vmem:[%s2366] sm:$0xf] %v2370
      %vm2372 = vcmask 516096
      %vm2373 = vmand %vm2372, %vm344
      %v2374 = vld [vmem:[%s2366 + $0x4] sm:$0x1]
      %v2375 = vsel %vm2373, %v2293, %v2374
      %2376 = vst [vmem:[%s2366 + $0x4] sm:$0x1] %v2375
      %v2377 = vld [vmem:[%s2366 + $0x8] sm:$0xf]
      %v2378 = vsel %vm2368, %v2300, %v2377
      %2379 = vst [vmem:[%s2366 + $0x8] sm:$0xf] %v2378
      %v2380 = vld [vmem:[%s2366 + $0xc] sm:$0x1]
      %v2381 = vsel %vm2373, %v2301, %v2380
      %2382 = vst [vmem:[%s2366 + $0xc] sm:$0x1] %v2381
      %v2383 = vld [vmem:[%s2366 + $0x10] sm:$0xf]
      %v2384 = vsel %vm2368, %v2308, %v2383
      %2385 = vst [vmem:[%s2366 + $0x10] sm:$0xf] %v2384
      %v2386 = vld [vmem:[%s2366 + $0x14] sm:$0x1]
      %v2387 = vsel %vm2373, %v2309, %v2386
      %2388 = vst [vmem:[%s2366 + $0x14] sm:$0x1] %v2387
      %v2389 = vld [vmem:[%s2366 + $0x18] sm:$0xf]
      %v2390 = vsel %vm2368, %v2316, %v2389
      %2391 = vst [vmem:[%s2366 + $0x18] sm:$0xf] %v2390
      %v2392 = vld [vmem:[%s2366 + $0x1c] sm:$0x1]
      %v2393 = vsel %vm2373, %v2317, %v2392
      %2394 = vst [vmem:[%s2366 + $0x1c] sm:$0x1] %v2393
      %v2395 = vld [vmem:[%s2366 + $0x20] sm:$0xf]
      %v2396 = vsel %vm2368, %v2324, %v2395
      %2397 = vst [vmem:[%s2366 + $0x20] sm:$0xf] %v2396
      %v2398 = vld [vmem:[%s2366 + $0x24] sm:$0x1]
      %v2399 = vsel %vm2373, %v2325, %v2398
      %2400 = vst [vmem:[%s2366 + $0x24] sm:$0x1] %v2399
      %v2401 = vld [vmem:[%s2366 + $0x28] sm:$0xf]
      %v2402 = vsel %vm2368, %v2332, %v2401
      %2403 = vst [vmem:[%s2366 + $0x28] sm:$0xf] %v2402
      %v2404 = vld [vmem:[%s2366 + $0x2c] sm:$0x1]
      %v2405 = vsel %vm2373, %v2333, %v2404
      %2406 = vst [vmem:[%s2366 + $0x2c] sm:$0x1] %v2405
      %v2407 = vld [vmem:[%s2366 + $0x30] sm:$0xf]
      %v2408 = vsel %vm2368, %v2340, %v2407
      %2409 = vst [vmem:[%s2366 + $0x30] sm:$0xf] %v2408
      %v2410 = vld [vmem:[%s2366 + $0x34] sm:$0x1]
      %v2411 = vsel %vm2373, %v2341, %v2410
      %2412 = vst [vmem:[%s2366 + $0x34] sm:$0x1] %v2411
      %v2413 = vld [vmem:[%s2366 + $0x38] sm:$0xf]
      %v2414 = vsel %vm2368, %v2348, %v2413
      %2415 = vst [vmem:[%s2366 + $0x38] sm:$0xf] %v2414
      %v2416 = vld [vmem:[%s2366 + $0x3c] sm:$0x1]
      %v2417 = vsel %vm2373, %v2349, %v2416
      %2418 = vst [vmem:[%s2366 + $0x3c] sm:$0x1] %v2417
      %2419 = vst.msk [vmem:[#allocation4] sm:$0xff] %vm391, 0.0
      %2420 = vst.msk [vmem:[#allocation4 + $0x8] sm:$0xff] %vm391, 0.0
      %2421 = vst.msk [vmem:[#allocation4 + $0x10] sm:$0xff] %vm391, 0.0
      %2422 = vst.msk [vmem:[#allocation4 + $0x18] sm:$0xff] %vm391, 0.0
      %2423 = vst.msk [vmem:[#allocation4 + $0x20] sm:$0xff] %vm391, 0.0
      %2424 = vst.msk [vmem:[#allocation4 + $0x28] sm:$0xff] %vm391, 0.0
      %2425 = vst.msk [vmem:[#allocation4 + $0x30] sm:$0xff] %vm391, 0.0
      %2426 = vst.msk [vmem:[#allocation4 + $0x38] sm:$0xff] %vm391, 0.0
      %v2427 = vld [vmem:[#allocation3] sm:$0xf]
      %v2428 = vld [vmem:[#allocation3 + $0x8] sm:$0xf]
      %v2429 = vld [vmem:[#allocation3 + $0x10] sm:$0xf]
      %v2430 = vld [vmem:[#allocation3 + $0x18] sm:$0xf]
      %v2431 = vld [vmem:[#allocation3 + $0x20] sm:$0xf]
      %v2432 = vld [vmem:[#allocation3 + $0x28] sm:$0xf]
      %v2433 = vld [vmem:[#allocation3 + $0x30] sm:$0xf]
      %v2434 = vld [vmem:[#allocation3 + $0x38] sm:$0xf]
      %v2435 = vld [vmem:[#allocation4] sm:$0xff]
      %v2436 = vld [vmem:[#allocation4 + $0x8] sm:$0xff]
      %v2437 = vld [vmem:[#allocation4 + $0x10] sm:$0xff]
      %v2438 = vld [vmem:[#allocation4 + $0x18] sm:$0xff]
      %v2439 = vld [vmem:[#allocation4 + $0x20] sm:$0xff]
      %v2440 = vld [vmem:[#allocation4 + $0x28] sm:$0xff]
      %v2441 = vld [vmem:[#allocation4 + $0x30] sm:$0xff]
      %v2442 = vld [vmem:[#allocation4 + $0x38] sm:$0xff]
      %v2443 = vld [vmem:[%s3] sm:$0xf]
      %v2444 = vld [vmem:[%s3 + $0x4] sm:$0xf]
      %v2445 = vld [vmem:[%s3 + $0x8] sm:$0xf]
      %v2446 = vld [vmem:[%s3 + $0xc] sm:$0xf]
      %v2447 = vld [vmem:[%s3 + $0x10] sm:$0xf]
      %v2448 = vld [vmem:[%s3 + $0x14] sm:$0xf]
      %v2449 = vld [vmem:[%s3 + $0x18] sm:$0xf]
      %v2450 = vld [vmem:[%s3 + $0x1c] sm:$0xf]
      %v2459 = vunpack.c.l.b16 %v2427
      %v2460 = vunpack.c.l.b16 %v2428
      %v2461 = vunpack.c.l.b16 %v2429
      %v2462 = vunpack.c.l.b16 %v2430
      %v2463 = vunpack.c.l.b16 %v2431
      %v2464 = vunpack.c.l.b16 %v2432
      %v2465 = vunpack.c.l.b16 %v2433
      %v2466 = vunpack.c.l.b16 %v2434
      %v2467 = vpack.c.b16 %v2460, %v2459
      %v2468 = vpack.c.b16 %v2462, %v2461
      %v2469 = vpack.c.b16 %v2464, %v2463
      %v2470 = vpack.c.b16 %v2466, %v2465
      %v2479 = vunpack.c.l.b16 %v2443
      %v2480 = vunpack.c.l.b16 %v2444
      %v2481 = vunpack.c.l.b16 %v2445
      %v2482 = vunpack.c.l.b16 %v2446
      %v2483 = vunpack.c.l.b16 %v2447
      %v2484 = vunpack.c.l.b16 %v2448
      %v2485 = vunpack.c.l.b16 %v2449
      %v2486 = vunpack.c.l.b16 %v2450
      %v2487 = vpack.c.b16 %v2480, %v2479
      %v2488 = vpack.c.b16 %v2482, %v2481
      %v2489 = vpack.c.b16 %v2484, %v2483
      %v2490 = vpack.c.b16 %v2486, %v2485
      %v2496 = vsel %vm391, %v2467, 0
      %v2499 = vsel %vm391, %v2468, 0
      %v2502 = vsel %vm391, %v2469, 0
      %v2505 = vsel %vm391, %v2470, 0
      %2507 = vmatprep.subr.bf16.mxu0 0
      %2508 = vmatpush1.bf16.msra.mxu0 %v2487
      %2509 = vmatprep.subr.bf16.mxu0 0
      %2510 = vmatpush1.bf16.msra.mxu0 %v2488
      %2511 = vmatprep.subr.bf16.mxu0 0
      %2512 = vmatpush1.bf16.msra.mxu0 %v2489
      %2513 = vmatprep.subr.bf16.mxu0 0
      %2514 = vmatpush1.bf16.msra.mxu0 %v2490
      %2515 = vmatprep.subr.bf16.mxu0 0
      %2516 = vmatpush1.bf16.msra.mxu0 0
      %2517 = vmatprep.subr.bf16.mxu0 0
      %2518 = vmatpush1.bf16.msra.mxu0 0
      %2519 = vmatprep.subr.bf16.mxu0 0
      %2520 = vmatpush1.bf16.msra.mxu0 0
      %2521 = vmatprep.subr.bf16.mxu0 0
      %2522 = vmatpush1.bf16.msra.mxu0 0
      %2523 = vmatprep.subr.bf16.mxu0 0
      %2524 = vmatpush1.bf16.msra.mxu0 0
      %2525 = vmatprep.subr.bf16.mxu0 0
      %2526 = vmatpush1.bf16.msra.mxu0 0
      %2527 = vmatprep.subr.bf16.mxu0 0
      %2528 = vmatpush1.bf16.msra.mxu0 0
      %2529 = vmatprep.subr.bf16.mxu0 0
      %2530 = vmatpush1.bf16.msra.mxu0 0
      %2531 = vmatprep.subr.bf16.mxu0 0
      %2532 = vmatpush1.bf16.msra.mxu0 0
      %2533 = vmatprep.subr.bf16.mxu0 0
      %2534 = vmatpush1.bf16.msra.mxu0 0
      %2535 = vmatprep.subr.bf16.mxu0 0
      %2536 = vmatpush1.bf16.msra.mxu0 0
      %2537 = vmatprep.subr.bf16.mxu0 0
      %2538 = vmatpush1.bf16.msra.mxu0 0
      %2539 = vmatprep.mubr.bf16.mxu0 0
      %2540 = vmatmul.mubr.bf16.gmra.mrb[0].mxu0 %v2496
      %v2541 = vpop.f32.mrb[0].mxu0
      %v2542 = vadd.f32 0.0, %v2541
      %v2543 = vpop.f32.mrb[0].mxu0
      %v2544 = vpop.f32.mrb[0].mxu0
      %v2545 = vadd.f32 0.0, %v2544
      %v2546 = vpop.f32.mrb[0].mxu0
      %2547 = vmatprep.mubr.bf16.mxu0 0
      %2548 = vmatmul.mubr.bf16.gmra.mrb[0].mxu0 %v2499
      %v2549 = vpop.f32.mrb[0].mxu0
      %v2550 = vadd.f32 0.0, %v2549
      %v2551 = vpop.f32.mrb[0].mxu0
      %v2552 = vpop.f32.mrb[0].mxu0
      %v2553 = vadd.f32 0.0, %v2552
      %v2554 = vpop.f32.mrb[0].mxu0
      %2555 = vmatprep.mubr.bf16.mxu0 0
      %2556 = vmatmul.mubr.bf16.gmra.mrb[0].mxu0 %v2502
      %v2557 = vpop.f32.mrb[0].mxu0
      %v2558 = vadd.f32 0.0, %v2557
      %v2559 = vpop.f32.mrb[0].mxu0
      %v2560 = vpop.f32.mrb[0].mxu0
      %v2561 = vadd.f32 0.0, %v2560
      %v2562 = vpop.f32.mrb[0].mxu0
      %2563 = vmatprep.mubr.bf16.mxu0 0
      %2564 = vmatmul.mubr.bf16.gmra.mrb[0].mxu0 %v2505
      %v2565 = vpop.f32.mrb[0].mxu0
      %v2566 = vadd.f32 0.0, %v2565
      %v2567 = vpop.f32.mrb[0].mxu0
      %v2568 = vpop.f32.mrb[0].mxu0
      %v2569 = vadd.f32 0.0, %v2568
      %v2570 = vpop.f32.mrb[0].mxu0
      %2571 = vdwg.mxu0
      %v2572 = vadd.f32 %v2435, %v2542
      %v2573 = vadd.f32 %v2436, %v2545
      %v2574 = vadd.f32 %v2437, %v2550
      %v2575 = vadd.f32 %v2438, %v2553
      %v2576 = vadd.f32 %v2439, %v2558
      %v2577 = vadd.f32 %v2440, %v2561
      %v2578 = vadd.f32 %v2441, %v2566
      %v2579 = vadd.f32 %v2442, %v2569
      %2580 = vst.msk [vmem:[#allocation4] sm:$0xff] %vm391, %v2572
      %2581 = vst.msk [vmem:[#allocation4 + $0x8] sm:$0xff] %vm391, %v2573
      %2582 = vst.msk [vmem:[#allocation4 + $0x10] sm:$0xff] %vm391, %v2574
      %2583 = vst.msk [vmem:[#allocation4 + $0x18] sm:$0xff] %vm391, %v2575
      %2584 = vst.msk [vmem:[#allocation4 + $0x20] sm:$0xff] %vm391, %v2576
      %2585 = vst.msk [vmem:[#allocation4 + $0x28] sm:$0xff] %vm391, %v2577
      %2586 = vst.msk [vmem:[#allocation4 + $0x30] sm:$0xff] %vm391, %v2578
      %2587 = vst.msk [vmem:[#allocation4 + $0x38] sm:$0xff] %vm391, %v2579
      %v2588 = vld [vmem:[#allocation3] sm:$0xf]
      %v2589 = vld [vmem:[#allocation3 + $0x4] sm:$0x1]
      %v2590 = vld [vmem:[#allocation3 + $0x8] sm:$0xf]
      %v2591 = vld [vmem:[#allocation3 + $0xc] sm:$0x1]
      %v2592 = vld [vmem:[#allocation3 + $0x10] sm:$0xf]
      %v2593 = vld [vmem:[#allocation3 + $0x14] sm:$0x1]
      %v2594 = vld [vmem:[#allocation3 + $0x18] sm:$0xf]
      %v2595 = vld [vmem:[#allocation3 + $0x1c] sm:$0x1]
      %v2596 = vld [vmem:[#allocation3 + $0x20] sm:$0xf]
      %v2597 = vld [vmem:[#allocation3 + $0x24] sm:$0x1]
      %v2598 = vld [vmem:[#allocation3 + $0x28] sm:$0xf]
      %v2599 = vld [vmem:[#allocation3 + $0x2c] sm:$0x1]
      %v2600 = vld [vmem:[#allocation3 + $0x30] sm:$0xf]
      %v2601 = vld [vmem:[#allocation3 + $0x34] sm:$0x1]
      %v2602 = vld [vmem:[#allocation3 + $0x38] sm:$0xf]
      %v2603 = vld [vmem:[#allocation3 + $0x3c] sm:$0x1]
      %v2605 = vshrl.u32 %v2588, 16
      %v2607 = vrot.slane %v2605, 4
      %v2608 = vshll.u32 %v2588, 16
      %v2610 = vrot.slane %v2608, 5
      %v2611 = vor.u32 %v2607, %v2610
      %v2612 = vrot.slane %v2611, 4
      %v2614 = vshll.u32 %v2589, 16
      %v2616 = vrot.slane %v2614, 5
      %v2617 = vsel %vm564, %v2612, %v2616
      %v2619 = vshrl.u32 %v2590, 16
      %v2621 = vrot.slane %v2619, 4
      %v2622 = vshll.u32 %v2590, 16
      %v2624 = vrot.slane %v2622, 5
      %v2625 = vor.u32 %v2621, %v2624
      %v2626 = vrot.slane %v2625, 4
      %v2628 = vshll.u32 %v2591, 16
      %v2630 = vrot.slane %v2628, 5
      %v2631 = vsel %vm564, %v2626, %v2630
      %v2633 = vshrl.u32 %v2592, 16
      %v2635 = vrot.slane %v2633, 4
      %v2636 = vshll.u32 %v2592, 16
      %v2638 = vrot.slane %v2636, 5
      %v2639 = vor.u32 %v2635, %v2638
      %v2640 = vrot.slane %v2639, 4
      %v2642 = vshll.u32 %v2593, 16
      %v2644 = vrot.slane %v2642, 5
      %v2645 = vsel %vm564, %v2640, %v2644
      %v2647 = vshrl.u32 %v2594, 16
      %v2649 = vrot.slane %v2647, 4
      %v2650 = vshll.u32 %v2594, 16
      %v2652 = vrot.slane %v2650, 5
      %v2653 = vor.u32 %v2649, %v2652
      %v2654 = vrot.slane %v2653, 4
      %v2656 = vshll.u32 %v2595, 16
      %v2658 = vrot.slane %v2656, 5
      %v2659 = vsel %vm564, %v2654, %v2658
      %v2661 = vshrl.u32 %v2596, 16
      %v2663 = vrot.slane %v2661, 4
      %v2664 = vshll.u32 %v2596, 16
      %v2666 = vrot.slane %v2664, 5
      %v2667 = vor.u32 %v2663, %v2666
      %v2668 = vrot.slane %v2667, 4
      %v2670 = vshll.u32 %v2597, 16
      %v2672 = vrot.slane %v2670, 5
      %v2673 = vsel %vm564, %v2668, %v2672
      %v2675 = vshrl.u32 %v2598, 16
      %v2677 = vrot.slane %v2675, 4
      %v2678 = vshll.u32 %v2598, 16
      %v2680 = vrot.slane %v2678, 5
      %v2681 = vor.u32 %v2677, %v2680
      %v2682 = vrot.slane %v2681, 4
      %v2684 = vshll.u32 %v2599, 16
      %v2686 = vrot.slane %v2684, 5
      %v2687 = vsel %vm564, %v2682, %v2686
      %v2689 = vshrl.u32 %v2600, 16
      %v2691 = vrot.slane %v2689, 4
      %v2692 = vshll.u32 %v2600, 16
      %v2694 = vrot.slane %v2692, 5
      %v2695 = vor.u32 %v2691, %v2694
      %v2696 = vrot.slane %v2695, 4
      %v2698 = vshll.u32 %v2601, 16
      %v2700 = vrot.slane %v2698, 5
      %v2701 = vsel %vm564, %v2696, %v2700
      %v2703 = vshrl.u32 %v2602, 16
      %v2705 = vrot.slane %v2703, 4
      %v2706 = vshll.u32 %v2602, 16
      %v2708 = vrot.slane %v2706, 5
      %v2709 = vor.u32 %v2705, %v2708
      %v2710 = vrot.slane %v2709, 4
      %v2712 = vshll.u32 %v2603, 16
      %v2714 = vrot.slane %v2712, 5
      %v2715 = vsel %vm564, %v2710, %v2714
      %v2716 = vld [vmem:[#allocation4] sm:$0xff]
      %v2717 = vld [vmem:[#allocation4 + $0x8] sm:$0xff]
      %v2718 = vld [vmem:[#allocation4 + $0x10] sm:$0xff]
      %v2719 = vld [vmem:[#allocation4 + $0x18] sm:$0xff]
      %v2720 = vld [vmem:[#allocation4 + $0x20] sm:$0xff]
      %v2721 = vld [vmem:[#allocation4 + $0x28] sm:$0xff]
      %v2722 = vld [vmem:[#allocation4 + $0x30] sm:$0xff]
      %v2723 = vld [vmem:[#allocation4 + $0x38] sm:$0xff]
      %s2724 = scalar_lea.vmem %s3, 32
      %v2725 = vld [vmem:[%s2724] sm:$0xf]
      %v2726 = vld [vmem:[%s2724 + $0x4] sm:$0xf]
      %v2727 = vld [vmem:[%s2724 + $0x8] sm:$0xf]
      %v2728 = vld [vmem:[%s2724 + $0xc] sm:$0xf]
      %v2729 = vld [vmem:[%s2724 + $0x10] sm:$0xf]
      %v2730 = vld [vmem:[%s2724 + $0x14] sm:$0xf]
      %v2731 = vld [vmem:[%s2724 + $0x18] sm:$0xf]
      %v2732 = vld [vmem:[%s2724 + $0x1c] sm:$0xf]
      %v2733 = vunpack.c.l.b16 %v2617
      %v2734 = vunpack.c.l.b16 %v2631
      %v2735 = vunpack.c.l.b16 %v2645
      %v2736 = vunpack.c.l.b16 %v2659
      %v2737 = vunpack.c.l.b16 %v2673
      %v2738 = vunpack.c.l.b16 %v2687
      %v2739 = vunpack.c.l.b16 %v2701
      %v2740 = vunpack.c.l.b16 %v2715
      %v2741 = vpack.c.b16 %v2734, %v2733
      %v2742 = vpack.c.b16 %v2736, %v2735
      %v2743 = vpack.c.b16 %v2738, %v2737
      %v2744 = vpack.c.b16 %v2740, %v2739
      %v2753 = vunpack.c.l.b16 %v2725
      %v2754 = vunpack.c.l.b16 %v2726
      %v2755 = vunpack.c.l.b16 %v2727
      %v2756 = vunpack.c.l.b16 %v2728
      %v2757 = vunpack.c.l.b16 %v2729
      %v2758 = vunpack.c.l.b16 %v2730
      %v2759 = vunpack.c.l.b16 %v2731
      %v2760 = vunpack.c.l.b16 %v2732
      %v2761 = vpack.c.b16 %v2754, %v2753
      %v2762 = vpack.c.b16 %v2756, %v2755
      %v2763 = vpack.c.b16 %v2758, %v2757
      %v2764 = vpack.c.b16 %v2760, %v2759
      %v2770 = vsel %vm391, %v2741, 0
      %v2773 = vsel %vm391, %v2742, 0
      %v2776 = vsel %vm391, %v2743, 0
      %v2779 = vsel %vm391, %v2744, 0
      %2781 = vmatprep.subr.bf16.mxu0 0
      %2782 = vmatpush1.bf16.msra.mxu0 %v2761
      %2783 = vmatprep.subr.bf16.mxu0 0
      %2784 = vmatpush1.bf16.msra.mxu0 %v2762
      %2785 = vmatprep.subr.bf16.mxu0 0
      %2786 = vmatpush1.bf16.msra.mxu0 %v2763
      %2787 = vmatprep.subr.bf16.mxu0 0
      %2788 = vmatpush1.bf16.msra.mxu0 %v2764
      %2789 = vmatprep.subr.bf16.mxu0 0
      %2790 = vmatpush1.bf16.msra.mxu0 0
      %2791 = vmatprep.subr.bf16.mxu0 0
      %2792 = vmatpush1.bf16.msra.mxu0 0
      %2793 = vmatprep.subr.bf16.mxu0 0
      %2794 = vmatpush1.bf16.msra.mxu0 0
      %2795 = vmatprep.subr.bf16.mxu0 0
      %2796 = vmatpush1.bf16.msra.mxu0 0
      %2797 = vmatprep.subr.bf16.mxu0 0
      %2798 = vmatpush1.bf16.msra.mxu0 0
      %2799 = vmatprep.subr.bf16.mxu0 0
      %2800 = vmatpush1.bf16.msra.mxu0 0
      %2801 = vmatprep.subr.bf16.mxu0 0
      %2802 = vmatpush1.bf16.msra.mxu0 0
      %2803 = vmatprep.subr.bf16.mxu0 0
      %2804 = vmatpush1.bf16.msra.mxu0 0
      %2805 = vmatprep.subr.bf16.mxu0 0
      %2806 = vmatpush1.bf16.msra.mxu0 0
      %2807 = vmatprep.subr.bf16.mxu0 0
      %2808 = vmatpush1.bf16.msra.mxu0 0
      %2809 = vmatprep.subr.bf16.mxu0 0
      %2810 = vmatpush1.bf16.msra.mxu0 0
      %2811 = vmatprep.subr.bf16.mxu0 0
      %2812 = vmatpush1.bf16.msra.mxu0 0
      %2813 = vmatprep.mubr.bf16.mxu0 0
      %2814 = vmatmul.mubr.bf16.gmra.mrb[0].mxu0 %v2770
      %v2815 = vpop.f32.mrb[0].mxu0
      %v2816 = vadd.f32 0.0, %v2815
      %v2817 = vpop.f32.mrb[0].mxu0
      %v2818 = vpop.f32.mrb[0].mxu0
      %v2819 = vadd.f32 0.0, %v2818
      %v2820 = vpop.f32.mrb[0].mxu0
      %2821 = vmatprep.mubr.bf16.mxu0 0
      %2822 = vmatmul.mubr.bf16.gmra.mrb[0].mxu0 %v2773
      %v2823 = vpop.f32.mrb[0].mxu0
      %v2824 = vadd.f32 0.0, %v2823
      %v2825 = vpop.f32.mrb[0].mxu0
      %v2826 = vpop.f32.mrb[0].mxu0
      %v2827 = vadd.f32 0.0, %v2826
      %v2828 = vpop.f32.mrb[0].mxu0
      %2829 = vmatprep.mubr.bf16.mxu0 0
      %2830 = vmatmul.mubr.bf16.gmra.mrb[0].mxu0 %v2776
      %v2831 = vpop.f32.mrb[0].mxu0
      %v2832 = vadd.f32 0.0, %v2831
      %v2833 = vpop.f32.mrb[0].mxu0
      %v2834 = vpop.f32.mrb[0].mxu0
      %v2835 = vadd.f32 0.0, %v2834
      %v2836 = vpop.f32.mrb[0].mxu0
      %2837 = vmatprep.mubr.bf16.mxu0 0
      %2838 = vmatmul.mubr.bf16.gmra.mrb[0].mxu0 %v2779
      %v2839 = vpop.f32.mrb[0].mxu0
      %v2840 = vadd.f32 0.0, %v2839
      %v2841 = vpop.f32.mrb[0].mxu0
      %v2842 = vpop.f32.mrb[0].mxu0
      %v2843 = vadd.f32 0.0, %v2842
      %v2844 = vpop.f32.mrb[0].mxu0
      %2845 = vdwg.mxu0
      %v2846 = vadd.f32 %v2716, %v2816
      %v2847 = vadd.f32 %v2717, %v2819
      %v2848 = vadd.f32 %v2718, %v2824
      %v2849 = vadd.f32 %v2719, %v2827
      %v2850 = vadd.f32 %v2720, %v2832
      %v2851 = vadd.f32 %v2721, %v2835
      %v2852 = vadd.f32 %v2722, %v2840
      %v2853 = vadd.f32 %v2723, %v2843
      %2854 = vst.msk [vmem:[#allocation4] sm:$0xff] %vm391, %v2846
      %2855 = vst.msk [vmem:[#allocation4 + $0x8] sm:$0xff] %vm391, %v2847
      %2856 = vst.msk [vmem:[#allocation4 + $0x10] sm:$0xff] %vm391, %v2848
      %2857 = vst.msk [vmem:[#allocation4 + $0x18] sm:$0xff] %vm391, %v2849
      %2858 = vst.msk [vmem:[#allocation4 + $0x20] sm:$0xff] %vm391, %v2850
      %2859 = vst.msk [vmem:[#allocation4 + $0x28] sm:$0xff] %vm391, %v2851
      %2860 = vst.msk [vmem:[#allocation4 + $0x30] sm:$0xff] %vm391, %v2852
      %2861 = vst.msk [vmem:[#allocation4 + $0x38] sm:$0xff] %vm391, %v2853
      %v2862 = vld [vmem:[#allocation3] sm:$0xe]
      %v2863 = vld [vmem:[#allocation3 + $0x4] sm:$0x1]
      %v2864 = vld [vmem:[#allocation3 + $0x8] sm:$0xe]
      %v2865 = vld [vmem:[#allocation3 + $0xc] sm:$0x1]
      %v2866 = vld [vmem:[#allocation3 + $0x10] sm:$0xe]
      %v2867 = vld [vmem:[#allocation3 + $0x14] sm:$0x1]
      %v2868 = vld [vmem:[#allocation3 + $0x18] sm:$0xe]
      %v2869 = vld [vmem:[#allocation3 + $0x1c] sm:$0x1]
      %v2870 = vld [vmem:[#allocation3 + $0x20] sm:$0xe]
      %v2871 = vld [vmem:[#allocation3 + $0x24] sm:$0x1]
      %v2872 = vld [vmem:[#allocation3 + $0x28] sm:$0xe]
      %v2873 = vld [vmem:[#allocation3 + $0x2c] sm:$0x1]
      %v2874 = vld [vmem:[#allocation3 + $0x30] sm:$0xe]
      %v2875 = vld [vmem:[#allocation3 + $0x34] sm:$0x1]
      %v2876 = vld [vmem:[#allocation3 + $0x38] sm:$0xe]
      %v2877 = vld [vmem:[#allocation3 + $0x3c] sm:$0x1]
      %v2894 = vrot.slane %v2862, 5
      %v2895 = vrot.slane %v2894, 4
      %v2896 = vrot.slane %v2863, 5
      %v2897 = vsel %vm841, %v2895, %v2896
      %v2898 = vrot.slane %v2864, 5
      %v2899 = vrot.slane %v2898, 4
      %v2900 = vrot.slane %v2865, 5
      %v2901 = vsel %vm841, %v2899, %v2900
      %v2902 = vrot.slane %v2866, 5
      %v2903 = vrot.slane %v2902, 4
      %v2904 = vrot.slane %v2867, 5
      %v2905 = vsel %vm841, %v2903, %v2904
      %v2906 = vrot.slane %v2868, 5
      %v2907 = vrot.slane %v2906, 4
      %v2908 = vrot.slane %v2869, 5
      %v2909 = vsel %vm841, %v2907, %v2908
      %v2910 = vrot.slane %v2870, 5
      %v2911 = vrot.slane %v2910, 4
      %v2912 = vrot.slane %v2871, 5
      %v2913 = vsel %vm841, %v2911, %v2912
      %v2914 = vrot.slane %v2872, 5
      %v2915 = vrot.slane %v2914, 4
      %v2916 = vrot.slane %v2873, 5
      %v2917 = vsel %vm841, %v2915, %v2916
      %v2918 = vrot.slane %v2874, 5
      %v2919 = vrot.slane %v2918, 4
      %v2920 = vrot.slane %v2875, 5
      %v2921 = vsel %vm841, %v2919, %v2920
      %v2922 = vrot.slane %v2876, 5
      %v2923 = vrot.slane %v2922, 4
      %v2924 = vrot.slane %v2877, 5
      %v2925 = vsel %vm841, %v2923, %v2924
      %v2926 = vld [vmem:[#allocation4] sm:$0xff]
      %v2927 = vld [vmem:[#allocation4 + $0x8] sm:$0xff]
      %v2928 = vld [vmem:[#allocation4 + $0x10] sm:$0xff]
      %v2929 = vld [vmem:[#allocation4 + $0x18] sm:$0xff]
      %v2930 = vld [vmem:[#allocation4 + $0x20] sm:$0xff]
      %v2931 = vld [vmem:[#allocation4 + $0x28] sm:$0xff]
      %v2932 = vld [vmem:[#allocation4 + $0x30] sm:$0xff]
      %v2933 = vld [vmem:[#allocation4 + $0x38] sm:$0xff]
      %s2934 = scalar_lea.vmem %s3, 64
      %v2935 = vld [vmem:[%s2934] sm:$0xf]
      %v2936 = vld [vmem:[%s2934 + $0x4] sm:$0xf]
      %v2937 = vld [vmem:[%s2934 + $0x8] sm:$0xf]
      %v2938 = vld [vmem:[%s2934 + $0xc] sm:$0xf]
      %v2939 = vld [vmem:[%s2934 + $0x10] sm:$0xf]
      %v2940 = vld [vmem:[%s2934 + $0x14] sm:$0xf]
      %v2941 = vld [vmem:[%s2934 + $0x18] sm:$0xf]
      %v2942 = vld [vmem:[%s2934 + $0x1c] sm:$0xf]
      %v2943 = vunpack.c.l.b16 %v2897
      %v2944 = vunpack.c.l.b16 %v2901
      %v2945 = vunpack.c.l.b16 %v2905
      %v2946 = vunpack.c.l.b16 %v2909
      %v2947 = vunpack.c.l.b16 %v2913
      %v2948 = vunpack.c.l.b16 %v2917
      %v2949 = vunpack.c.l.b16 %v2921
      %v2950 = vunpack.c.l.b16 %v2925
      %v2951 = vpack.c.b16 %v2944, %v2943
      %v2952 = vpack.c.b16 %v2946, %v2945
      %v2953 = vpack.c.b16 %v2948, %v2947
      %v2954 = vpack.c.b16 %v2950, %v2949
      %v2963 = vunpack.c.l.b16 %v2935
      %v2964 = vunpack.c.l.b16 %v2936
      %v2965 = vunpack.c.l.b16 %v2937
      %v2966 = vunpack.c.l.b16 %v2938
      %v2967 = vunpack.c.l.b16 %v2939
      %v2968 = vunpack.c.l.b16 %v2940
      %v2969 = vunpack.c.l.b16 %v2941
      %v2970 = vunpack.c.l.b16 %v2942
      %v2971 = vpack.c.b16 %v2964, %v2963
      %v2972 = vpack.c.b16 %v2966, %v2965
      %v2973 = vpack.c.b16 %v2968, %v2967
      %v2974 = vpack.c.b16 %v2970, %v2969
      %v2980 = vsel %vm391, %v2951, 0
      %v2983 = vsel %vm391, %v2952, 0
      %v2986 = vsel %vm391, %v2953, 0
      %v2989 = vsel %vm391, %v2954, 0
      %2991 = vmatprep.subr.bf16.mxu0 0
      %2992 = vmatpush1.bf16.msra.mxu0 %v2971
      %2993 = vmatprep.subr.bf16.mxu0 0
      %2994 = vmatpush1.bf16.msra.mxu0 %v2972
      %2995 = vmatprep.subr.bf16.mxu0 0
      %2996 = vmatpush1.bf16.msra.mxu0 %v2973
      %2997 = vmatprep.subr.bf16.mxu0 0
      %2998 = vmatpush1.bf16.msra.mxu0 %v2974
      %2999 = vmatprep.subr.bf16.mxu0 0
      %3000 = vmatpush1.bf16.msra.mxu0 0
      %3001 = vmatprep.subr.bf16.mxu0 0
      %3002 = vmatpush1.bf16.msra.mxu0 0
      %3003 = vmatprep.subr.bf16.mxu0 0
      %3004 = vmatpush1.bf16.msra.mxu0 0
      %3005 = vmatprep.subr.bf16.mxu0 0
      %3006 = vmatpush1.bf16.msra.mxu0 0
      %3007 = vmatprep.subr.bf16.mxu0 0
      %3008 = vmatpush1.bf16.msra.mxu0 0
      %3009 = vmatprep.subr.bf16.mxu0 0
      %3010 = vmatpush1.bf16.msra.mxu0 0
      %3011 = vmatprep.subr.bf16.mxu0 0
      %3012 = vmatpush1.bf16.msra.mxu0 0
      %3013 = vmatprep.subr.bf16.mxu0 0
      %3014 = vmatpush1.bf16.msra.mxu0 0
      %3015 = vmatprep.subr.bf16.mxu0 0
      %3016 = vmatpush1.bf16.msra.mxu0 0
      %3017 = vmatprep.subr.bf16.mxu0 0
      %3018 = vmatpush1.bf16.msra.mxu0 0
      %3019 = vmatprep.subr.bf16.mxu0 0
      %3020 = vmatpush1.bf16.msra.mxu0 0
      %3021 = vmatprep.subr.bf16.mxu0 0
      %3022 = vmatpush1.bf16.msra.mxu0 0
      %3023 = vmatprep.mubr.bf16.mxu0 0
      %3024 = vmatmul.mubr.bf16.gmra.mrb[0].mxu0 %v2980
      %v3025 = vpop.f32.mrb[0].mxu0
      %v3026 = vadd.f32 0.0, %v3025
      %v3027 = vpop.f32.mrb[0].mxu0
      %v3028 = vpop.f32.mrb[0].mxu0
      %v3029 = vadd.f32 0.0, %v3028
      %v3030 = vpop.f32.mrb[0].mxu0
      %3031 = vmatprep.mubr.bf16.mxu0 0
      %3032 = vmatmul.mubr.bf16.gmra.mrb[0].mxu0 %v2983
      %v3033 = vpop.f32.mrb[0].mxu0
      %v3034 = vadd.f32 0.0, %v3033
      %v3035 = vpop.f32.mrb[0].mxu0
      %v3036 = vpop.f32.mrb[0].mxu0
      %v3037 = vadd.f32 0.0, %v3036
      %v3038 = vpop.f32.mrb[0].mxu0
      %3039 = vmatprep.mubr.bf16.mxu0 0
      %3040 = vmatmul.mubr.bf16.gmra.mrb[0].mxu0 %v2986
      %v3041 = vpop.f32.mrb[0].mxu0
      %v3042 = vadd.f32 0.0, %v3041
      %v3043 = vpop.f32.mrb[0].mxu0
      %v3044 = vpop.f32.mrb[0].mxu0
      %v3045 = vadd.f32 0.0, %v3044
      %v3046 = vpop.f32.mrb[0].mxu0
      %3047 = vmatprep.mubr.bf16.mxu0 0
      %3048 = vmatmul.mubr.bf16.gmra.mrb[0].mxu0 %v2989
      %v3049 = vpop.f32.mrb[0].mxu0
      %v3050 = vadd.f32 0.0, %v3049
      %v3051 = vpop.f32.mrb[0].mxu0
      %v3052 = vpop.f32.mrb[0].mxu0
      %v3053 = vadd.f32 0.0, %v3052
      %v3054 = vpop.f32.mrb[0].mxu0
      %3055 = vdwg.mxu0
      %v3056 = vadd.f32 %v2926, %v3026
      %v3057 = vadd.f32 %v2927, %v3029
      %v3058 = vadd.f32 %v2928, %v3034
      %v3059 = vadd.f32 %v2929, %v3037
      %v3060 = vadd.f32 %v2930, %v3042
      %v3061 = vadd.f32 %v2931, %v3045
      %v3062 = vadd.f32 %v2932, %v3050
      %v3063 = vadd.f32 %v2933, %v3053
      %3064 = vst.msk [vmem:[#allocation4] sm:$0xff] %vm391, %v3056
      %3065 = vst.msk [vmem:[#allocation4 + $0x8] sm:$0xff] %vm391, %v3057
      %3066 = vst.msk [vmem:[#allocation4 + $0x10] sm:$0xff] %vm391, %v3058
      %3067 = vst.msk [vmem:[#allocation4 + $0x18] sm:$0xff] %vm391, %v3059
      %3068 = vst.msk [vmem:[#allocation4 + $0x20] sm:$0xff] %vm391, %v3060
      %3069 = vst.msk [vmem:[#allocation4 + $0x28] sm:$0xff] %vm391, %v3061
      %3070 = vst.msk [vmem:[#allocation4 + $0x30] sm:$0xff] %vm391, %v3062
      %3071 = vst.msk [vmem:[#allocation4 + $0x38] sm:$0xff] %vm391, %v3063
      %v3072 = vld [vmem:[%s2366] sm:$0xf]
      %v3073 = vld [vmem:[%s2366 + $0x8] sm:$0xf]
      %v3074 = vld [vmem:[%s2366 + $0x10] sm:$0xf]
      %v3075 = vld [vmem:[%s2366 + $0x18] sm:$0xf]
      %v3076 = vld [vmem:[%s2366 + $0x20] sm:$0xf]
      %v3077 = vld [vmem:[%s2366 + $0x28] sm:$0xf]
      %v3078 = vld [vmem:[%s2366 + $0x30] sm:$0xf]
      %v3079 = vld [vmem:[%s2366 + $0x38] sm:$0xf]
      %v3080 = vld [vmem:[#allocation4] sm:$0xff]
      %v3081 = vld [vmem:[#allocation4 + $0x8] sm:$0xff]
      %v3082 = vld [vmem:[#allocation4 + $0x10] sm:$0xff]
      %v3083 = vld [vmem:[#allocation4 + $0x18] sm:$0xff]
      %v3084 = vld [vmem:[#allocation4 + $0x20] sm:$0xff]
      %v3085 = vld [vmem:[#allocation4 + $0x28] sm:$0xff]
      %v3086 = vld [vmem:[#allocation4 + $0x30] sm:$0xff]
      %v3087 = vld [vmem:[#allocation4 + $0x38] sm:$0xff]
      %s3088 = scalar_lea.vmem %s3, 96
      %v3089 = vld [vmem:[%s3088] sm:$0xf]
      %v3090 = vld [vmem:[%s3088 + $0x4] sm:$0xf]
      %v3091 = vld [vmem:[%s3088 + $0x8] sm:$0xf]
      %v3092 = vld [vmem:[%s3088 + $0xc] sm:$0xf]
      %v3093 = vld [vmem:[%s3088 + $0x10] sm:$0xf]
      %v3094 = vld [vmem:[%s3088 + $0x14] sm:$0xf]
      %v3095 = vld [vmem:[%s3088 + $0x18] sm:$0xf]
      %v3096 = vld [vmem:[%s3088 + $0x1c] sm:$0xf]
      %v3105 = vunpack.c.l.b16 %v3072
      %v3106 = vunpack.c.l.b16 %v3073
      %v3107 = vunpack.c.l.b16 %v3074
      %v3108 = vunpack.c.l.b16 %v3075
      %v3109 = vunpack.c.l.b16 %v3076
      %v3110 = vunpack.c.l.b16 %v3077
      %v3111 = vunpack.c.l.b16 %v3078
      %v3112 = vunpack.c.l.b16 %v3079
      %v3113 = vpack.c.b16 %v3106, %v3105
      %v3114 = vpack.c.b16 %v3108, %v3107
      %v3115 = vpack.c.b16 %v3110, %v3109
      %v3116 = vpack.c.b16 %v3112, %v3111
      %v3125 = vunpack.c.l.b16 %v3089
      %v3126 = vunpack.c.l.b16 %v3090
      %v3127 = vunpack.c.l.b16 %v3091
      %v3128 = vunpack.c.l.b16 %v3092
      %v3129 = vunpack.c.l.b16 %v3093
      %v3130 = vunpack.c.l.b16 %v3094
      %v3131 = vunpack.c.l.b16 %v3095
      %v3132 = vunpack.c.l.b16 %v3096
      %v3133 = vpack.c.b16 %v3126, %v3125
      %v3134 = vpack.c.b16 %v3128, %v3127
      %v3135 = vpack.c.b16 %v3130, %v3129
      %v3136 = vpack.c.b16 %v3132, %v3131
      %v3142 = vsel %vm391, %v3113, 0
      %v3145 = vsel %vm391, %v3114, 0
      %v3148 = vsel %vm391, %v3115, 0
      %v3151 = vsel %vm391, %v3116, 0
      %3153 = vmatprep.subr.bf16.mxu0 0
      %3154 = vmatpush1.bf16.msra.mxu0 %v3133
      %3155 = vmatprep.subr.bf16.mxu0 0
      %3156 = vmatpush1.bf16.msra.mxu0 %v3134
      %3157 = vmatprep.subr.bf16.mxu0 0
      %3158 = vmatpush1.bf16.msra.mxu0 %v3135
      %3159 = vmatprep.subr.bf16.mxu0 0
      %3160 = vmatpush1.bf16.msra.mxu0 %v3136
      %3161 = vmatprep.subr.bf16.mxu0 0
      %3162 = vmatpush1.bf16.msra.mxu0 0
      %3163 = vmatprep.subr.bf16.mxu0 0
      %3164 = vmatpush1.bf16.msra.mxu0 0
      %3165 = vmatprep.subr.bf16.mxu0 0
      %3166 = vmatpush1.bf16.msra.mxu0 0
      %3167 = vmatprep.subr.bf16.mxu0 0
      %3168 = vmatpush1.bf16.msra.mxu0 0
      %3169 = vmatprep.subr.bf16.mxu0 0
      %3170 = vmatpush1.bf16.msra.mxu0 0
      %3171 = vmatprep.subr.bf16.mxu0 0
      %3172 = vmatpush1.bf16.msra.mxu0 0
      %3173 = vmatprep.subr.bf16.mxu0 0
      %3174 = vmatpush1.bf16.msra.mxu0 0
      %3175 = vmatprep.subr.bf16.mxu0 0
      %3176 = vmatpush1.bf16.msra.mxu0 0
      %3177 = vmatprep.subr.bf16.mxu0 0
      %3178 = vmatpush1.bf16.msra.mxu0 0
      %3179 = vmatprep.subr.bf16.mxu0 0
      %3180 = vmatpush1.bf16.msra.mxu0 0
      %3181 = vmatprep.subr.bf16.mxu0 0
      %3182 = vmatpush1.bf16.msra.mxu0 0
      %3183 = vmatprep.subr.bf16.mxu0 0
      %3184 = vmatpush1.bf16.msra.mxu0 0
      %3185 = vmatprep.mubr.bf16.mxu0 0
      %3186 = vmatmul.mubr.bf16.gmra.mrb[0].mxu0 %v3142
      %v3187 = vpop.f32.mrb[0].mxu0
      %v3188 = vadd.f32 0.0, %v3187
      %v3189 = vpop.f32.mrb[0].mxu0
      %v3190 = vpop.f32.mrb[0].mxu0
      %v3191 = vadd.f32 0.0, %v3190
      %v3192 = vpop.f32.mrb[0].mxu0
      %3193 = vmatprep.mubr.bf16.mxu0 0
      %3194 = vmatmul.mubr.bf16.gmra.mrb[0].mxu0 %v3145
      %v3195 = vpop.f32.mrb[0].mxu0
      %v3196 = vadd.f32 0.0, %v3195
      %v3197 = vpop.f32.mrb[0].mxu0
      %v3198 = vpop.f32.mrb[0].mxu0
      %v3199 = vadd.f32 0.0, %v3198
      %v3200 = vpop.f32.mrb[0].mxu0
      %3201 = vmatprep.mubr.bf16.mxu0 0
      %3202 = vmatmul.mubr.bf16.gmra.mrb[0].mxu0 %v3148
      %v3203 = vpop.f32.mrb[0].mxu0
      %v3204 = vadd.f32 0.0, %v3203
      %v3205 = vpop.f32.mrb[0].mxu0
      %v3206 = vpop.f32.mrb[0].mxu0
      %v3207 = vadd.f32 0.0, %v3206
      %v3208 = vpop.f32.mrb[0].mxu0
      %3209 = vmatprep.mubr.bf16.mxu0 0
      %3210 = vmatmul.mubr.bf16.gmra.mrb[0].mxu0 %v3151
      %v3211 = vpop.f32.mrb[0].mxu0
      %v3212 = vadd.f32 0.0, %v3211
      %v3213 = vpop.f32.mrb[0].mxu0
      %v3214 = vpop.f32.mrb[0].mxu0
      %v3215 = vadd.f32 0.0, %v3214
      %v3216 = vpop.f32.mrb[0].mxu0
      %3217 = vdwg.mxu0
      %v3218 = vadd.f32 %v3080, %v3188
      %v3219 = vadd.f32 %v3081, %v3191
      %v3220 = vadd.f32 %v3082, %v3196
      %v3221 = vadd.f32 %v3083, %v3199
      %v3222 = vadd.f32 %v3084, %v3204
      %v3223 = vadd.f32 %v3085, %v3207
      %v3224 = vadd.f32 %v3086, %v3212
      %v3225 = vadd.f32 %v3087, %v3215
      %3226 = vst.msk [vmem:[#allocation4] sm:$0xff] %vm391, %v3218
      %3227 = vst.msk [vmem:[#allocation4 + $0x8] sm:$0xff] %vm391, %v3219
      %3228 = vst.msk [vmem:[#allocation4 + $0x10] sm:$0xff] %vm391, %v3220
      %3229 = vst.msk [vmem:[#allocation4 + $0x18] sm:$0xff] %vm391, %v3221
      %3230 = vst.msk [vmem:[#allocation4 + $0x20] sm:$0xff] %vm391, %v3222
      %3231 = vst.msk [vmem:[#allocation4 + $0x28] sm:$0xff] %vm391, %v3223
      %3232 = vst.msk [vmem:[#allocation4 + $0x30] sm:$0xff] %vm391, %v3224
      %3233 = vst.msk [vmem:[#allocation4 + $0x38] sm:$0xff] %vm391, %v3225
      %v3234 = vld [vmem:[%s2366] sm:$0xf]
      %v3235 = vld [vmem:[%s2366 + $0x4] sm:$0x1]
      %v3236 = vld [vmem:[%s2366 + $0x8] sm:$0xf]
      %v3237 = vld [vmem:[%s2366 + $0xc] sm:$0x1]
      %v3238 = vld [vmem:[%s2366 + $0x10] sm:$0xf]
      %v3239 = vld [vmem:[%s2366 + $0x14] sm:$0x1]
      %v3240 = vld [vmem:[%s2366 + $0x18] sm:$0xf]
      %v3241 = vld [vmem:[%s2366 + $0x1c] sm:$0x1]
      %v3242 = vld [vmem:[%s2366 + $0x20] sm:$0xf]
      %v3243 = vld [vmem:[%s2366 + $0x24] sm:$0x1]
      %v3244 = vld [vmem:[%s2366 + $0x28] sm:$0xf]
      %v3245 = vld [vmem:[%s2366 + $0x2c] sm:$0x1]
      %v3246 = vld [vmem:[%s2366 + $0x30] sm:$0xf]
      %v3247 = vld [vmem:[%s2366 + $0x34] sm:$0x1]
      %v3248 = vld [vmem:[%s2366 + $0x38] sm:$0xf]
      %v3249 = vld [vmem:[%s2366 + $0x3c] sm:$0x1]
      %v3251 = vshrl.u32 %v3234, 16
      %v3253 = vrot.slane %v3251, 4
      %v3254 = vshll.u32 %v3234, 16
      %v3256 = vrot.slane %v3254, 5
      %v3257 = vor.u32 %v3253, %v3256
      %v3258 = vrot.slane %v3257, 4
      %v3260 = vshll.u32 %v3235, 16
      %v3262 = vrot.slane %v3260, 5
      %v3263 = vsel %vm564, %v3258, %v3262
      %v3265 = vshrl.u32 %v3236, 16
      %v3267 = vrot.slane %v3265, 4
      %v3268 = vshll.u32 %v3236, 16
      %v3270 = vrot.slane %v3268, 5
      %v3271 = vor.u32 %v3267, %v3270
      %v3272 = vrot.slane %v3271, 4
      %v3274 = vshll.u32 %v3237, 16
      %v3276 = vrot.slane %v3274, 5
      %v3277 = vsel %vm564, %v3272, %v3276
      %v3279 = vshrl.u32 %v3238, 16
      %v3281 = vrot.slane %v3279, 4
      %v3282 = vshll.u32 %v3238, 16
      %v3284 = vrot.slane %v3282, 5
      %v3285 = vor.u32 %v3281, %v3284
      %v3286 = vrot.slane %v3285, 4
      %v3288 = vshll.u32 %v3239, 16
      %v3290 = vrot.slane %v3288, 5
      %v3291 = vsel %vm564, %v3286, %v3290
      %v3293 = vshrl.u32 %v3240, 16
      %v3295 = vrot.slane %v3293, 4
      %v3296 = vshll.u32 %v3240, 16
      %v3298 = vrot.slane %v3296, 5
      %v3299 = vor.u32 %v3295, %v3298
      %v3300 = vrot.slane %v3299, 4
      %v3302 = vshll.u32 %v3241, 16
      %v3304 = vrot.slane %v3302, 5
      %v3305 = vsel %vm564, %v3300, %v3304
      %v3307 = vshrl.u32 %v3242, 16
      %v3309 = vrot.slane %v3307, 4
      %v3310 = vshll.u32 %v3242, 16
      %v3312 = vrot.slane %v3310, 5
      %v3313 = vor.u32 %v3309, %v3312
      %v3314 = vrot.slane %v3313, 4
      %v3316 = vshll.u32 %v3243, 16
      %v3318 = vrot.slane %v3316, 5
      %v3319 = vsel %vm564, %v3314, %v3318
      %v3321 = vshrl.u32 %v3244, 16
      %v3323 = vrot.slane %v3321, 4
      %v3324 = vshll.u32 %v3244, 16
      %v3326 = vrot.slane %v3324, 5
      %v3327 = vor.u32 %v3323, %v3326
      %v3328 = vrot.slane %v3327, 4
      %v3330 = vshll.u32 %v3245, 16
      %v3332 = vrot.slane %v3330, 5
      %v3333 = vsel %vm564, %v3328, %v3332
      %v3335 = vshrl.u32 %v3246, 16
      %v3337 = vrot.slane %v3335, 4
      %v3338 = vshll.u32 %v3246, 16
      %v3340 = vrot.slane %v3338, 5
      %v3341 = vor.u32 %v3337, %v3340
      %v3342 = vrot.slane %v3341, 4
      %v3344 = vshll.u32 %v3247, 16
      %v3346 = vrot.slane %v3344, 5
      %v3347 = vsel %vm564, %v3342, %v3346
      %v3349 = vshrl.u32 %v3248, 16
      %v3351 = vrot.slane %v3349, 4
      %v3352 = vshll.u32 %v3248, 16
      %v3354 = vrot.slane %v3352, 5
      %v3355 = vor.u32 %v3351, %v3354
      %v3356 = vrot.slane %v3355, 4
      %v3358 = vshll.u32 %v3249, 16
      %v3360 = vrot.slane %v3358, 5
      %v3361 = vsel %vm564, %v3356, %v3360
      %v3362 = vld [vmem:[#allocation4] sm:$0xff]
      %v3363 = vld [vmem:[#allocation4 + $0x8] sm:$0xff]
      %v3364 = vld [vmem:[#allocation4 + $0x10] sm:$0xff]
      %v3365 = vld [vmem:[#allocation4 + $0x18] sm:$0xff]
      %v3366 = vld [vmem:[#allocation4 + $0x20] sm:$0xff]
      %v3367 = vld [vmem:[#allocation4 + $0x28] sm:$0xff]
      %v3368 = vld [vmem:[#allocation4 + $0x30] sm:$0xff]
      %v3369 = vld [vmem:[#allocation4 + $0x38] sm:$0xff]
      %s3370 = scalar_lea.vmem %s3, 128
      %v3371 = vld [vmem:[%s3370] sm:$0xf]
      %v3372 = vld [vmem:[%s3370 + $0x4] sm:$0xf]
      %v3373 = vld [vmem:[%s3370 + $0x8] sm:$0xf]
      %v3374 = vld [vmem:[%s3370 + $0xc] sm:$0xf]
      %v3375 = vld [vmem:[%s3370 + $0x10] sm:$0xf]
      %v3376 = vld [vmem:[%s3370 + $0x14] sm:$0xf]
      %v3377 = vld [vmem:[%s3370 + $0x18] sm:$0xf]
      %v3378 = vld [vmem:[%s3370 + $0x1c] sm:$0xf]
      %v3379 = vunpack.c.l.b16 %v3263
      %v3380 = vunpack.c.l.b16 %v3277
      %v3381 = vunpack.c.l.b16 %v3291
      %v3382 = vunpack.c.l.b16 %v3305
      %v3383 = vunpack.c.l.b16 %v3319
      %v3384 = vunpack.c.l.b16 %v3333
      %v3385 = vunpack.c.l.b16 %v3347
      %v3386 = vunpack.c.l.b16 %v3361
      %v3387 = vpack.c.b16 %v3380, %v3379
      %v3388 = vpack.c.b16 %v3382, %v3381
      %v3389 = vpack.c.b16 %v3384, %v3383
      %v3390 = vpack.c.b16 %v3386, %v3385
      %v3399 = vunpack.c.l.b16 %v3371
      %v3400 = vunpack.c.l.b16 %v3372
      %v3401 = vunpack.c.l.b16 %v3373
      %v3402 = vunpack.c.l.b16 %v3374
      %v3403 = vunpack.c.l.b16 %v3375
      %v3404 = vunpack.c.l.b16 %v3376
      %v3405 = vunpack.c.l.b16 %v3377
      %v3406 = vunpack.c.l.b16 %v3378
      %v3407 = vpack.c.b16 %v3400, %v3399
      %v3408 = vpack.c.b16 %v3402, %v3401
      %v3409 = vpack.c.b16 %v3404, %v3403
      %v3410 = vpack.c.b16 %v3406, %v3405
      %v3416 = vsel %vm391, %v3387, 0
      %v3419 = vsel %vm391, %v3388, 0
      %v3422 = vsel %vm391, %v3389, 0
      %v3425 = vsel %vm391, %v3390, 0
      %3427 = vmatprep.subr.bf16.mxu0 0
      %3428 = vmatpush1.bf16.msra.mxu0 %v3407
      %3429 = vmatprep.subr.bf16.mxu0 0
      %3430 = vmatpush1.bf16.msra.mxu0 %v3408
      %3431 = vmatprep.subr.bf16.mxu0 0
      %3432 = vmatpush1.bf16.msra.mxu0 %v3409
      %3433 = vmatprep.subr.bf16.mxu0 0
      %3434 = vmatpush1.bf16.msra.mxu0 %v3410
      %3435 = vmatprep.subr.bf16.mxu0 0
      %3436 = vmatpush1.bf16.msra.mxu0 0
      %3437 = vmatprep.subr.bf16.mxu0 0
      %3438 = vmatpush1.bf16.msra.mxu0 0
      %3439 = vmatprep.subr.bf16.mxu0 0
      %3440 = vmatpush1.bf16.msra.mxu0 0
      %3441 = vmatprep.subr.bf16.mxu0 0
      %3442 = vmatpush1.bf16.msra.mxu0 0
      %3443 = vmatprep.subr.bf16.mxu0 0
      %3444 = vmatpush1.bf16.msra.mxu0 0
      %3445 = vmatprep.subr.bf16.mxu0 0
      %3446 = vmatpush1.bf16.msra.mxu0 0
      %3447 = vmatprep.subr.bf16.mxu0 0
      %3448 = vmatpush1.bf16.msra.mxu0 0
      %3449 = vmatprep.subr.bf16.mxu0 0
      %3450 = vmatpush1.bf16.msra.mxu0 0
      %3451 = vmatprep.subr.bf16.mxu0 0
      %3452 = vmatpush1.bf16.msra.mxu0 0
      %3453 = vmatprep.subr.bf16.mxu0 0
      %3454 = vmatpush1.bf16.msra.mxu0 0
      %3455 = vmatprep.subr.bf16.mxu0 0
      %3456 = vmatpush1.bf16.msra.mxu0 0
      %3457 = vmatprep.subr.bf16.mxu0 0
      %3458 = vmatpush1.bf16.msra.mxu0 0
      %3459 = vmatprep.mubr.bf16.mxu0 0
      %3460 = vmatmul.mubr.bf16.gmra.mrb[0].mxu0 %v3416
      %v3461 = vpop.f32.mrb[0].mxu0
      %v3462 = vadd.f32 0.0, %v3461
      %v3463 = vpop.f32.mrb[0].mxu0
      %v3464 = vpop.f32.mrb[0].mxu0
      %v3465 = vadd.f32 0.0, %v3464
      %v3466 = vpop.f32.mrb[0].mxu0
      %3467 = vmatprep.mubr.bf16.mxu0 0
      %3468 = vmatmul.mubr.bf16.gmra.mrb[0].mxu0 %v3419
      %v3469 = vpop.f32.mrb[0].mxu0
      %v3470 = vadd.f32 0.0, %v3469
      %v3471 = vpop.f32.mrb[0].mxu0
      %v3472 = vpop.f32.mrb[0].mxu0
      %v3473 = vadd.f32 0.0, %v3472
      %v3474 = vpop.f32.mrb[0].mxu0
      %3475 = vmatprep.mubr.bf16.mxu0 0
      %3476 = vmatmul.mubr.bf16.gmra.mrb[0].mxu0 %v3422
      %v3477 = vpop.f32.mrb[0].mxu0
      %v3478 = vadd.f32 0.0, %v3477
      %v3479 = vpop.f32.mrb[0].mxu0
      %v3480 = vpop.f32.mrb[0].mxu0
      %v3481 = vadd.f32 0.0, %v3480
      %v3482 = vpop.f32.mrb[0].mxu0
      %3483 = vmatprep.mubr.bf16.mxu0 0
      %3484 = vmatmul.mubr.bf16.gmra.mrb[0].mxu0 %v3425
      %v3485 = vpop.f32.mrb[0].mxu0
      %v3486 = vadd.f32 0.0, %v3485
      %v3487 = vpop.f32.mrb[0].mxu0
      %v3488 = vpop.f32.mrb[0].mxu0
      %v3489 = vadd.f32 0.0, %v3488
      %v3490 = vpop.f32.mrb[0].mxu0
      %3491 = vdwg.mxu0
      %v3492 = vadd.f32 %v3362, %v3462
      %v3493 = vadd.f32 %v3363, %v3465
      %v3494 = vadd.f32 %v3364, %v3470
      %v3495 = vadd.f32 %v3365, %v3473
      %v3496 = vadd.f32 %v3366, %v3478
      %v3497 = vadd.f32 %v3367, %v3481
      %v3498 = vadd.f32 %v3368, %v3486
      %v3499 = vadd.f32 %v3369, %v3489
      %3500 = vst.msk [vmem:[#allocation4] sm:$0xff] %vm391, %v3492
      %3501 = vst.msk [vmem:[#allocation4 + $0x8] sm:$0xff] %vm391, %v3493
      %3502 = vst.msk [vmem:[#allocation4 + $0x10] sm:$0xff] %vm391, %v3494
      %3503 = vst.msk [vmem:[#allocation4 + $0x18] sm:$0xff] %vm391, %v3495
      %3504 = vst.msk [vmem:[#allocation4 + $0x20] sm:$0xff] %vm391, %v3496
      %3505 = vst.msk [vmem:[#allocation4 + $0x28] sm:$0xff] %vm391, %v3497
      %3506 = vst.msk [vmem:[#allocation4 + $0x30] sm:$0xff] %vm391, %v3498
      %3507 = vst.msk [vmem:[#allocation4 + $0x38] sm:$0xff] %vm391, %v3499
      %v3508 = vld [vmem:[%s2366] sm:$0xe]
      %v3509 = vld [vmem:[%s2366 + $0x4] sm:$0x1]
      %v3510 = vld [vmem:[%s2366 + $0x8] sm:$0xe]
      %v3511 = vld [vmem:[%s2366 + $0xc] sm:$0x1]
      %v3512 = vld [vmem:[%s2366 + $0x10] sm:$0xe]
      %v3513 = vld [vmem:[%s2366 + $0x14] sm:$0x1]
      %v3514 = vld [vmem:[%s2366 + $0x18] sm:$0xe]
      %v3515 = vld [vmem:[%s2366 + $0x1c] sm:$0x1]
      %v3516 = vld [vmem:[%s2366 + $0x20] sm:$0xe]
      %v3517 = vld [vmem:[%s2366 + $0x24] sm:$0x1]
      %v3518 = vld [vmem:[%s2366 + $0x28] sm:$0xe]
      %v3519 = vld [vmem:[%s2366 + $0x2c] sm:$0x1]
      %v3520 = vld [vmem:[%s2366 + $0x30] sm:$0xe]
      %v3521 = vld [vmem:[%s2366 + $0x34] sm:$0x1]
      %v3522 = vld [vmem:[%s2366 + $0x38] sm:$0xe]
      %v3523 = vld [vmem:[%s2366 + $0x3c] sm:$0x1]
      %v3540 = vrot.slane %v3508, 5
      %v3541 = vrot.slane %v3540, 4
      %v3542 = vrot.slane %v3509, 5
      %v3543 = vsel %vm841, %v3541, %v3542
      %v3544 = vrot.slane %v3510, 5
      %v3545 = vrot.slane %v3544, 4
      %v3546 = vrot.slane %v3511, 5
      %v3547 = vsel %vm841, %v3545, %v3546
      %v3548 = vrot.slane %v3512, 5
      %v3549 = vrot.slane %v3548, 4
      %v3550 = vrot.slane %v3513, 5
      %v3551 = vsel %vm841, %v3549, %v3550
      %v3552 = vrot.slane %v3514, 5
      %v3553 = vrot.slane %v3552, 4
      %v3554 = vrot.slane %v3515, 5
      %v3555 = vsel %vm841, %v3553, %v3554
      %v3556 = vrot.slane %v3516, 5
      %v3557 = vrot.slane %v3556, 4
      %v3558 = vrot.slane %v3517, 5
      %v3559 = vsel %vm841, %v3557, %v3558
      %v3560 = vrot.slane %v3518, 5
      %v3561 = vrot.slane %v3560, 4
      %v3562 = vrot.slane %v3519, 5
      %v3563 = vsel %vm841, %v3561, %v3562
      %v3564 = vrot.slane %v3520, 5
      %v3565 = vrot.slane %v3564, 4
      %v3566 = vrot.slane %v3521, 5
      %v3567 = vsel %vm841, %v3565, %v3566
      %v3568 = vrot.slane %v3522, 5
      %v3569 = vrot.slane %v3568, 4
      %v3570 = vrot.slane %v3523, 5
      %v3571 = vsel %vm841, %v3569, %v3570
      %v3572 = vld [vmem:[#allocation4] sm:$0xff]
      %v3573 = vld [vmem:[#allocation4 + $0x8] sm:$0xff]
      %v3574 = vld [vmem:[#allocation4 + $0x10] sm:$0xff]
      %v3575 = vld [vmem:[#allocation4 + $0x18] sm:$0xff]
      %v3576 = vld [vmem:[#allocation4 + $0x20] sm:$0xff]
      %v3577 = vld [vmem:[#allocation4 + $0x28] sm:$0xff]
      %v3578 = vld [vmem:[#allocation4 + $0x30] sm:$0xff]
      %v3579 = vld [vmem:[#allocation4 + $0x38] sm:$0xff]
      %s3580 = scalar_lea.vmem %s3, 160
      %v3581 = vld [vmem:[%s3580] sm:$0xf]
      %v3582 = vld [vmem:[%s3580 + $0x4] sm:$0xf]
      %v3583 = vld [vmem:[%s3580 + $0x8] sm:$0xf]
      %v3584 = vld [vmem:[%s3580 + $0xc] sm:$0xf]
      %v3585 = vld [vmem:[%s3580 + $0x10] sm:$0xf]
      %v3586 = vld [vmem:[%s3580 + $0x14] sm:$0xf]
      %v3587 = vld [vmem:[%s3580 + $0x18] sm:$0xf]
      %v3588 = vld [vmem:[%s3580 + $0x1c] sm:$0xf]
      %v3589 = vunpack.c.l.b16 %v3543
      %v3590 = vunpack.c.l.b16 %v3547
      %v3591 = vunpack.c.l.b16 %v3551
      %v3592 = vunpack.c.l.b16 %v3555
      %v3593 = vunpack.c.l.b16 %v3559
      %v3594 = vunpack.c.l.b16 %v3563
      %v3595 = vunpack.c.l.b16 %v3567
      %v3596 = vunpack.c.l.b16 %v3571
      %v3597 = vpack.c.b16 %v3590, %v3589
      %v3598 = vpack.c.b16 %v3592, %v3591
      %v3599 = vpack.c.b16 %v3594, %v3593
      %v3600 = vpack.c.b16 %v3596, %v3595
      %v3609 = vunpack.c.l.b16 %v3581
      %v3610 = vunpack.c.l.b16 %v3582
      %v3611 = vunpack.c.l.b16 %v3583
      %v3612 = vunpack.c.l.b16 %v3584
      %v3613 = vunpack.c.l.b16 %v3585
      %v3614 = vunpack.c.l.b16 %v3586
      %v3615 = vunpack.c.l.b16 %v3587
      %v3616 = vunpack.c.l.b16 %v3588
      %v3617 = vpack.c.b16 %v3610, %v3609
      %v3618 = vpack.c.b16 %v3612, %v3611
      %v3619 = vpack.c.b16 %v3614, %v3613
      %v3620 = vpack.c.b16 %v3616, %v3615
      %v3626 = vsel %vm391, %v3597, 0
      %v3629 = vsel %vm391, %v3598, 0
      %v3632 = vsel %vm391, %v3599, 0
      %v3635 = vsel %vm391, %v3600, 0
      %3637 = vmatprep.subr.bf16.mxu0 0
      %3638 = vmatpush1.bf16.msra.mxu0 %v3617
      %3639 = vmatprep.subr.bf16.mxu0 0
      %3640 = vmatpush1.bf16.msra.mxu0 %v3618
      %3641 = vmatprep.subr.bf16.mxu0 0
      %3642 = vmatpush1.bf16.msra.mxu0 %v3619
      %3643 = vmatprep.subr.bf16.mxu0 0
      %3644 = vmatpush1.bf16.msra.mxu0 %v3620
      %3645 = vmatprep.subr.bf16.mxu0 0
      %3646 = vmatpush1.bf16.msra.mxu0 0
      %3647 = vmatprep.subr.bf16.mxu0 0
      %3648 = vmatpush1.bf16.msra.mxu0 0
      %3649 = vmatprep.subr.bf16.mxu0 0
      %3650 = vmatpush1.bf16.msra.mxu0 0
      %3651 = vmatprep.subr.bf16.mxu0 0
      %3652 = vmatpush1.bf16.msra.mxu0 0
      %3653 = vmatprep.subr.bf16.mxu0 0
      %3654 = vmatpush1.bf16.msra.mxu0 0
      %3655 = vmatprep.subr.bf16.mxu0 0
      %3656 = vmatpush1.bf16.msra.mxu0 0
      %3657 = vmatprep.subr.bf16.mxu0 0
      %3658 = vmatpush1.bf16.msra.mxu0 0
      %3659 = vmatprep.subr.bf16.mxu0 0
      %3660 = vmatpush1.bf16.msra.mxu0 0
      %3661 = vmatprep.subr.bf16.mxu0 0
      %3662 = vmatpush1.bf16.msra.mxu0 0
      %3663 = vmatprep.subr.bf16.mxu0 0
      %3664 = vmatpush1.bf16.msra.mxu0 0
      %3665 = vmatprep.subr.bf16.mxu0 0
      %3666 = vmatpush1.bf16.msra.mxu0 0
      %3667 = vmatprep.subr.bf16.mxu0 0
      %3668 = vmatpush1.bf16.msra.mxu0 0
      %3669 = vmatprep.mubr.bf16.mxu0 0
      %3670 = vmatmul.mubr.bf16.gmra.mrb[0].mxu0 %v3626
      %v3671 = vpop.f32.mrb[0].mxu0
      %v3672 = vadd.f32 0.0, %v3671
      %v3673 = vpop.f32.mrb[0].mxu0
      %v3674 = vpop.f32.mrb[0].mxu0
      %v3675 = vadd.f32 0.0, %v3674
      %v3676 = vpop.f32.mrb[0].mxu0
      %3677 = vmatprep.mubr.bf16.mxu0 0
      %3678 = vmatmul.mubr.bf16.gmra.mrb[0].mxu0 %v3629
      %v3679 = vpop.f32.mrb[0].mxu0
      %v3680 = vadd.f32 0.0, %v3679
      %v3681 = vpop.f32.mrb[0].mxu0
      %v3682 = vpop.f32.mrb[0].mxu0
      %v3683 = vadd.f32 0.0, %v3682
      %v3684 = vpop.f32.mrb[0].mxu0
      %3685 = vmatprep.mubr.bf16.mxu0 0
      %3686 = vmatmul.mubr.bf16.gmra.mrb[0].mxu0 %v3632
      %v3687 = vpop.f32.mrb[0].mxu0
      %v3688 = vadd.f32 0.0, %v3687
      %v3689 = vpop.f32.mrb[0].mxu0
      %v3690 = vpop.f32.mrb[0].mxu0
      %v3691 = vadd.f32 0.0, %v3690
      %v3692 = vpop.f32.mrb[0].mxu0
      %3693 = vmatprep.mubr.bf16.mxu0 0
      %3694 = vmatmul.mubr.bf16.gmra.mrb[0].mxu0 %v3635
      %v3695 = vpop.f32.mrb[0].mxu0
      %v3696 = vadd.f32 0.0, %v3695
      %v3697 = vpop.f32.mrb[0].mxu0
      %v3698 = vpop.f32.mrb[0].mxu0
      %v3699 = vadd.f32 0.0, %v3698
      %v3700 = vpop.f32.mrb[0].mxu0
      %3701 = vdwg.mxu0
      %v3702 = vadd.f32 %v3572, %v3672
      %v3703 = vadd.f32 %v3573, %v3675
      %v3704 = vadd.f32 %v3574, %v3680
      %v3705 = vadd.f32 %v3575, %v3683
      %v3706 = vadd.f32 %v3576, %v3688
      %v3707 = vadd.f32 %v3577, %v3691
      %v3708 = vadd.f32 %v3578, %v3696
      %v3709 = vadd.f32 %v3579, %v3699
      %3710 = vst.msk [vmem:[#allocation4] sm:$0xff] %vm391, %v3702
      %3711 = vst.msk [vmem:[#allocation4 + $0x8] sm:$0xff] %vm391, %v3703
      %3712 = vst.msk [vmem:[#allocation4 + $0x10] sm:$0xff] %vm391, %v3704
      %3713 = vst.msk [vmem:[#allocation4 + $0x18] sm:$0xff] %vm391, %v3705
      %3714 = vst.msk [vmem:[#allocation4 + $0x20] sm:$0xff] %vm391, %v3706
      %3715 = vst.msk [vmem:[#allocation4 + $0x28] sm:$0xff] %vm391, %v3707
      %3716 = vst.msk [vmem:[#allocation4 + $0x30] sm:$0xff] %vm391, %v3708
      %3717 = vst.msk [vmem:[#allocation4 + $0x38] sm:$0xff] %vm391, %v3709
      %s3718 = scalar_lea.vmem [#allocation3], 16
      %v3719 = vld [vmem:[%s3718] sm:$0xf]
      %v3720 = vld [vmem:[%s3718 + $0x8] sm:$0xf]
      %v3721 = vld [vmem:[%s3718 + $0x10] sm:$0xf]
      %v3722 = vld [vmem:[%s3718 + $0x18] sm:$0xf]
      %v3723 = vld [vmem:[%s3718 + $0x20] sm:$0xf]
      %v3724 = vld [vmem:[%s3718 + $0x28] sm:$0xf]
      %v3725 = vld [vmem:[%s3718 + $0x30] sm:$0xf]
      %v3726 = vld [vmem:[%s3718 + $0x38] sm:$0xf]
      %v3727 = vld [vmem:[#allocation4] sm:$0xff]
      %v3728 = vld [vmem:[#allocation4 + $0x8] sm:$0xff]
      %v3729 = vld [vmem:[#allocation4 + $0x10] sm:$0xff]
      %v3730 = vld [vmem:[#allocation4 + $0x18] sm:$0xff]
      %v3731 = vld [vmem:[#allocation4 + $0x20] sm:$0xff]
      %v3732 = vld [vmem:[#allocation4 + $0x28] sm:$0xff]
      %v3733 = vld [vmem:[#allocation4 + $0x30] sm:$0xff]
      %v3734 = vld [vmem:[#allocation4 + $0x38] sm:$0xff]
      %s3735 = scalar_lea.vmem %s3, 192
      %v3736 = vld [vmem:[%s3735] sm:$0xf]
      %v3737 = vld [vmem:[%s3735 + $0x4] sm:$0xf]
      %v3738 = vld [vmem:[%s3735 + $0x8] sm:$0xf]
      %v3739 = vld [vmem:[%s3735 + $0xc] sm:$0xf]
      %v3740 = vld [vmem:[%s3735 + $0x10] sm:$0xf]
      %v3741 = vld [vmem:[%s3735 + $0x14] sm:$0xf]
      %v3742 = vld [vmem:[%s3735 + $0x18] sm:$0xf]
      %v3743 = vld [vmem:[%s3735 + $0x1c] sm:$0xf]
      %v3752 = vunpack.c.l.b16 %v3719
      %v3753 = vunpack.c.l.b16 %v3720
      %v3754 = vunpack.c.l.b16 %v3721
      %v3755 = vunpack.c.l.b16 %v3722
      %v3756 = vunpack.c.l.b16 %v3723
      %v3757 = vunpack.c.l.b16 %v3724
      %v3758 = vunpack.c.l.b16 %v3725
      %v3759 = vunpack.c.l.b16 %v3726
      %v3760 = vpack.c.b16 %v3753, %v3752
      %v3761 = vpack.c.b16 %v3755, %v3754
      %v3762 = vpack.c.b16 %v3757, %v3756
      %v3763 = vpack.c.b16 %v3759, %v3758
      %v3772 = vunpack.c.l.b16 %v3736
      %v3773 = vunpack.c.l.b16 %v3737
      %v3774 = vunpack.c.l.b16 %v3738
      %v3775 = vunpack.c.l.b16 %v3739
      %v3776 = vunpack.c.l.b16 %v3740
      %v3777 = vunpack.c.l.b16 %v3741
      %v3778 = vunpack.c.l.b16 %v3742
      %v3779 = vunpack.c.l.b16 %v3743
      %v3780 = vpack.c.b16 %v3773, %v3772
      %v3781 = vpack.c.b16 %v3775, %v3774
      %v3782 = vpack.c.b16 %v3777, %v3776
      %v3783 = vpack.c.b16 %v3779, %v3778
      %v3789 = vsel %vm391, %v3760, 0
      %v3792 = vsel %vm391, %v3761, 0
      %v3795 = vsel %vm391, %v3762, 0
      %v3798 = vsel %vm391, %v3763, 0
      %3800 = vmatprep.subr.bf16.mxu0 0
      %3801 = vmatpush1.bf16.msra.mxu0 %v3780
      %3802 = vmatprep.subr.bf16.mxu0 0
      %3803 = vmatpush1.bf16.msra.mxu0 %v3781
      %3804 = vmatprep.subr.bf16.mxu0 0
      %3805 = vmatpush1.bf16.msra.mxu0 %v3782
      %3806 = vmatprep.subr.bf16.mxu0 0
      %3807 = vmatpush1.bf16.msra.mxu0 %v3783
      %3808 = vmatprep.subr.bf16.mxu0 0
      %3809 = vmatpush1.bf16.msra.mxu0 0
      %3810 = vmatprep.subr.bf16.mxu0 0
      %3811 = vmatpush1.bf16.msra.mxu0 0
      %3812 = vmatprep.subr.bf16.mxu0 0
      %3813 = vmatpush1.bf16.msra.mxu0 0
      %3814 = vmatprep.subr.bf16.mxu0 0
      %3815 = vmatpush1.bf16.msra.mxu0 0
      %3816 = vmatprep.subr.bf16.mxu0 0
      %3817 = vmatpush1.bf16.msra.mxu0 0
      %3818 = vmatprep.subr.bf16.mxu0 0
      %3819 = vmatpush1.bf16.msra.mxu0 0
      %3820 = vmatprep.subr.bf16.mxu0 0
      %3821 = vmatpush1.bf16.msra.mxu0 0
      %3822 = vmatprep.subr.bf16.mxu0 0
      %3823 = vmatpush1.bf16.msra.mxu0 0
      %3824 = vmatprep.subr.bf16.mxu0 0
      %3825 = vmatpush1.bf16.msra.mxu0 0
      %3826 = vmatprep.subr.bf16.mxu0 0
      %3827 = vmatpush1.bf16.msra.mxu0 0
      %3828 = vmatprep.subr.bf16.mxu0 0
      %3829 = vmatpush1.bf16.msra.mxu0 0
      %3830 = vmatprep.subr.bf16.mxu0 0
      %3831 = vmatpush1.bf16.msra.mxu0 0
      %3832 = vmatprep.mubr.bf16.mxu0 0
      %3833 = vmatmul.mubr.bf16.gmra.mrb[0].mxu0 %v3789
      %v3834 = vpop.f32.mrb[0].mxu0
      %v3835 = vadd.f32 0.0, %v3834
      %v3836 = vpop.f32.mrb[0].mxu0
      %v3837 = vpop.f32.mrb[0].mxu0
      %v3838 = vadd.f32 0.0, %v3837
      %v3839 = vpop.f32.mrb[0].mxu0
      %3840 = vmatprep.mubr.bf16.mxu0 0
      %3841 = vmatmul.mubr.bf16.gmra.mrb[0].mxu0 %v3792
      %v3842 = vpop.f32.mrb[0].mxu0
      %v3843 = vadd.f32 0.0, %v3842
      %v3844 = vpop.f32.mrb[0].mxu0
      %v3845 = vpop.f32.mrb[0].mxu0
      %v3846 = vadd.f32 0.0, %v3845
      %v3847 = vpop.f32.mrb[0].mxu0
      %3848 = vmatprep.mubr.bf16.mxu0 0
      %3849 = vmatmul.mubr.bf16.gmra.mrb[0].mxu0 %v3795
      %v3850 = vpop.f32.mrb[0].mxu0
      %v3851 = vadd.f32 0.0, %v3850
      %v3852 = vpop.f32.mrb[0].mxu0
      %v3853 = vpop.f32.mrb[0].mxu0
      %v3854 = vadd.f32 0.0, %v3853
      %v3855 = vpop.f32.mrb[0].mxu0
      %3856 = vmatprep.mubr.bf16.mxu0 0
      %3857 = vmatmul.mubr.bf16.gmra.mrb[0].mxu0 %v3798
      %v3858 = vpop.f32.mrb[0].mxu0
      %v3859 = vadd.f32 0.0, %v3858
      %v3860 = vpop.f32.mrb[0].mxu0
      %v3861 = vpop.f32.mrb[0].mxu0
      %v3862 = vadd.f32 0.0, %v3861
      %v3863 = vpop.f32.mrb[0].mxu0
      %3864 = vdwg.mxu0
      %v3865 = vadd.f32 %v3727, %v3835
      %v3866 = vadd.f32 %v3728, %v3838
      %v3867 = vadd.f32 %v3729, %v3843
      %v3868 = vadd.f32 %v3730, %v3846
      %v3869 = vadd.f32 %v3731, %v3851
      %v3870 = vadd.f32 %v3732, %v3854
      %v3871 = vadd.f32 %v3733, %v3859
      %v3872 = vadd.f32 %v3734, %v3862
      %3873 = vst.msk [vmem:[#allocation4] sm:$0xff] %vm391, %v3865
      %3874 = vst.msk [vmem:[#allocation4 + $0x8] sm:$0xff] %vm391, %v3866
      %3875 = vst.msk [vmem:[#allocation4 + $0x10] sm:$0xff] %vm391, %v3867
      %3876 = vst.msk [vmem:[#allocation4 + $0x18] sm:$0xff] %vm391, %v3868
      %3877 = vst.msk [vmem:[#allocation4 + $0x20] sm:$0xff] %vm391, %v3869
      %3878 = vst.msk [vmem:[#allocation4 + $0x28] sm:$0xff] %vm391, %v3870
      %3879 = vst.msk [vmem:[#allocation4 + $0x30] sm:$0xff] %vm391, %v3871
      %3880 = vst.msk [vmem:[#allocation4 + $0x38] sm:$0xff] %vm391, %v3872
      %v3881 = vld [vmem:[%s3718] sm:$0xf]
      %v3882 = vld [vmem:[%s3718 + $0x4] sm:$0x1]
      %v3883 = vld [vmem:[%s3718 + $0x8] sm:$0xf]
      %v3884 = vld [vmem:[%s3718 + $0xc] sm:$0x1]
      %v3885 = vld [vmem:[%s3718 + $0x10] sm:$0xf]
      %v3886 = vld [vmem:[%s3718 + $0x14] sm:$0x1]
      %v3887 = vld [vmem:[%s3718 + $0x18] sm:$0xf]
      %v3888 = vld [vmem:[%s3718 + $0x1c] sm:$0x1]
      %v3889 = vld [vmem:[%s3718 + $0x20] sm:$0xf]
      %v3890 = vld [vmem:[%s3718 + $0x24] sm:$0x1]
      %v3891 = vld [vmem:[%s3718 + $0x28] sm:$0xf]
      %v3892 = vld [vmem:[%s3718 + $0x2c] sm:$0x1]
      %v3893 = vld [vmem:[%s3718 + $0x30] sm:$0xf]
      %v3894 = vld [vmem:[%s3718 + $0x34] sm:$0x1]
      %v3895 = vld [vmem:[%s3718 + $0x38] sm:$0xf]
      %v3896 = vld [vmem:[%s3718 + $0x3c] sm:$0x1]
      %v3898 = vshrl.u32 %v3881, 16
      %v3900 = vrot.slane %v3898, 4
      %v3901 = vshll.u32 %v3881, 16
      %v3903 = vrot.slane %v3901, 5
      %v3904 = vor.u32 %v3900, %v3903
      %v3905 = vrot.slane %v3904, 4
      %v3907 = vshll.u32 %v3882, 16
      %v3909 = vrot.slane %v3907, 5
      %v3910 = vsel %vm564, %v3905, %v3909
      %v3912 = vshrl.u32 %v3883, 16
      %v3914 = vrot.slane %v3912, 4
      %v3915 = vshll.u32 %v3883, 16
      %v3917 = vrot.slane %v3915, 5
      %v3918 = vor.u32 %v3914, %v3917
      %v3919 = vrot.slane %v3918, 4
      %v3921 = vshll.u32 %v3884, 16
      %v3923 = vrot.slane %v3921, 5
      %v3924 = vsel %vm564, %v3919, %v3923
      %v3926 = vshrl.u32 %v3885, 16
      %v3928 = vrot.slane %v3926, 4
      %v3929 = vshll.u32 %v3885, 16
      %v3931 = vrot.slane %v3929, 5
      %v3932 = vor.u32 %v3928, %v3931
      %v3933 = vrot.slane %v3932, 4
      %v3935 = vshll.u32 %v3886, 16
      %v3937 = vrot.slane %v3935, 5
      %v3938 = vsel %vm564, %v3933, %v3937
      %v3940 = vshrl.u32 %v3887, 16
      %v3942 = vrot.slane %v3940, 4
      %v3943 = vshll.u32 %v3887, 16
      %v3945 = vrot.slane %v3943, 5
      %v3946 = vor.u32 %v3942, %v3945
      %v3947 = vrot.slane %v3946, 4
      %v3949 = vshll.u32 %v3888, 16
      %v3951 = vrot.slane %v3949, 5
      %v3952 = vsel %vm564, %v3947, %v3951
      %v3954 = vshrl.u32 %v3889, 16
      %v3956 = vrot.slane %v3954, 4
      %v3957 = vshll.u32 %v3889, 16
      %v3959 = vrot.slane %v3957, 5
      %v3960 = vor.u32 %v3956, %v3959
      %v3961 = vrot.slane %v3960, 4
      %v3963 = vshll.u32 %v3890, 16
      %v3965 = vrot.slane %v3963, 5
      %v3966 = vsel %vm564, %v3961, %v3965
      %v3968 = vshrl.u32 %v3891, 16
      %v3970 = vrot.slane %v3968, 4
      %v3971 = vshll.u32 %v3891, 16
      %v3973 = vrot.slane %v3971, 5
      %v3974 = vor.u32 %v3970, %v3973
      %v3975 = vrot.slane %v3974, 4
      %v3977 = vshll.u32 %v3892, 16
      %v3979 = vrot.slane %v3977, 5
      %v3980 = vsel %vm564, %v3975, %v3979
      %v3982 = vshrl.u32 %v3893, 16
      %v3984 = vrot.slane %v3982, 4
      %v3985 = vshll.u32 %v3893, 16
      %v3987 = vrot.slane %v3985, 5
      %v3988 = vor.u32 %v3984, %v3987
      %v3989 = vrot.slane %v3988, 4
      %v3991 = vshll.u32 %v3894, 16
      %v3993 = vrot.slane %v3991, 5
      %v3994 = vsel %vm564, %v3989, %v3993
      %v3996 = vshrl.u32 %v3895, 16
      %v3998 = vrot.slane %v3996, 4
      %v3999 = vshll.u32 %v3895, 16
      %v4001 = vrot.slane %v3999, 5
      %v4002 = vor.u32 %v3998, %v4001
      %v4003 = vrot.slane %v4002, 4
      %v4005 = vshll.u32 %v3896, 16
      %v4007 = vrot.slane %v4005, 5
      %v4008 = vsel %vm564, %v4003, %v4007
      %v4009 = vld [vmem:[#allocation4] sm:$0xff]
      %v4010 = vld [vmem:[#allocation4 + $0x8] sm:$0xff]
      %v4011 = vld [vmem:[#allocation4 + $0x10] sm:$0xff]
      %v4012 = vld [vmem:[#allocation4 + $0x18] sm:$0xff]
      %v4013 = vld [vmem:[#allocation4 + $0x20] sm:$0xff]
      %v4014 = vld [vmem:[#allocation4 + $0x28] sm:$0xff]
      %v4015 = vld [vmem:[#allocation4 + $0x30] sm:$0xff]
      %v4016 = vld [vmem:[#allocation4 + $0x38] sm:$0xff]
      %s4017 = scalar_lea.vmem %s3, 224
      %v4018 = vld [vmem:[%s4017] sm:$0xf]
      %v4019 = vld [vmem:[%s4017 + $0x4] sm:$0xf]
      %v4020 = vld [vmem:[%s4017 + $0x8] sm:$0xf]
      %v4021 = vld [vmem:[%s4017 + $0xc] sm:$0xf]
      %v4022 = vld [vmem:[%s4017 + $0x10] sm:$0xf]
      %v4023 = vld [vmem:[%s4017 + $0x14] sm:$0xf]
      %v4024 = vld [vmem:[%s4017 + $0x18] sm:$0xf]
      %v4025 = vld [vmem:[%s4017 + $0x1c] sm:$0xf]
      %v4026 = vunpack.c.l.b16 %v3910
      %v4027 = vunpack.c.l.b16 %v3924
      %v4028 = vunpack.c.l.b16 %v3938
      %v4029 = vunpack.c.l.b16 %v3952
      %v4030 = vunpack.c.l.b16 %v3966
      %v4031 = vunpack.c.l.b16 %v3980
      %v4032 = vunpack.c.l.b16 %v3994
      %v4033 = vunpack.c.l.b16 %v4008
      %v4034 = vpack.c.b16 %v4027, %v4026
      %v4035 = vpack.c.b16 %v4029, %v4028
      %v4036 = vpack.c.b16 %v4031, %v4030
      %v4037 = vpack.c.b16 %v4033, %v4032
      %v4046 = vunpack.c.l.b16 %v4018
      %v4047 = vunpack.c.l.b16 %v4019
      %v4048 = vunpack.c.l.b16 %v4020
      %v4049 = vunpack.c.l.b16 %v4021
      %v4050 = vunpack.c.l.b16 %v4022
      %v4051 = vunpack.c.l.b16 %v4023
      %v4052 = vunpack.c.l.b16 %v4024
      %v4053 = vunpack.c.l.b16 %v4025
      %v4054 = vpack.c.b16 %v4047, %v4046
      %v4055 = vpack.c.b16 %v4049, %v4048
      %v4056 = vpack.c.b16 %v4051, %v4050
      %v4057 = vpack.c.b16 %v4053, %v4052
      %v4063 = vsel %vm391, %v4034, 0
      %v4066 = vsel %vm391, %v4035, 0
      %v4069 = vsel %vm391, %v4036, 0
      %v4072 = vsel %vm391, %v4037, 0
      %4074 = vmatprep.subr.bf16.mxu0 0
      %4075 = vmatpush1.bf16.msra.mxu0 %v4054
      %4076 = vmatprep.subr.bf16.mxu0 0
      %4077 = vmatpush1.bf16.msra.mxu0 %v4055
      %4078 = vmatprep.subr.bf16.mxu0 0
      %4079 = vmatpush1.bf16.msra.mxu0 %v4056
      %4080 = vmatprep.subr.bf16.mxu0 0
      %4081 = vmatpush1.bf16.msra.mxu0 %v4057
      %4082 = vmatprep.subr.bf16.mxu0 0
      %4083 = vmatpush1.bf16.msra.mxu0 0
      %4084 = vmatprep.subr.bf16.mxu0 0
      %4085 = vmatpush1.bf16.msra.mxu0 0
      %4086 = vmatprep.subr.bf16.mxu0 0
      %4087 = vmatpush1.bf16.msra.mxu0 0
      %4088 = vmatprep.subr.bf16.mxu0 0
      %4089 = vmatpush1.bf16.msra.mxu0 0
      %4090 = vmatprep.subr.bf16.mxu0 0
      %4091 = vmatpush1.bf16.msra.mxu0 0
      %4092 = vmatprep.subr.bf16.mxu0 0
      %4093 = vmatpush1.bf16.msra.mxu0 0
      %4094 = vmatprep.subr.bf16.mxu0 0
      %4095 = vmatpush1.bf16.msra.mxu0 0
      %4096 = vmatprep.subr.bf16.mxu0 0
      %4097 = vmatpush1.bf16.msra.mxu0 0
      %4098 = vmatprep.subr.bf16.mxu0 0
      %4099 = vmatpush1.bf16.msra.mxu0 0
      %4100 = vmatprep.subr.bf16.mxu0 0
      %4101 = vmatpush1.bf16.msra.mxu0 0
      %4102 = vmatprep.subr.bf16.mxu0 0
      %4103 = vmatpush1.bf16.msra.mxu0 0
      %4104 = vmatprep.subr.bf16.mxu0 0
      %4105 = vmatpush1.bf16.msra.mxu0 0
      %4106 = vmatprep.mubr.bf16.mxu0 0
      %4107 = vmatmul.mubr.bf16.gmra.mrb[0].mxu0 %v4063
      %v4108 = vpop.f32.mrb[0].mxu0
      %v4109 = vadd.f32 0.0, %v4108
      %v4110 = vpop.f32.mrb[0].mxu0
      %v4111 = vpop.f32.mrb[0].mxu0
      %v4112 = vadd.f32 0.0, %v4111
      %v4113 = vpop.f32.mrb[0].mxu0
      %4114 = vmatprep.mubr.bf16.mxu0 0
      %4115 = vmatmul.mubr.bf16.gmra.mrb[0].mxu0 %v4066
      %v4116 = vpop.f32.mrb[0].mxu0
      %v4117 = vadd.f32 0.0, %v4116
      %v4118 = vpop.f32.mrb[0].mxu0
      %v4119 = vpop.f32.mrb[0].mxu0
      %v4120 = vadd.f32 0.0, %v4119
      %v4121 = vpop.f32.mrb[0].mxu0
      %4122 = vmatprep.mubr.bf16.mxu0 0
      %4123 = vmatmul.mubr.bf16.gmra.mrb[0].mxu0 %v4069
      %v4124 = vpop.f32.mrb[0].mxu0
      %v4125 = vadd.f32 0.0, %v4124
      %v4126 = vpop.f32.mrb[0].mxu0
      %v4127 = vpop.f32.mrb[0].mxu0
      %v4128 = vadd.f32 0.0, %v4127
      %v4129 = vpop.f32.mrb[0].mxu0
      %4130 = vmatprep.mubr.bf16.mxu0 0
      %4131 = vmatmul.mubr.bf16.gmra.mrb[0].mxu0 %v4072
      %v4132 = vpop.f32.mrb[0].mxu0
      %v4133 = vadd.f32 0.0, %v4132
      %v4134 = vpop.f32.mrb[0].mxu0
      %v4135 = vpop.f32.mrb[0].mxu0
      %v4136 = vadd.f32 0.0, %v4135
      %v4137 = vpop.f32.mrb[0].mxu0
      %4138 = vdwg.mxu0
      %v4139 = vadd.f32 %v4009, %v4109
      %v4140 = vadd.f32 %v4010, %v4112
      %v4141 = vadd.f32 %v4011, %v4117
      %v4142 = vadd.f32 %v4012, %v4120
      %v4143 = vadd.f32 %v4013, %v4125
      %v4144 = vadd.f32 %v4014, %v4128
      %v4145 = vadd.f32 %v4015, %v4133
      %v4146 = vadd.f32 %v4016, %v4136
      %4147 = vst.msk [vmem:[#allocation4] sm:$0xff] %vm391, %v4139
      %4148 = vst.msk [vmem:[#allocation4 + $0x8] sm:$0xff] %vm391, %v4140
      %4149 = vst.msk [vmem:[#allocation4 + $0x10] sm:$0xff] %vm391, %v4141
      %4150 = vst.msk [vmem:[#allocation4 + $0x18] sm:$0xff] %vm391, %v4142
      %4151 = vst.msk [vmem:[#allocation4 + $0x20] sm:$0xff] %vm391, %v4143
      %4152 = vst.msk [vmem:[#allocation4 + $0x28] sm:$0xff] %vm391, %v4144
      %4153 = vst.msk [vmem:[#allocation4 + $0x30] sm:$0xff] %vm391, %v4145
      %4154 = vst.msk [vmem:[#allocation4 + $0x38] sm:$0xff] %vm391, %v4146
      %v4155 = vld [vmem:[%s3718] sm:$0xe]
      %v4156 = vld [vmem:[%s3718 + $0x4] sm:$0x1]
      %v4157 = vld [vmem:[%s3718 + $0x8] sm:$0xe]
      %v4158 = vld [vmem:[%s3718 + $0xc] sm:$0x1]
      %v4159 = vld [vmem:[%s3718 + $0x10] sm:$0xe]
      %v4160 = vld [vmem:[%s3718 + $0x14] sm:$0x1]
      %v4161 = vld [vmem:[%s3718 + $0x18] sm:$0xe]
      %v4162 = vld [vmem:[%s3718 + $0x1c] sm:$0x1]
      %v4163 = vld [vmem:[%s3718 + $0x20] sm:$0xe]
      %v4164 = vld [vmem:[%s3718 + $0x24] sm:$0x1]
      %v4165 = vld [vmem:[%s3718 + $0x28] sm:$0xe]
      %v4166 = vld [vmem:[%s3718 + $0x2c] sm:$0x1]
      %v4167 = vld [vmem:[%s3718 + $0x30] sm:$0xe]
      %v4168 = vld [vmem:[%s3718 + $0x34] sm:$0x1]
      %v4169 = vld [vmem:[%s3718 + $0x38] sm:$0xe]
      %v4170 = vld [vmem:[%s3718 + $0x3c] sm:$0x1]
      %v4187 = vrot.slane %v4155, 5
      %v4188 = vrot.slane %v4187, 4
      %v4189 = vrot.slane %v4156, 5
      %v4190 = vsel %vm841, %v4188, %v4189
      %v4191 = vrot.slane %v4157, 5
      %v4192 = vrot.slane %v4191, 4
      %v4193 = vrot.slane %v4158, 5
      %v4194 = vsel %vm841, %v4192, %v4193
      %v4195 = vrot.slane %v4159, 5
      %v4196 = vrot.slane %v4195, 4
      %v4197 = vrot.slane %v4160, 5
      %v4198 = vsel %vm841, %v4196, %v4197
      %v4199 = vrot.slane %v4161, 5
      %v4200 = vrot.slane %v4199, 4
      %v4201 = vrot.slane %v4162, 5
      %v4202 = vsel %vm841, %v4200, %v4201
      %v4203 = vrot.slane %v4163, 5
      %v4204 = vrot.slane %v4203, 4
      %v4205 = vrot.slane %v4164, 5
      %v4206 = vsel %vm841, %v4204, %v4205
      %v4207 = vrot.slane %v4165, 5
      %v4208 = vrot.slane %v4207, 4
      %v4209 = vrot.slane %v4166, 5
      %v4210 = vsel %vm841, %v4208, %v4209
      %v4211 = vrot.slane %v4167, 5
      %v4212 = vrot.slane %v4211, 4
      %v4213 = vrot.slane %v4168, 5
      %v4214 = vsel %vm841, %v4212, %v4213
      %v4215 = vrot.slane %v4169, 5
      %v4216 = vrot.slane %v4215, 4
      %v4217 = vrot.slane %v4170, 5
      %v4218 = vsel %vm841, %v4216, %v4217
      %v4219 = vld [vmem:[#allocation4] sm:$0xff]
      %v4220 = vld [vmem:[#allocation4 + $0x8] sm:$0xff]
      %v4221 = vld [vmem:[#allocation4 + $0x10] sm:$0xff]
      %v4222 = vld [vmem:[#allocation4 + $0x18] sm:$0xff]
      %v4223 = vld [vmem:[#allocation4 + $0x20] sm:$0xff]
      %v4224 = vld [vmem:[#allocation4 + $0x28] sm:$0xff]
      %v4225 = vld [vmem:[#allocation4 + $0x30] sm:$0xff]
      %v4226 = vld [vmem:[#allocation4 + $0x38] sm:$0xff]
      %s4227 = scalar_lea.vmem %s3, 256
      %v4228 = vld [vmem:[%s4227] sm:$0xf]
      %v4229 = vld [vmem:[%s4227 + $0x4] sm:$0xf]
      %v4230 = vld [vmem:[%s4227 + $0x8] sm:$0xf]
      %v4231 = vld [vmem:[%s4227 + $0xc] sm:$0xf]
      %v4232 = vld [vmem:[%s4227 + $0x10] sm:$0xf]
      %v4233 = vld [vmem:[%s4227 + $0x14] sm:$0xf]
      %v4234 = vld [vmem:[%s4227 + $0x18] sm:$0xf]
      %v4235 = vld [vmem:[%s4227 + $0x1c] sm:$0xf]
      %v4236 = vunpack.c.l.b16 %v4190
      %v4237 = vunpack.c.l.b16 %v4194
      %v4238 = vunpack.c.l.b16 %v4198
      %v4239 = vunpack.c.l.b16 %v4202
      %v4240 = vunpack.c.l.b16 %v4206
      %v4241 = vunpack.c.l.b16 %v4210
      %v4242 = vunpack.c.l.b16 %v4214
      %v4243 = vunpack.c.l.b16 %v4218
      %v4244 = vpack.c.b16 %v4237, %v4236
      %v4245 = vpack.c.b16 %v4239, %v4238
      %v4246 = vpack.c.b16 %v4241, %v4240
      %v4247 = vpack.c.b16 %v4243, %v4242
      %v4256 = vunpack.c.l.b16 %v4228
      %v4257 = vunpack.c.l.b16 %v4229
      %v4258 = vunpack.c.l.b16 %v4230
      %v4259 = vunpack.c.l.b16 %v4231
      %v4260 = vunpack.c.l.b16 %v4232
      %v4261 = vunpack.c.l.b16 %v4233
      %v4262 = vunpack.c.l.b16 %v4234
      %v4263 = vunpack.c.l.b16 %v4235
      %v4264 = vpack.c.b16 %v4257, %v4256
      %v4265 = vpack.c.b16 %v4259, %v4258
      %v4266 = vpack.c.b16 %v4261, %v4260
      %v4267 = vpack.c.b16 %v4263, %v4262
      %v4273 = vsel %vm391, %v4244, 0
      %v4276 = vsel %vm391, %v4245, 0
      %v4279 = vsel %vm391, %v4246, 0
      %v4282 = vsel %vm391, %v4247, 0
      %4284 = vmatprep.subr.bf16.mxu0 0
      %4285 = vmatpush1.bf16.msra.mxu0 %v4264
      %4286 = vmatprep.subr.bf16.mxu0 0
      %4287 = vmatpush1.bf16.msra.mxu0 %v4265
      %4288 = vmatprep.subr.bf16.mxu0 0
      %4289 = vmatpush1.bf16.msra.mxu0 %v4266
      %4290 = vmatprep.subr.bf16.mxu0 0
      %4291 = vmatpush1.bf16.msra.mxu0 %v4267
      %4292 = vmatprep.subr.bf16.mxu0 0
      %4293 = vmatpush1.bf16.msra.mxu0 0
      %4294 = vmatprep.subr.bf16.mxu0 0
      %4295 = vmatpush1.bf16.msra.mxu0 0
      %4296 = vmatprep.subr.bf16.mxu0 0
      %4297 = vmatpush1.bf16.msra.mxu0 0
      %4298 = vmatprep.subr.bf16.mxu0 0
      %4299 = vmatpush1.bf16.msra.mxu0 0
      %4300 = vmatprep.subr.bf16.mxu0 0
      %4301 = vmatpush1.bf16.msra.mxu0 0
      %4302 = vmatprep.subr.bf16.mxu0 0
      %4303 = vmatpush1.bf16.msra.mxu0 0
      %4304 = vmatprep.subr.bf16.mxu0 0
      %4305 = vmatpush1.bf16.msra.mxu0 0
      %4306 = vmatprep.subr.bf16.mxu0 0
      %4307 = vmatpush1.bf16.msra.mxu0 0
      %4308 = vmatprep.subr.bf16.mxu0 0
      %4309 = vmatpush1.bf16.msra.mxu0 0
      %4310 = vmatprep.subr.bf16.mxu0 0
      %4311 = vmatpush1.bf16.msra.mxu0 0
      %4312 = vmatprep.subr.bf16.mxu0 0
      %4313 = vmatpush1.bf16.msra.mxu0 0
      %4314 = vmatprep.subr.bf16.mxu0 0
      %4315 = vmatpush1.bf16.msra.mxu0 0
      %4316 = vmatprep.mubr.bf16.mxu0 0
      %4317 = vmatmul.mubr.bf16.gmra.mrb[0].mxu0 %v4273
      %v4318 = vpop.f32.mrb[0].mxu0
      %v4319 = vadd.f32 0.0, %v4318
      %v4320 = vpop.f32.mrb[0].mxu0
      %v4321 = vpop.f32.mrb[0].mxu0
      %v4322 = vadd.f32 0.0, %v4321
      %v4323 = vpop.f32.mrb[0].mxu0
      %4324 = vmatprep.mubr.bf16.mxu0 0
      %4325 = vmatmul.mubr.bf16.gmra.mrb[0].mxu0 %v4276
      %v4326 = vpop.f32.mrb[0].mxu0
      %v4327 = vadd.f32 0.0, %v4326
      %v4328 = vpop.f32.mrb[0].mxu0
      %v4329 = vpop.f32.mrb[0].mxu0
      %v4330 = vadd.f32 0.0, %v4329
      %v4331 = vpop.f32.mrb[0].mxu0
      %4332 = vmatprep.mubr.bf16.mxu0 0
      %4333 = vmatmul.mubr.bf16.gmra.mrb[0].mxu0 %v4279
      %v4334 = vpop.f32.mrb[0].mxu0
      %v4335 = vadd.f32 0.0, %v4334
      %v4336 = vpop.f32.mrb[0].mxu0
      %v4337 = vpop.f32.mrb[0].mxu0
      %v4338 = vadd.f32 0.0, %v4337
      %v4339 = vpop.f32.mrb[0].mxu0
      %4340 = vmatprep.mubr.bf16.mxu0 0
      %4341 = vmatmul.mubr.bf16.gmra.mrb[0].mxu0 %v4282
      %v4342 = vpop.f32.mrb[0].mxu0
      %v4343 = vadd.f32 0.0, %v4342
      %v4344 = vpop.f32.mrb[0].mxu0
      %v4345 = vpop.f32.mrb[0].mxu0
      %v4346 = vadd.f32 0.0, %v4345
      %v4347 = vpop.f32.mrb[0].mxu0
      %4348 = vdwg.mxu0
      %v4349 = vadd.f32 %v4219, %v4319
      %v4350 = vadd.f32 %v4220, %v4322
      %v4351 = vadd.f32 %v4221, %v4327
      %v4352 = vadd.f32 %v4222, %v4330
      %v4353 = vadd.f32 %v4223, %v4335
      %v4354 = vadd.f32 %v4224, %v4338
      %v4355 = vadd.f32 %v4225, %v4343
      %v4356 = vadd.f32 %v4226, %v4346
      %4357 = vst.msk [vmem:[#allocation4] sm:$0xff] %vm391, %v4349
      %4358 = vst.msk [vmem:[#allocation4 + $0x8] sm:$0xff] %vm391, %v4350
      %4359 = vst.msk [vmem:[#allocation4 + $0x10] sm:$0xff] %vm391, %v4351
      %4360 = vst.msk [vmem:[#allocation4 + $0x18] sm:$0xff] %vm391, %v4352
      %4361 = vst.msk [vmem:[#allocation4 + $0x20] sm:$0xff] %vm391, %v4353
      %4362 = vst.msk [vmem:[#allocation4 + $0x28] sm:$0xff] %vm391, %v4354
      %4363 = vst.msk [vmem:[#allocation4 + $0x30] sm:$0xff] %vm391, %v4355
      %4364 = vst.msk [vmem:[#allocation4 + $0x38] sm:$0xff] %vm391, %v4356
      %v4365 = vld [vmem:[#allocation4] sm:$0xff]
      %v4366 = vld [vmem:[#allocation4 + $0x8] sm:$0xff]
      %v4367 = vld [vmem:[#allocation4 + $0x10] sm:$0xff]
      %v4368 = vld [vmem:[#allocation4 + $0x18] sm:$0xff]
      %v4369 = vld [vmem:[#allocation4 + $0x20] sm:$0xff]
      %v4370 = vld [vmem:[#allocation4 + $0x28] sm:$0xff]
      %v4371 = vld [vmem:[#allocation4 + $0x30] sm:$0xff]
      %v4372 = vld [vmem:[#allocation4 + $0x38] sm:$0xff]
      %v4373 = vld [vmem:[%s4] sm:$0x1]
      %v4375 = vlaneseq
      %v4376 = vshrl.u32 %v4375, 7
      %v4377 = vsub.s32 0, %v4376
      %v4378 = vrot.slane %v4373, %v4377
      %v4380 = vadd.f32 %v4365, %v4378
      %v4381 = vadd.f32 %v4366, %v4378
      %v4382 = vadd.f32 %v4367, %v4378
      %v4383 = vadd.f32 %v4368, %v4378
      %v4384 = vadd.f32 %v4369, %v4378
      %v4385 = vadd.f32 %v4370, %v4378
      %v4386 = vadd.f32 %v4371, %v4378
      %v4387 = vadd.f32 %v4372, %v4378
      %v4388 = vmax.f32 %v4380, 0.0
      %v4389 = vmax.f32 %v4381, 0.0
      %v4390 = vmax.f32 %v4382, 0.0
      %v4391 = vmax.f32 %v4383, 0.0
      %v4392 = vmax.f32 %v4384, 0.0
      %v4393 = vmax.f32 %v4385, 0.0
      %v4394 = vmax.f32 %v4386, 0.0
      %v4395 = vmax.f32 %v4387, 0.0
      %4396 = vst.msk [vmem:[%s224] sm:$0xff] %vm391, %v4388
      %4397 = vst.msk [vmem:[%s224 + $0x8] sm:$0xff] %vm391, %v4389
      %4398 = vst.msk [vmem:[%s224 + $0x10] sm:$0xff] %vm391, %v4390
      %4399 = vst.msk [vmem:[%s224 + $0x18] sm:$0xff] %vm391, %v4391
      %4400 = vst.msk [vmem:[%s224 + $0x20] sm:$0xff] %vm391, %v4392
      %4401 = vst.msk [vmem:[%s224 + $0x28] sm:$0xff] %vm391, %v4393
      %4402 = vst.msk [vmem:[%s224 + $0x30] sm:$0xff] %vm391, %v4394
      %4403 = vst.msk [vmem:[%s224 + $0x38] sm:$0xff] %vm391, %v4395
      %p4404 = scmp.lt.s32.totalorder %s16, 1
      %s4405 = scalar_select %p4404, %s16, 1
      %s4406 = smul.addr %s4405, 8
      %s4407 = smul.addr %s4406, 8
      %s4408 = scalar_lea.vmem %s5, %s4407
      // Predicated region
      $region41: #{double_conv3d.1} parent=39 // pred_check
        %p4409 = pneg %p144
      $region42: #{double_conv3d.1} parent=39 // pred_check_branch
        %4411 = sbr.rel (%p4409) target = $region44
      $region43: #{double_conv3d.1} parent=39 // pred_region
        _
      $region44: #{double_conv3d.1} parent=39 // pred_fallthru
        _
    $region40: #{double_conv3d.1} parent=5 // pred_fallthru
      _
    %p4412 = scmp.le.s32.totalorder 2, %s11
    // Predicated region
    $region45: #{double_conv3d.1} parent=5 // pred_check
      %p4413 = pneg %p4412
    $region46: #{double_conv3d.1} parent=5 // pred_check_branch
      %4415 = sbr.rel (%p4413) target = $region48
    $region47: #{double_conv3d.1} parent=5 // pred_region
      %s4416 = ssub.s32 %s11, 2
      // Predicated region
      $region49: #{double_conv3d.1} parent=47 // pred_check
        %p4417 = pneg %p150
      $region50: #{double_conv3d.1} parent=47 // pred_check_branch
        %4419 = sbr.rel (%p4417) target = $region52
      $region51: #{double_conv3d.1} parent=47 // pred_region
        %p4420 = scmp.lt.s32.totalorder %s17, 1
        %s4421 = scalar_select %p4420, %s17, 1
        %s4422 = smul.addr %s4421, 8
        %s4423 = smul.addr %s4422, 8
        %s4424 = scalar_lea.vmem %s5, %s4423
      $region52: #{double_conv3d.1} parent=47 // pred_fallthru
        _
    $region48: #{double_conv3d.1} parent=5 // pred_fallthru
      _
  $region6: #{double_conv3d.1} parent=0 // loop_footer
    %s15 = sadd.s32 1, %s11
  $region7: #{double_conv3d.1} parent=0 // loop_footer_branch
    %10 = sbr.rel target = $region3
  $region8: #{double_conv3d.1} parent=0 // loop_exit
    _

</llo_original>
